<compile_context>
chip_gen: v6e
topology: v6e:2x2x1
jax: 0.10.0
libtpu: 0.0.40
codegen_flags: <defaults>
</compile_context>

<pallas_src>
import functools

import jax
import jax.numpy as jnp
from jax.experimental import pallas as pl
from jax.experimental.pallas import tpu as pltpu


# ----------------------------------------------------------------------------
# Parameter-slab layout: each tensor starts at a sublane-aligned (x8) row of a
# single lane-dense (rows, >=128) f32 slab.  Gate column order is PyTorch's
# i, f, g, o; the LSTM bias row is b_ih + b_hh combined.
# ----------------------------------------------------------------------------
def _align(n, m):
    return (n + m - 1) // m * m


def _slab_layout(f_in, hidden, out_dim):
    width = _align(max(4 * hidden, hidden, out_dim), 128)
    lay = {"width": width}
    off = 0
    for name, rows in (("wih", hidden), ("whh", hidden), ("bl", 1),
                       ("w1", f_in), ("b1", 1), ("w2", hidden), ("b2", 1),
                       ("wout", hidden), ("bout", 1)):
        lay[name] = off
        off += _align(rows, 8)
    lay["rows"] = _align(off, 8)
    return lay


def pack_param_slab(params):
    f_in, hidden = params["w1"].shape
    out_dim = params["out_w"].shape[1]
    lay = _slab_layout(f_in, hidden, out_dim)
    slab = jnp.zeros((lay["rows"], lay["width"]), jnp.float32)
    slab = slab.at[lay["wih"]:lay["wih"] + hidden, :4 * hidden].set(params["lstm_wih"])
    slab = slab.at[lay["whh"]:lay["whh"] + hidden, :4 * hidden].set(params["lstm_whh"])
    slab = slab.at[lay["bl"]:lay["bl"] + 1, :4 * hidden].set(params["lstm_b"])
    slab = slab.at[lay["w1"]:lay["w1"] + f_in, :hidden].set(params["w1"])
    slab = slab.at[lay["b1"]:lay["b1"] + 1, :hidden].set(params["b1"])
    slab = slab.at[lay["w2"]:lay["w2"] + hidden, :hidden].set(params["w2"])
    slab = slab.at[lay["b2"]:lay["b2"] + 1, :hidden].set(params["b2"])
    slab = slab.at[lay["wout"]:lay["wout"] + hidden, :out_dim].set(params["out_w"])
    slab = slab.at[lay["bout"]:lay["bout"] + 1, :out_dim].set(params["out_b"])
    return slab


# ----------------------------------------------------------------------------
# Fused kernel: whole forward in one grid step.
# ----------------------------------------------------------------------------
def fused_temporal_gcn_kernel(a_ref, x_ref, p_ref, out_ref, h_out_ref, c_out_ref):
    """a (T,N,N) normalized adjacency, x (T,N,F) features, p (rows,128) slab.
    Outputs: out (N,OUT), h_out (N,H), c_out (N,H)."""
    T, N, _ = a_ref.shape
    F = x_ref.shape[2]
    H = h_out_ref.shape[1]
    OUT = out_ref.shape[1]
    lay = _slab_layout(F, H, OUT)

    # --- unpack parameter slab (static, sublane-aligned slices) -------------
    w_ih = p_ref[lay["wih"]:lay["wih"] + H, :4 * H]          # (H, 4H)
    w_hh = p_ref[lay["whh"]:lay["whh"] + H, :4 * H]          # (H, 4H)
    b_l = p_ref[lay["bl"]:lay["bl"] + 1, :4 * H]             # (1, 4H)
    w1 = p_ref[lay["w1"]:lay["w1"] + F, :H]                  # (F, H)
    b1 = p_ref[lay["b1"]:lay["b1"] + 1, :H]                  # (1, H)
    w2 = p_ref[lay["w2"]:lay["w2"] + H, :H]                  # (H, H)
    b2 = p_ref[lay["b2"]:lay["b2"] + 1, :H]                  # (1, H)
    w_out = p_ref[lay["wout"]:lay["wout"] + H, :OUT]         # (H, OUT)
    b_out = p_ref[lay["bout"]:lay["bout"] + 1, :OUT]         # (1, OUT)

    # --- time-parallel phase: all weight matmuls batched at M = T*N ----------
    # GCN layer 1: relu((A_t @ X_t) @ W1 + b1)   ((A@X)@W order since F < H).
    # Per-t A multiplies are unrolled statically and stacked along sublanes.
    ax = jnp.concatenate(
        [jnp.dot(a_ref[t], x_ref[t], preferred_element_type=jnp.float32)
         for t in range(T)], axis=0)                          # (T*N, F)
    h1 = jnp.maximum(
        jnp.dot(ax, w1, preferred_element_type=jnp.float32) + b1, 0.0)  # (T*N,H)

    # GCN layer 2: relu((A_t @ H1_t) @ W2 + b2).  Dropout = identity (eval).
    ah = jnp.concatenate(
        [jnp.dot(a_ref[t], h1[t * N:(t + 1) * N, :],
                 preferred_element_type=jnp.float32)
         for t in range(T)], axis=0)                          # (T*N, H)
    h2 = jnp.maximum(
        jnp.dot(ah, w2, preferred_element_type=jnp.float32) + b2, 0.0)  # (T*N,H)

    # LSTM input projection hoisted out of the recurrence (one M=128 matmul).
    ih = jnp.dot(h2, w_ih, preferred_element_type=jnp.float32) + b_l    # (T*N,4H)

    # --- serial recurrence: only h_prev @ W_hh + elementwise gates per step --
    # TODO(synk): non-zero initial `hidden_state` argument is not plumbed in;
    # the PyTorch default (None -> zeros) is what is implemented.
    h = jnp.zeros((N, H), jnp.float32)
    c = jnp.zeros((N, H), jnp.float32)
    for t in range(T):  # static trip count -> fully unrolled, static slices
        gates = (ih[t * N:(t + 1) * N, :]
                 + jnp.dot(h, w_hh, preferred_element_type=jnp.float32))  # (N,4H)
        sig = jax.nn.sigmoid(gates)          # one EUP pass covers i, f, o
        i_g = sig[:, 0 * H:1 * H]
        f_g = sig[:, 1 * H:2 * H]
        o_g = sig[:, 3 * H:4 * H]
        g_g = jnp.tanh(gates[:, 2 * H:3 * H])
        c = f_g * c + i_g * g_g
        h = o_g * jnp.tanh(c)

    # --- outputs (single grid step -> written unconditionally) --------------
    h_out_ref[...] = h
    c_out_ref[...] = c
    out_ref[...] = (jnp.dot(h, w_out, preferred_element_type=jnp.float32)
                    + b_out)


# ----------------------------------------------------------------------------
# Wrapper: one pallas_call for the whole forward.
# ----------------------------------------------------------------------------
def temporal_gcn_forward(params, x_seq, a_seq):
    """x_seq: (T, N, F) stacked node features; a_seq: (T, N, N) normalized adj.
    Returns (output (N, out_dim), (h_n (1,N,H), c_n (1,N,H)))."""
    T, N, F = x_seq.shape
    H = params["w1"].shape[1]
    OUT = params["out_w"].shape[1]
    slab = pack_param_slab(params)

    out, h_n, c_n = pl.pallas_call(
        fused_temporal_gcn_kernel,
        out_shape=(jax.ShapeDtypeStruct((N, OUT), jnp.float32),
                   jax.ShapeDtypeStruct((N, H), jnp.float32),
                   jax.ShapeDtypeStruct((N, H), jnp.float32)),
        grid_spec=pltpu.PrefetchScalarGridSpec(
            num_scalar_prefetch=0,
            grid=(1,),
            in_specs=[
                pl.BlockSpec((T, N, N), lambda i: (0, 0, 0)),   # A_seq
                pl.BlockSpec((T, N, F), lambda i: (0, 0, 0)),   # X_seq
                pl.BlockSpec(slab.shape, lambda i: (0, 0)),     # param slab
            ],
            out_specs=(pl.BlockSpec((N, OUT), lambda i: (0, 0)),
                       pl.BlockSpec((N, H), lambda i: (0, 0)),
                       pl.BlockSpec((N, H), lambda i: (0, 0))),
        ),
        compiler_params=pltpu.CompilerParams(
            dimension_semantics=("arbitrary",)),
    )(a_seq, x_seq, slab)

    return out, (h_n[None], c_n[None])


# ----------------------------------------------------------------------------
# Glue: normalized adjacency (irregular scatter) built once in plain JAX.
# ----------------------------------------------------------------------------
def build_norm_adj(edge_index, num_nodes):
    """Dense D^-1/2 (A + I) D^-1/2 from edge_index (2, E), source->target."""
    src, dst = edge_index[0], edge_index[1]
    adj = jnp.zeros((num_nodes, num_nodes), jnp.float32).at[dst, src].add(1.0)
    adj = adj + jnp.eye(num_nodes, dtype=jnp.float32)          # self loops
    deg = adj.sum(axis=1)
    dinv = jnp.where(deg > 0, 1.0 / jnp.sqrt(deg), 0.0)
    return dinv[:, None] * adj * dinv[None, :]


# ----------------------------------------------------------------------------
# Pure-JAX reference (sanity check)
# ----------------------------------------------------------------------------
def reference_forward(params, x_seq, a_seq):
    H = params["w1"].shape[-1]
    h = jax.nn.relu(jnp.einsum("tij,tjf->tif", a_seq, x_seq) @ params["w1"]
                    + params["b1"])
    h = jax.nn.relu(jnp.einsum("tij,tjf->tif", a_seq, h) @ params["w2"]
                    + params["b2"])
    T, N, _ = h.shape
    hs = jnp.zeros((N, H))
    cs = jnp.zeros((N, H))
    for t in range(T):
        gates = (h[t] @ params["lstm_wih"] + hs @ params["lstm_whh"]
                 + params["lstm_b"])
        i = jax.nn.sigmoid(gates[:, 0 * H:1 * H])
        f = jax.nn.sigmoid(gates[:, 1 * H:2 * H])
        g = jnp.tanh(gates[:, 2 * H:3 * H])
        o = jax.nn.sigmoid(gates[:, 3 * H:4 * H])
        cs = f * cs + i * g
        hs = o * jnp.tanh(cs)
    out = hs @ params["out_w"] + params["out_b"]
    return out, (hs[None], cs[None])


# ----------------------------------------------------------------------------
if __name__ == "__main__":
    NODE_FEATURES = 8     # node_features
    HIDDEN = 32           # hidden_dim  (4*H = 128 -> lane-dense gate block)
    OUT_DIM = 8           # output_dim
    N_NODES = 16          # nodes per graph snapshot
    T = 8                 # sequence length (len(x_sequence))
    N_EDGES = 32

    key = jax.random.PRNGKey(0)
    keys = jax.random.split(key, 16)

    def init(k, shape, scale=0.1):
        return scale * jax.random.normal(k, shape, jnp.float32)

    # Weights stored pre-transposed as (in, out); LSTM gate weights
    # concatenated along the output dim in PyTorch order i, f, g, o, with the
    # combined bias b_ih + b_hh as a single (1, 4H) row.
    params = {
        "w1": init(keys[0], (NODE_FEATURES, HIDDEN)),
        "b1": init(keys[1], (1, HIDDEN)),
        "w2": init(keys[2], (HIDDEN, HIDDEN)),
        "b2": init(keys[3], (1, HIDDEN)),
        "lstm_wih": init(keys[4], (HIDDEN, 4 * HIDDEN)),
        "lstm_whh": init(keys[5], (HIDDEN, 4 * HIDDEN)),
        "lstm_b":   init(keys[6], (1, 4 * HIDDEN)),
        "out_w":    init(keys[7], (HIDDEN, OUT_DIM)),
        "out_b":    init(keys[8], (1, OUT_DIM)),
    }

    # Synthetic x_sequence / edge_index_sequence (stacked along time).
    x_seq = jax.random.normal(keys[9], (T, N_NODES, NODE_FEATURES), jnp.float32)
    src = jax.random.randint(keys[10], (T, N_EDGES), 0, N_NODES)
    off = jax.random.randint(keys[11], (T, N_EDGES), 1, N_NODES)
    dst = (src + off) % N_NODES                           # no self loops
    edge_index_seq = jnp.stack([src, dst], axis=1)        # (T, 2, E)

    a_seq = jax.vmap(functools.partial(build_norm_adj, num_nodes=N_NODES))(
        edge_index_seq)                                   # (T, N, N)

    out, (h_n, c_n) = jax.jit(temporal_gcn_forward)(params, x_seq, a_seq)
    out = jax.block_until_ready(out)

    # Sanity check against pure-JAX reference.
    ref_out, (ref_h, ref_c) = reference_forward(params, x_seq, a_seq)
    assert out.shape == (N_NODES, OUT_DIM)
    assert h_n.shape == (1, N_NODES, HIDDEN) and c_n.shape == (1, N_NODES, HIDDEN)
    assert jnp.allclose(out, ref_out, rtol=1e-4, atol=1e-4)
    assert jnp.allclose(h_n, ref_h, rtol=1e-4, atol=1e-4)
    assert jnp.allclose(c_n, ref_c, rtol=1e-4, atol=1e-4)

    print("KERNEL_OK")
</pallas_src>

<mosaic_0001>
module attributes {stable_mosaic.version = 11 : i64} {
  func.func @fused_temporal_gcn_kernel(%arg0: i32, %arg1: memref<8x16x16xf32, #tpu.memory_space<vmem>>, %arg2: memref<8x16x8xf32, #tpu.memory_space<vmem>>, %arg3: memref<168x128xf32, #tpu.memory_space<vmem>>, %arg4: memref<16x8xf32, #tpu.memory_space<vmem>>, %arg5: memref<16x32xf32, #tpu.memory_space<vmem>>, %arg6: memref<16x32xf32, #tpu.memory_space<vmem>>) attributes {dimension_semantics = [#tpu.dimension_semantics<arbitrary>], iteration_bounds = array<i64: 1>, scalar_prefetch = 0 : i64, scratch_operands = 0 : i64, tpu.core_type = #tpu.core_type<tc>, window_params = [{pipeline_mode = #tpu.pipeline_mode<synchronous>, transform_indices = @transform_0, window_bounds = array<i64: 8, 16, 16>}, {pipeline_mode = #tpu.pipeline_mode<synchronous>, transform_indices = @transform_1, window_bounds = array<i64: 8, 16, 8>}, {pipeline_mode = #tpu.pipeline_mode<synchronous>, transform_indices = @transform_2, window_bounds = array<i64: 168, 128>}, {pipeline_mode = #tpu.pipeline_mode<synchronous>, transform_indices = @transform_3, window_bounds = array<i64: 16, 8>}, {pipeline_mode = #tpu.pipeline_mode<synchronous>, transform_indices = @transform_4, window_bounds = array<i64: 16, 32>}, {pipeline_mode = #tpu.pipeline_mode<synchronous>, transform_indices = @transform_5, window_bounds = array<i64: 16, 32>}]} {
    %c0 = arith.constant 0 : index
    %c0_0 = arith.constant 0 : index
    %0 = vector.load %arg3[%c0, %c0_0] : memref<168x128xf32, #tpu.memory_space<vmem>>, vector<32x128xf32>
    %c32 = arith.constant 32 : index
    %c0_1 = arith.constant 0 : index
    %1 = vector.load %arg3[%c32, %c0_1] : memref<168x128xf32, #tpu.memory_space<vmem>>, vector<32x128xf32>
    %c64 = arith.constant 64 : index
    %c0_2 = arith.constant 0 : index
    %2 = vector.load %arg3[%c64, %c0_2] : memref<168x128xf32, #tpu.memory_space<vmem>>, vector<1x128xf32>
    %c72 = arith.constant 72 : index
    %c0_3 = arith.constant 0 : index
    %3 = vector.load %arg3[%c72, %c0_3] : memref<168x128xf32, #tpu.memory_space<vmem>>, vector<8x32xf32>
    %c80 = arith.constant 80 : index
    %c0_4 = arith.constant 0 : index
    %4 = vector.load %arg3[%c80, %c0_4] : memref<168x128xf32, #tpu.memory_space<vmem>>, vector<1x32xf32>
    %c88 = arith.constant 88 : index
    %c0_5 = arith.constant 0 : index
    %5 = vector.load %arg3[%c88, %c0_5] : memref<168x128xf32, #tpu.memory_space<vmem>>, vector<32x32xf32>
    %c120 = arith.constant 120 : index
    %c0_6 = arith.constant 0 : index
    %6 = vector.load %arg3[%c120, %c0_6] : memref<168x128xf32, #tpu.memory_space<vmem>>, vector<1x32xf32>
    %c128 = arith.constant 128 : index
    %c0_7 = arith.constant 0 : index
    %7 = vector.load %arg3[%c128, %c0_7] : memref<168x128xf32, #tpu.memory_space<vmem>>, vector<32x8xf32>
    %c160 = arith.constant 160 : index
    %c0_8 = arith.constant 0 : index
    %8 = vector.load %arg3[%c160, %c0_8] : memref<168x128xf32, #tpu.memory_space<vmem>>, vector<1x8xf32>
    %c0_9 = arith.constant 0 : index
    %c0_10 = arith.constant 0 : index
    %c0_11 = arith.constant 0 : index
    %9 = vector.load %arg1[%c0_9, %c0_10, %c0_11] : memref<8x16x16xf32, #tpu.memory_space<vmem>>, vector<1x16x16xf32>
    %10 = vector.shape_cast %9 : vector<1x16x16xf32> to vector<16x16xf32>
    %c0_12 = arith.constant 0 : index
    %c0_13 = arith.constant 0 : index
    %c0_14 = arith.constant 0 : index
    %11 = vector.load %arg2[%c0_12, %c0_13, %c0_14] : memref<8x16x8xf32, #tpu.memory_space<vmem>>, vector<1x16x8xf32>
    %12 = vector.shape_cast %11 : vector<1x16x8xf32> to vector<16x8xf32>
    %cst = arith.constant dense<0.000000e+00> : vector<16x8xf32>
    %13 = tpu.matmul %10, %12, %cst {dimension_numbers = #tpu.dot_dimension_numbers<[1], [0], [0], [1], [0, 0, 1, 1], [], []>} : vector<16x16xf32>, vector<16x8xf32>, vector<16x8xf32> -> vector<16x8xf32>
    %c1 = arith.constant 1 : index
    %c0_15 = arith.constant 0 : index
    %c0_16 = arith.constant 0 : index
    %14 = vector.load %arg1[%c1, %c0_15, %c0_16] : memref<8x16x16xf32, #tpu.memory_space<vmem>>, vector<1x16x16xf32>
    %15 = vector.shape_cast %14 : vector<1x16x16xf32> to vector<16x16xf32>
    %c1_17 = arith.constant 1 : index
    %c0_18 = arith.constant 0 : index
    %c0_19 = arith.constant 0 : index
    %16 = vector.load %arg2[%c1_17, %c0_18, %c0_19] : memref<8x16x8xf32, #tpu.memory_space<vmem>>, vector<1x16x8xf32>
    %17 = vector.shape_cast %16 : vector<1x16x8xf32> to vector<16x8xf32>
    %cst_20 = arith.constant dense<0.000000e+00> : vector<16x8xf32>
    %18 = tpu.matmul %15, %17, %cst_20 {dimension_numbers = #tpu.dot_dimension_numbers<[1], [0], [0], [1], [0, 0, 1, 1], [], []>} : vector<16x16xf32>, vector<16x8xf32>, vector<16x8xf32> -> vector<16x8xf32>
    %c2 = arith.constant 2 : index
    %c0_21 = arith.constant 0 : index
    %c0_22 = arith.constant 0 : index
    %19 = vector.load %arg1[%c2, %c0_21, %c0_22] : memref<8x16x16xf32, #tpu.memory_space<vmem>>, vector<1x16x16xf32>
    %20 = vector.shape_cast %19 : vector<1x16x16xf32> to vector<16x16xf32>
    %c2_23 = arith.constant 2 : index
    %c0_24 = arith.constant 0 : index
    %c0_25 = arith.constant 0 : index
    %21 = vector.load %arg2[%c2_23, %c0_24, %c0_25] : memref<8x16x8xf32, #tpu.memory_space<vmem>>, vector<1x16x8xf32>
    %22 = vector.shape_cast %21 : vector<1x16x8xf32> to vector<16x8xf32>
    %cst_26 = arith.constant dense<0.000000e+00> : vector<16x8xf32>
    %23 = tpu.matmul %20, %22, %cst_26 {dimension_numbers = #tpu.dot_dimension_numbers<[1], [0], [0], [1], [0, 0, 1, 1], [], []>} : vector<16x16xf32>, vector<16x8xf32>, vector<16x8xf32> -> vector<16x8xf32>
    %c3 = arith.constant 3 : index
    %c0_27 = arith.constant 0 : index
    %c0_28 = arith.constant 0 : index
    %24 = vector.load %arg1[%c3, %c0_27, %c0_28] : memref<8x16x16xf32, #tpu.memory_space<vmem>>, vector<1x16x16xf32>
    %25 = vector.shape_cast %24 : vector<1x16x16xf32> to vector<16x16xf32>
    %c3_29 = arith.constant 3 : index
    %c0_30 = arith.constant 0 : index
    %c0_31 = arith.constant 0 : index
    %26 = vector.load %arg2[%c3_29, %c0_30, %c0_31] : memref<8x16x8xf32, #tpu.memory_space<vmem>>, vector<1x16x8xf32>
    %27 = vector.shape_cast %26 : vector<1x16x8xf32> to vector<16x8xf32>
    %cst_32 = arith.constant dense<0.000000e+00> : vector<16x8xf32>
    %28 = tpu.matmul %25, %27, %cst_32 {dimension_numbers = #tpu.dot_dimension_numbers<[1], [0], [0], [1], [0, 0, 1, 1], [], []>} : vector<16x16xf32>, vector<16x8xf32>, vector<16x8xf32> -> vector<16x8xf32>
    %c4 = arith.constant 4 : index
    %c0_33 = arith.constant 0 : index
    %c0_34 = arith.constant 0 : index
    %29 = vector.load %arg1[%c4, %c0_33, %c0_34] : memref<8x16x16xf32, #tpu.memory_space<vmem>>, vector<1x16x16xf32>
    %30 = vector.shape_cast %29 : vector<1x16x16xf32> to vector<16x16xf32>
    %c4_35 = arith.constant 4 : index
    %c0_36 = arith.constant 0 : index
    %c0_37 = arith.constant 0 : index
    %31 = vector.load %arg2[%c4_35, %c0_36, %c0_37] : memref<8x16x8xf32, #tpu.memory_space<vmem>>, vector<1x16x8xf32>
    %32 = vector.shape_cast %31 : vector<1x16x8xf32> to vector<16x8xf32>
    %cst_38 = arith.constant dense<0.000000e+00> : vector<16x8xf32>
    %33 = tpu.matmul %30, %32, %cst_38 {dimension_numbers = #tpu.dot_dimension_numbers<[1], [0], [0], [1], [0, 0, 1, 1], [], []>} : vector<16x16xf32>, vector<16x8xf32>, vector<16x8xf32> -> vector<16x8xf32>
    %c5 = arith.constant 5 : index
    %c0_39 = arith.constant 0 : index
    %c0_40 = arith.constant 0 : index
    %34 = vector.load %arg1[%c5, %c0_39, %c0_40] : memref<8x16x16xf32, #tpu.memory_space<vmem>>, vector<1x16x16xf32>
    %35 = vector.shape_cast %34 : vector<1x16x16xf32> to vector<16x16xf32>
    %c5_41 = arith.constant 5 : index
    %c0_42 = arith.constant 0 : index
    %c0_43 = arith.constant 0 : index
    %36 = vector.load %arg2[%c5_41, %c0_42, %c0_43] : memref<8x16x8xf32, #tpu.memory_space<vmem>>, vector<1x16x8xf32>
    %37 = vector.shape_cast %36 : vector<1x16x8xf32> to vector<16x8xf32>
    %cst_44 = arith.constant dense<0.000000e+00> : vector<16x8xf32>
    %38 = tpu.matmul %35, %37, %cst_44 {dimension_numbers = #tpu.dot_dimension_numbers<[1], [0], [0], [1], [0, 0, 1, 1], [], []>} : vector<16x16xf32>, vector<16x8xf32>, vector<16x8xf32> -> vector<16x8xf32>
    %c6 = arith.constant 6 : index
    %c0_45 = arith.constant 0 : index
    %c0_46 = arith.constant 0 : index
    %39 = vector.load %arg1[%c6, %c0_45, %c0_46] : memref<8x16x16xf32, #tpu.memory_space<vmem>>, vector<1x16x16xf32>
    %40 = vector.shape_cast %39 : vector<1x16x16xf32> to vector<16x16xf32>
    %c6_47 = arith.constant 6 : index
    %c0_48 = arith.constant 0 : index
    %c0_49 = arith.constant 0 : index
    %41 = vector.load %arg2[%c6_47, %c0_48, %c0_49] : memref<8x16x8xf32, #tpu.memory_space<vmem>>, vector<1x16x8xf32>
    %42 = vector.shape_cast %41 : vector<1x16x8xf32> to vector<16x8xf32>
    %cst_50 = arith.constant dense<0.000000e+00> : vector<16x8xf32>
    %43 = tpu.matmul %40, %42, %cst_50 {dimension_numbers = #tpu.dot_dimension_numbers<[1], [0], [0], [1], [0, 0, 1, 1], [], []>} : vector<16x16xf32>, vector<16x8xf32>, vector<16x8xf32> -> vector<16x8xf32>
    %c7 = arith.constant 7 : index
    %c0_51 = arith.constant 0 : index
    %c0_52 = arith.constant 0 : index
    %44 = vector.load %arg1[%c7, %c0_51, %c0_52] : memref<8x16x16xf32, #tpu.memory_space<vmem>>, vector<1x16x16xf32>
    %45 = vector.shape_cast %44 : vector<1x16x16xf32> to vector<16x16xf32>
    %c7_53 = arith.constant 7 : index
    %c0_54 = arith.constant 0 : index
    %c0_55 = arith.constant 0 : index
    %46 = vector.load %arg2[%c7_53, %c0_54, %c0_55] : memref<8x16x8xf32, #tpu.memory_space<vmem>>, vector<1x16x8xf32>
    %47 = vector.shape_cast %46 : vector<1x16x8xf32> to vector<16x8xf32>
    %cst_56 = arith.constant dense<0.000000e+00> : vector<16x8xf32>
    %48 = tpu.matmul %45, %47, %cst_56 {dimension_numbers = #tpu.dot_dimension_numbers<[1], [0], [0], [1], [0, 0, 1, 1], [], []>} : vector<16x16xf32>, vector<16x8xf32>, vector<16x8xf32> -> vector<16x8xf32>
    %49 = tpu.concatenate %13, %18, %23, %28, %33, %38, %43, %48 in 0 : vector<16x8xf32>, vector<16x8xf32>, vector<16x8xf32>, vector<16x8xf32>, vector<16x8xf32>, vector<16x8xf32>, vector<16x8xf32>, vector<16x8xf32> -> vector<128x8xf32>
    %cst_57 = arith.constant dense<0.000000e+00> : vector<128x32xf32>
    %50 = tpu.matmul %49, %3, %cst_57 {dimension_numbers = #tpu.dot_dimension_numbers<[1], [0], [0], [1], [0, 0, 1, 1], [], []>} : vector<128x8xf32>, vector<8x32xf32>, vector<128x32xf32> -> vector<128x32xf32>
    %51 = vector.broadcast %4 : vector<1x32xf32> to vector<128x32xf32>
    %52 = arith.addf %50, %51 : vector<128x32xf32>
    %cst_58 = arith.constant 0.000000e+00 : f32
    %53 = vector.broadcast %cst_58 : f32 to vector<128x32xf32>
    %54 = arith.maximumf %52, %53 : vector<128x32xf32>
    %c0_59 = arith.constant 0 : index
    %c0_60 = arith.constant 0 : index
    %c0_61 = arith.constant 0 : index
    %55 = vector.load %arg1[%c0_59, %c0_60, %c0_61] : memref<8x16x16xf32, #tpu.memory_space<vmem>>, vector<1x16x16xf32>
    %56 = vector.shape_cast %55 : vector<1x16x16xf32> to vector<16x16xf32>
    %57 = vector.extract_strided_slice %54 {offsets = [0, 0], sizes = [16, 32], strides = [1, 1]} : vector<128x32xf32> to vector<16x32xf32>
    %cst_62 = arith.constant dense<0.000000e+00> : vector<16x32xf32>
    %58 = tpu.matmul %56, %57, %cst_62 {dimension_numbers = #tpu.dot_dimension_numbers<[1], [0], [0], [1], [0, 0, 1, 1], [], []>} : vector<16x16xf32>, vector<16x32xf32>, vector<16x32xf32> -> vector<16x32xf32>
    %c1_63 = arith.constant 1 : index
    %c0_64 = arith.constant 0 : index
    %c0_65 = arith.constant 0 : index
    %59 = vector.load %arg1[%c1_63, %c0_64, %c0_65] : memref<8x16x16xf32, #tpu.memory_space<vmem>>, vector<1x16x16xf32>
    %60 = vector.shape_cast %59 : vector<1x16x16xf32> to vector<16x16xf32>
    %61 = vector.extract_strided_slice %54 {offsets = [16, 0], sizes = [16, 32], strides = [1, 1]} : vector<128x32xf32> to vector<16x32xf32>
    %cst_66 = arith.constant dense<0.000000e+00> : vector<16x32xf32>
    %62 = tpu.matmul %60, %61, %cst_66 {dimension_numbers = #tpu.dot_dimension_numbers<[1], [0], [0], [1], [0, 0, 1, 1], [], []>} : vector<16x16xf32>, vector<16x32xf32>, vector<16x32xf32> -> vector<16x32xf32>
    %c2_67 = arith.constant 2 : index
    %c0_68 = arith.constant 0 : index
    %c0_69 = arith.constant 0 : index
    %63 = vector.load %arg1[%c2_67, %c0_68, %c0_69] : memref<8x16x16xf32, #tpu.memory_space<vmem>>, vector<1x16x16xf32>
    %64 = vector.shape_cast %63 : vector<1x16x16xf32> to vector<16x16xf32>
    %65 = vector.extract_strided_slice %54 {offsets = [32, 0], sizes = [16, 32], strides = [1, 1]} : vector<128x32xf32> to vector<16x32xf32>
    %cst_70 = arith.constant dense<0.000000e+00> : vector<16x32xf32>
    %66 = tpu.matmul %64, %65, %cst_70 {dimension_numbers = #tpu.dot_dimension_numbers<[1], [0], [0], [1], [0, 0, 1, 1], [], []>} : vector<16x16xf32>, vector<16x32xf32>, vector<16x32xf32> -> vector<16x32xf32>
    %c3_71 = arith.constant 3 : index
    %c0_72 = arith.constant 0 : index
    %c0_73 = arith.constant 0 : index
    %67 = vector.load %arg1[%c3_71, %c0_72, %c0_73] : memref<8x16x16xf32, #tpu.memory_space<vmem>>, vector<1x16x16xf32>
    %68 = vector.shape_cast %67 : vector<1x16x16xf32> to vector<16x16xf32>
    %69 = vector.extract_strided_slice %54 {offsets = [48, 0], sizes = [16, 32], strides = [1, 1]} : vector<128x32xf32> to vector<16x32xf32>
    %cst_74 = arith.constant dense<0.000000e+00> : vector<16x32xf32>
    %70 = tpu.matmul %68, %69, %cst_74 {dimension_numbers = #tpu.dot_dimension_numbers<[1], [0], [0], [1], [0, 0, 1, 1], [], []>} : vector<16x16xf32>, vector<16x32xf32>, vector<16x32xf32> -> vector<16x32xf32>
    %c4_75 = arith.constant 4 : index
    %c0_76 = arith.constant 0 : index
    %c0_77 = arith.constant 0 : index
    %71 = vector.load %arg1[%c4_75, %c0_76, %c0_77] : memref<8x16x16xf32, #tpu.memory_space<vmem>>, vector<1x16x16xf32>
    %72 = vector.shape_cast %71 : vector<1x16x16xf32> to vector<16x16xf32>
    %73 = vector.extract_strided_slice %54 {offsets = [64, 0], sizes = [16, 32], strides = [1, 1]} : vector<128x32xf32> to vector<16x32xf32>
    %cst_78 = arith.constant dense<0.000000e+00> : vector<16x32xf32>
    %74 = tpu.matmul %72, %73, %cst_78 {dimension_numbers = #tpu.dot_dimension_numbers<[1], [0], [0], [1], [0, 0, 1, 1], [], []>} : vector<16x16xf32>, vector<16x32xf32>, vector<16x32xf32> -> vector<16x32xf32>
    %c5_79 = arith.constant 5 : index
    %c0_80 = arith.constant 0 : index
    %c0_81 = arith.constant 0 : index
    %75 = vector.load %arg1[%c5_79, %c0_80, %c0_81] : memref<8x16x16xf32, #tpu.memory_space<vmem>>, vector<1x16x16xf32>
    %76 = vector.shape_cast %75 : vector<1x16x16xf32> to vector<16x16xf32>
    %77 = vector.extract_strided_slice %54 {offsets = [80, 0], sizes = [16, 32], strides = [1, 1]} : vector<128x32xf32> to vector<16x32xf32>
    %cst_82 = arith.constant dense<0.000000e+00> : vector<16x32xf32>
    %78 = tpu.matmul %76, %77, %cst_82 {dimension_numbers = #tpu.dot_dimension_numbers<[1], [0], [0], [1], [0, 0, 1, 1], [], []>} : vector<16x16xf32>, vector<16x32xf32>, vector<16x32xf32> -> vector<16x32xf32>
    %c6_83 = arith.constant 6 : index
    %c0_84 = arith.constant 0 : index
    %c0_85 = arith.constant 0 : index
    %79 = vector.load %arg1[%c6_83, %c0_84, %c0_85] : memref<8x16x16xf32, #tpu.memory_space<vmem>>, vector<1x16x16xf32>
    %80 = vector.shape_cast %79 : vector<1x16x16xf32> to vector<16x16xf32>
    %81 = vector.extract_strided_slice %54 {offsets = [96, 0], sizes = [16, 32], strides = [1, 1]} : vector<128x32xf32> to vector<16x32xf32>
    %cst_86 = arith.constant dense<0.000000e+00> : vector<16x32xf32>
    %82 = tpu.matmul %80, %81, %cst_86 {dimension_numbers = #tpu.dot_dimension_numbers<[1], [0], [0], [1], [0, 0, 1, 1], [], []>} : vector<16x16xf32>, vector<16x32xf32>, vector<16x32xf32> -> vector<16x32xf32>
    %c7_87 = arith.constant 7 : index
    %c0_88 = arith.constant 0 : index
    %c0_89 = arith.constant 0 : index
    %83 = vector.load %arg1[%c7_87, %c0_88, %c0_89] : memref<8x16x16xf32, #tpu.memory_space<vmem>>, vector<1x16x16xf32>
    %84 = vector.shape_cast %83 : vector<1x16x16xf32> to vector<16x16xf32>
    %85 = vector.extract_strided_slice %54 {offsets = [112, 0], sizes = [16, 32], strides = [1, 1]} : vector<128x32xf32> to vector<16x32xf32>
    %cst_90 = arith.constant dense<0.000000e+00> : vector<16x32xf32>
    %86 = tpu.matmul %84, %85, %cst_90 {dimension_numbers = #tpu.dot_dimension_numbers<[1], [0], [0], [1], [0, 0, 1, 1], [], []>} : vector<16x16xf32>, vector<16x32xf32>, vector<16x32xf32> -> vector<16x32xf32>
    %87 = tpu.concatenate %58, %62, %66, %70, %74, %78, %82, %86 in 0 : vector<16x32xf32>, vector<16x32xf32>, vector<16x32xf32>, vector<16x32xf32>, vector<16x32xf32>, vector<16x32xf32>, vector<16x32xf32>, vector<16x32xf32> -> vector<128x32xf32>
    %cst_91 = arith.constant dense<0.000000e+00> : vector<128x32xf32>
    %88 = tpu.matmul %87, %5, %cst_91 {dimension_numbers = #tpu.dot_dimension_numbers<[1], [0], [0], [1], [0, 0, 1, 1], [], []>} : vector<128x32xf32>, vector<32x32xf32>, vector<128x32xf32> -> vector<128x32xf32>
    %89 = vector.broadcast %6 : vector<1x32xf32> to vector<128x32xf32>
    %90 = arith.addf %88, %89 : vector<128x32xf32>
    %cst_92 = arith.constant 0.000000e+00 : f32
    %91 = vector.broadcast %cst_92 : f32 to vector<128x32xf32>
    %92 = arith.maximumf %90, %91 : vector<128x32xf32>
    %cst_93 = arith.constant dense<0.000000e+00> : vector<128x128xf32>
    %93 = tpu.matmul %92, %0, %cst_93 {dimension_numbers = #tpu.dot_dimension_numbers<[1], [0], [0], [1], [0, 0, 1, 1], [], []>} : vector<128x32xf32>, vector<32x128xf32>, vector<128x128xf32> -> vector<128x128xf32>
    %94 = vector.broadcast %2 : vector<1x128xf32> to vector<128x128xf32>
    %95 = arith.addf %93, %94 : vector<128x128xf32>
    %cst_94 = arith.constant 0.000000e+00 : f32
    %96 = vector.broadcast %cst_94 : f32 to vector<16x32xf32>
    %cst_95 = arith.constant 0.000000e+00 : f32
    %97 = vector.broadcast %cst_95 : f32 to vector<16x32xf32>
    %98 = vector.extract_strided_slice %95 {offsets = [0, 0], sizes = [16, 128], strides = [1, 1]} : vector<128x128xf32> to vector<16x128xf32>
    %cst_96 = arith.constant dense<0.000000e+00> : vector<16x128xf32>
    %99 = tpu.matmul %96, %1, %cst_96 {dimension_numbers = #tpu.dot_dimension_numbers<[1], [0], [0], [1], [0, 0, 1, 1], [], []>} : vector<16x32xf32>, vector<32x128xf32>, vector<16x128xf32> -> vector<16x128xf32>
    %100 = arith.addf %98, %99 : vector<16x128xf32>
    %101 = arith.negf %100 : vector<16x128xf32>
    %102 = math.exp %101 : vector<16x128xf32>
    %cst_97 = arith.constant 1.000000e+00 : f32
    %103 = vector.broadcast %cst_97 : f32 to vector<16x128xf32>
    %104 = arith.addf %103, %102 : vector<16x128xf32>
    %105 = arith.divf %103, %104 : vector<16x128xf32>
    %106 = vector.extract_strided_slice %105 {offsets = [0, 0], sizes = [16, 32], strides = [1, 1]} : vector<16x128xf32> to vector<16x32xf32>
    %107 = vector.extract_strided_slice %105 {offsets = [0, 32], sizes = [16, 32], strides = [1, 1]} : vector<16x128xf32> to vector<16x32xf32>
    %108 = vector.extract_strided_slice %105 {offsets = [0, 96], sizes = [16, 32], strides = [1, 1]} : vector<16x128xf32> to vector<16x32xf32>
    %109 = vector.extract_strided_slice %100 {offsets = [0, 64], sizes = [16, 32], strides = [1, 1]} : vector<16x128xf32> to vector<16x32xf32>
    %110 = math.tanh %109 : vector<16x32xf32>
    %111 = arith.mulf %107, %97 : vector<16x32xf32>
    %112 = arith.mulf %106, %110 : vector<16x32xf32>
    %113 = arith.addf %111, %112 : vector<16x32xf32>
    %114 = math.tanh %113 : vector<16x32xf32>
    %115 = arith.mulf %108, %114 : vector<16x32xf32>
    %116 = vector.extract_strided_slice %95 {offsets = [16, 0], sizes = [16, 128], strides = [1, 1]} : vector<128x128xf32> to vector<16x128xf32>
    %cst_98 = arith.constant dense<0.000000e+00> : vector<16x128xf32>
    %117 = tpu.matmul %115, %1, %cst_98 {dimension_numbers = #tpu.dot_dimension_numbers<[1], [0], [0], [1], [0, 0, 1, 1], [], []>} : vector<16x32xf32>, vector<32x128xf32>, vector<16x128xf32> -> vector<16x128xf32>
    %118 = arith.addf %116, %117 : vector<16x128xf32>
    %119 = arith.negf %118 : vector<16x128xf32>
    %120 = math.exp %119 : vector<16x128xf32>
    %cst_99 = arith.constant 1.000000e+00 : f32
    %121 = vector.broadcast %cst_99 : f32 to vector<16x128xf32>
    %122 = arith.addf %121, %120 : vector<16x128xf32>
    %123 = arith.divf %121, %122 : vector<16x128xf32>
    %124 = vector.extract_strided_slice %123 {offsets = [0, 0], sizes = [16, 32], strides = [1, 1]} : vector<16x128xf32> to vector<16x32xf32>
    %125 = vector.extract_strided_slice %123 {offsets = [0, 32], sizes = [16, 32], strides = [1, 1]} : vector<16x128xf32> to vector<16x32xf32>
    %126 = vector.extract_strided_slice %123 {offsets = [0, 96], sizes = [16, 32], strides = [1, 1]} : vector<16x128xf32> to vector<16x32xf32>
    %127 = vector.extract_strided_slice %118 {offsets = [0, 64], sizes = [16, 32], strides = [1, 1]} : vector<16x128xf32> to vector<16x32xf32>
    %128 = math.tanh %127 : vector<16x32xf32>
    %129 = arith.mulf %125, %113 : vector<16x32xf32>
    %130 = arith.mulf %124, %128 : vector<16x32xf32>
    %131 = arith.addf %129, %130 : vector<16x32xf32>
    %132 = math.tanh %131 : vector<16x32xf32>
    %133 = arith.mulf %126, %132 : vector<16x32xf32>
    %134 = vector.extract_strided_slice %95 {offsets = [32, 0], sizes = [16, 128], strides = [1, 1]} : vector<128x128xf32> to vector<16x128xf32>
    %cst_100 = arith.constant dense<0.000000e+00> : vector<16x128xf32>
    %135 = tpu.matmul %133, %1, %cst_100 {dimension_numbers = #tpu.dot_dimension_numbers<[1], [0], [0], [1], [0, 0, 1, 1], [], []>} : vector<16x32xf32>, vector<32x128xf32>, vector<16x128xf32> -> vector<16x128xf32>
    %136 = arith.addf %134, %135 : vector<16x128xf32>
    %137 = arith.negf %136 : vector<16x128xf32>
    %138 = math.exp %137 : vector<16x128xf32>
    %cst_101 = arith.constant 1.000000e+00 : f32
    %139 = vector.broadcast %cst_101 : f32 to vector<16x128xf32>
    %140 = arith.addf %139, %138 : vector<16x128xf32>
    %141 = arith.divf %139, %140 : vector<16x128xf32>
    %142 = vector.extract_strided_slice %141 {offsets = [0, 0], sizes = [16, 32], strides = [1, 1]} : vector<16x128xf32> to vector<16x32xf32>
    %143 = vector.extract_strided_slice %141 {offsets = [0, 32], sizes = [16, 32], strides = [1, 1]} : vector<16x128xf32> to vector<16x32xf32>
    %144 = vector.extract_strided_slice %141 {offsets = [0, 96], sizes = [16, 32], strides = [1, 1]} : vector<16x128xf32> to vector<16x32xf32>
    %145 = vector.extract_strided_slice %136 {offsets = [0, 64], sizes = [16, 32], strides = [1, 1]} : vector<16x128xf32> to vector<16x32xf32>
    %146 = math.tanh %145 : vector<16x32xf32>
    %147 = arith.mulf %143, %131 : vector<16x32xf32>
    %148 = arith.mulf %142, %146 : vector<16x32xf32>
    %149 = arith.addf %147, %148 : vector<16x32xf32>
    %150 = math.tanh %149 : vector<16x32xf32>
    %151 = arith.mulf %144, %150 : vector<16x32xf32>
    %152 = vector.extract_strided_slice %95 {offsets = [48, 0], sizes = [16, 128], strides = [1, 1]} : vector<128x128xf32> to vector<16x128xf32>
    %cst_102 = arith.constant dense<0.000000e+00> : vector<16x128xf32>
    %153 = tpu.matmul %151, %1, %cst_102 {dimension_numbers = #tpu.dot_dimension_numbers<[1], [0], [0], [1], [0, 0, 1, 1], [], []>} : vector<16x32xf32>, vector<32x128xf32>, vector<16x128xf32> -> vector<16x128xf32>
    %154 = arith.addf %152, %153 : vector<16x128xf32>
    %155 = arith.negf %154 : vector<16x128xf32>
    %156 = math.exp %155 : vector<16x128xf32>
    %cst_103 = arith.constant 1.000000e+00 : f32
    %157 = vector.broadcast %cst_103 : f32 to vector<16x128xf32>
    %158 = arith.addf %157, %156 : vector<16x128xf32>
    %159 = arith.divf %157, %158 : vector<16x128xf32>
    %160 = vector.extract_strided_slice %159 {offsets = [0, 0], sizes = [16, 32], strides = [1, 1]} : vector<16x128xf32> to vector<16x32xf32>
    %161 = vector.extract_strided_slice %159 {offsets = [0, 32], sizes = [16, 32], strides = [1, 1]} : vector<16x128xf32> to vector<16x32xf32>
    %162 = vector.extract_strided_slice %159 {offsets = [0, 96], sizes = [16, 32], strides = [1, 1]} : vector<16x128xf32> to vector<16x32xf32>
    %163 = vector.extract_strided_slice %154 {offsets = [0, 64], sizes = [16, 32], strides = [1, 1]} : vector<16x128xf32> to vector<16x32xf32>
    %164 = math.tanh %163 : vector<16x32xf32>
    %165 = arith.mulf %161, %149 : vector<16x32xf32>
    %166 = arith.mulf %160, %164 : vector<16x32xf32>
    %167 = arith.addf %165, %166 : vector<16x32xf32>
    %168 = math.tanh %167 : vector<16x32xf32>
    %169 = arith.mulf %162, %168 : vector<16x32xf32>
    %170 = vector.extract_strided_slice %95 {offsets = [64, 0], sizes = [16, 128], strides = [1, 1]} : vector<128x128xf32> to vector<16x128xf32>
    %cst_104 = arith.constant dense<0.000000e+00> : vector<16x128xf32>
    %171 = tpu.matmul %169, %1, %cst_104 {dimension_numbers = #tpu.dot_dimension_numbers<[1], [0], [0], [1], [0, 0, 1, 1], [], []>} : vector<16x32xf32>, vector<32x128xf32>, vector<16x128xf32> -> vector<16x128xf32>
    %172 = arith.addf %170, %171 : vector<16x128xf32>
    %173 = arith.negf %172 : vector<16x128xf32>
    %174 = math.exp %173 : vector<16x128xf32>
    %cst_105 = arith.constant 1.000000e+00 : f32
    %175 = vector.broadcast %cst_105 : f32 to vector<16x128xf32>
    %176 = arith.addf %175, %174 : vector<16x128xf32>
    %177 = arith.divf %175, %176 : vector<16x128xf32>
    %178 = vector.extract_strided_slice %177 {offsets = [0, 0], sizes = [16, 32], strides = [1, 1]} : vector<16x128xf32> to vector<16x32xf32>
    %179 = vector.extract_strided_slice %177 {offsets = [0, 32], sizes = [16, 32], strides = [1, 1]} : vector<16x128xf32> to vector<16x32xf32>
    %180 = vector.extract_strided_slice %177 {offsets = [0, 96], sizes = [16, 32], strides = [1, 1]} : vector<16x128xf32> to vector<16x32xf32>
    %181 = vector.extract_strided_slice %172 {offsets = [0, 64], sizes = [16, 32], strides = [1, 1]} : vector<16x128xf32> to vector<16x32xf32>
    %182 = math.tanh %181 : vector<16x32xf32>
    %183 = arith.mulf %179, %167 : vector<16x32xf32>
    %184 = arith.mulf %178, %182 : vector<16x32xf32>
    %185 = arith.addf %183, %184 : vector<16x32xf32>
    %186 = math.tanh %185 : vector<16x32xf32>
    %187 = arith.mulf %180, %186 : vector<16x32xf32>
    %188 = vector.extract_strided_slice %95 {offsets = [80, 0], sizes = [16, 128], strides = [1, 1]} : vector<128x128xf32> to vector<16x128xf32>
    %cst_106 = arith.constant dense<0.000000e+00> : vector<16x128xf32>
    %189 = tpu.matmul %187, %1, %cst_106 {dimension_numbers = #tpu.dot_dimension_numbers<[1], [0], [0], [1], [0, 0, 1, 1], [], []>} : vector<16x32xf32>, vector<32x128xf32>, vector<16x128xf32> -> vector<16x128xf32>
    %190 = arith.addf %188, %189 : vector<16x128xf32>
    %191 = arith.negf %190 : vector<16x128xf32>
    %192 = math.exp %191 : vector<16x128xf32>
    %cst_107 = arith.constant 1.000000e+00 : f32
    %193 = vector.broadcast %cst_107 : f32 to vector<16x128xf32>
    %194 = arith.addf %193, %192 : vector<16x128xf32>
    %195 = arith.divf %193, %194 : vector<16x128xf32>
    %196 = vector.extract_strided_slice %195 {offsets = [0, 0], sizes = [16, 32], strides = [1, 1]} : vector<16x128xf32> to vector<16x32xf32>
    %197 = vector.extract_strided_slice %195 {offsets = [0, 32], sizes = [16, 32], strides = [1, 1]} : vector<16x128xf32> to vector<16x32xf32>
    %198 = vector.extract_strided_slice %195 {offsets = [0, 96], sizes = [16, 32], strides = [1, 1]} : vector<16x128xf32> to vector<16x32xf32>
    %199 = vector.extract_strided_slice %190 {offsets = [0, 64], sizes = [16, 32], strides = [1, 1]} : vector<16x128xf32> to vector<16x32xf32>
    %200 = math.tanh %199 : vector<16x32xf32>
    %201 = arith.mulf %197, %185 : vector<16x32xf32>
    %202 = arith.mulf %196, %200 : vector<16x32xf32>
    %203 = arith.addf %201, %202 : vector<16x32xf32>
    %204 = math.tanh %203 : vector<16x32xf32>
    %205 = arith.mulf %198, %204 : vector<16x32xf32>
    %206 = vector.extract_strided_slice %95 {offsets = [96, 0], sizes = [16, 128], strides = [1, 1]} : vector<128x128xf32> to vector<16x128xf32>
    %cst_108 = arith.constant dense<0.000000e+00> : vector<16x128xf32>
    %207 = tpu.matmul %205, %1, %cst_108 {dimension_numbers = #tpu.dot_dimension_numbers<[1], [0], [0], [1], [0, 0, 1, 1], [], []>} : vector<16x32xf32>, vector<32x128xf32>, vector<16x128xf32> -> vector<16x128xf32>
    %208 = arith.addf %206, %207 : vector<16x128xf32>
    %209 = arith.negf %208 : vector<16x128xf32>
    %210 = math.exp %209 : vector<16x128xf32>
    %cst_109 = arith.constant 1.000000e+00 : f32
    %211 = vector.broadcast %cst_109 : f32 to vector<16x128xf32>
    %212 = arith.addf %211, %210 : vector<16x128xf32>
    %213 = arith.divf %211, %212 : vector<16x128xf32>
    %214 = vector.extract_strided_slice %213 {offsets = [0, 0], sizes = [16, 32], strides = [1, 1]} : vector<16x128xf32> to vector<16x32xf32>
    %215 = vector.extract_strided_slice %213 {offsets = [0, 32], sizes = [16, 32], strides = [1, 1]} : vector<16x128xf32> to vector<16x32xf32>
    %216 = vector.extract_strided_slice %213 {offsets = [0, 96], sizes = [16, 32], strides = [1, 1]} : vector<16x128xf32> to vector<16x32xf32>
    %217 = vector.extract_strided_slice %208 {offsets = [0, 64], sizes = [16, 32], strides = [1, 1]} : vector<16x128xf32> to vector<16x32xf32>
    %218 = math.tanh %217 : vector<16x32xf32>
    %219 = arith.mulf %215, %203 : vector<16x32xf32>
    %220 = arith.mulf %214, %218 : vector<16x32xf32>
    %221 = arith.addf %219, %220 : vector<16x32xf32>
    %222 = math.tanh %221 : vector<16x32xf32>
    %223 = arith.mulf %216, %222 : vector<16x32xf32>
    %224 = vector.extract_strided_slice %95 {offsets = [112, 0], sizes = [16, 128], strides = [1, 1]} : vector<128x128xf32> to vector<16x128xf32>
    %cst_110 = arith.constant dense<0.000000e+00> : vector<16x128xf32>
    %225 = tpu.matmul %223, %1, %cst_110 {dimension_numbers = #tpu.dot_dimension_numbers<[1], [0], [0], [1], [0, 0, 1, 1], [], []>} : vector<16x32xf32>, vector<32x128xf32>, vector<16x128xf32> -> vector<16x128xf32>
    %226 = arith.addf %224, %225 : vector<16x128xf32>
    %227 = arith.negf %226 : vector<16x128xf32>
    %228 = math.exp %227 : vector<16x128xf32>
    %cst_111 = arith.constant 1.000000e+00 : f32
    %229 = vector.broadcast %cst_111 : f32 to vector<16x128xf32>
    %230 = arith.addf %229, %228 : vector<16x128xf32>
    %231 = arith.divf %229, %230 : vector<16x128xf32>
    %232 = vector.extract_strided_slice %231 {offsets = [0, 0], sizes = [16, 32], strides = [1, 1]} : vector<16x128xf32> to vector<16x32xf32>
    %233 = vector.extract_strided_slice %231 {offsets = [0, 32], sizes = [16, 32], strides = [1, 1]} : vector<16x128xf32> to vector<16x32xf32>
    %234 = vector.extract_strided_slice %231 {offsets = [0, 96], sizes = [16, 32], strides = [1, 1]} : vector<16x128xf32> to vector<16x32xf32>
    %235 = vector.extract_strided_slice %226 {offsets = [0, 64], sizes = [16, 32], strides = [1, 1]} : vector<16x128xf32> to vector<16x32xf32>
    %236 = math.tanh %235 : vector<16x32xf32>
    %237 = arith.mulf %233, %221 : vector<16x32xf32>
    %238 = arith.mulf %232, %236 : vector<16x32xf32>
    %239 = arith.addf %237, %238 : vector<16x32xf32>
    %240 = math.tanh %239 : vector<16x32xf32>
    %241 = arith.mulf %234, %240 : vector<16x32xf32>
    %c0_112 = arith.constant 0 : index
    %c0_113 = arith.constant 0 : index
    %242 = vector.load %arg5[%c0_112, %c0_113] : memref<16x32xf32, #tpu.memory_space<vmem>>, vector<16x32xf32>
    tpu.vector_store %arg5[%c0_112, %c0_113], %241 {strides = array<i32>} : memref<16x32xf32, #tpu.memory_space<vmem>>, vector<16x32xf32>,
    %c0_114 = arith.constant 0 : index
    %c0_115 = arith.constant 0 : index
    %243 = vector.load %arg6[%c0_114, %c0_115] : memref<16x32xf32, #tpu.memory_space<vmem>>, vector<16x32xf32>
    tpu.vector_store %arg6[%c0_114, %c0_115], %239 {strides = array<i32>} : memref<16x32xf32, #tpu.memory_space<vmem>>, vector<16x32xf32>,
    %cst_116 = arith.constant dense<0.000000e+00> : vector<16x8xf32>
    %244 = tpu.matmul %241, %7, %cst_116 {dimension_numbers = #tpu.dot_dimension_numbers<[1], [0], [0], [1], [0, 0, 1, 1], [], []>} : vector<16x32xf32>, vector<32x8xf32>, vector<16x8xf32> -> vector<16x8xf32>
    %245 = vector.broadcast %8 : vector<1x8xf32> to vector<16x8xf32>
    %246 = arith.addf %244, %245 : vector<16x8xf32>
    %c0_117 = arith.constant 0 : index
    %c0_118 = arith.constant 0 : index
    %247 = vector.load %arg4[%c0_117, %c0_118] : memref<16x8xf32, #tpu.memory_space<vmem>>, vector<16x8xf32>
    tpu.vector_store %arg4[%c0_117, %c0_118], %246 {strides = array<i32>} : memref<16x8xf32, #tpu.memory_space<vmem>>, vector<16x8xf32>,
    return
  }
  func.func @transform_0(%arg0: i32) -> (i32, i32, i32) {
    %c0_i32 = arith.constant 0 : i32
    %c0_i32_0 = arith.constant 0 : i32
    %c0_i32_1 = arith.constant 0 : i32
    %c0_i32_2 = arith.constant 0 : i32
    return %c0_i32, %c0_i32_0, %c0_i32_1 : i32, i32, i32
  }
  func.func @transform_1(%arg0: i32) -> (i32, i32, i32) {
    %c0_i32 = arith.constant 0 : i32
    %c0_i32_0 = arith.constant 0 : i32
    %c0_i32_1 = arith.constant 0 : i32
    %c0_i32_2 = arith.constant 0 : i32
    return %c0_i32, %c0_i32_0, %c0_i32_1 : i32, i32, i32
  }
  func.func @transform_2(%arg0: i32) -> (i32, i32) {
    %c0_i32 = arith.constant 0 : i32
    %c0_i32_0 = arith.constant 0 : i32
    %c0_i32_1 = arith.constant 0 : i32
    return %c0_i32, %c0_i32_0 : i32, i32
  }
  func.func @transform_3(%arg0: i32) -> (i32, i32) {
    %c0_i32 = arith.constant 0 : i32
    %c0_i32_0 = arith.constant 0 : i32
    %c0_i32_1 = arith.constant 0 : i32
    return %c0_i32, %c0_i32_0 : i32, i32
  }
  func.func @transform_4(%arg0: i32) -> (i32, i32) {
    %c0_i32 = arith.constant 0 : i32
    %c0_i32_0 = arith.constant 0 : i32
    %c0_i32_1 = arith.constant 0 : i32
    return %c0_i32, %c0_i32_0 : i32, i32
  }
  func.func @transform_5(%arg0: i32) -> (i32, i32) {
    %c0_i32 = arith.constant 0 : i32
    %c0_i32_0 = arith.constant 0 : i32
    %c0_i32_1 = arith.constant 0 : i32
    return %c0_i32, %c0_i32_0 : i32, i32
  }
}

</mosaic_0001>

<llo_original>
// kernel: temporal_gcn_forward.1
$region0: #{temporal_gcn_forward.1}
  #allocation0 [shape = 'u32[]', space=smem, size = 0x4, offset = 0x4, fixed_abs, tag = 'smem constant byte address 0x4 - core index']
  #allocation1 [shape = 'u32[144,128]{1,0:T(1,128)}', space=vmem, size = 0x12000, scoped, tag = 'internal scratch']
  %s0 = inlined_call_operand.vmem [shape: f32[8,16,16], index: 0, kind: input, shape index: {}]
  %s1 = inlined_call_operand.vmem [shape: f32[8,16,8], index: 1, kind: input, shape index: {}]
  %s2 = inlined_call_operand.vmem [shape: f32[168,128], index: 2, kind: input, shape index: {}]
  %s3 = inlined_call_operand.vmem [shape: f32[16,8], index: 3, kind: output, shape index: {0}]
  %s4 = inlined_call_operand.hbm [shape: f32[16,32], index: 4, kind: output, shape index: {1}]
  %s5 = inlined_call_operand.hbm [shape: f32[16,32], index: 5, kind: output, shape index: {2}]
  %6 = xla_tuple %s3, %s4, %s5
  %s7 = sld [smem:[#allocation0]]
  $region38: #{temporal_gcn_forward.1} parent=0
    _
  %s9 = ssub.s32 1, %s7
  %s10 = scalar_select 0, %s9, %s7
  $region1: #{temporal_gcn_forward.1} parent=0
    #allocation2 [shape = 'u8[8192]{0}', space=vmem, size = 0x2000, scoped, tag = 'output window, operand 1, single buffered']
    #allocation3 [shape = 's32[1]{0}', space=sflag, size = 0x4, scoped, tag = 'scoped memory for temporal_gcn_forward.1']
    #allocation4 [shape = 'u8[8192]{0}', space=vmem, size = 0x2000, scoped, tag = 'output window, operand 2, single buffered']
    #allocation5 [shape = 's32[1]{0}', space=sflag, size = 0x4, scoped, tag = 'scoped memory for temporal_gcn_forward.1']
    %11 = vsyncpa [#allocation3], 0
    %12 = vsyncpa [#allocation5], 0
    // Predicated region
    $region2: #{temporal_gcn_forward.1} parent=1 // pred_check
      _
    $region3: #{temporal_gcn_forward.1} parent=1 // pred_check_branch
      %14 = sbr.rel (0) target = $region5
    $region4: #{temporal_gcn_forward.1} parent=1 // pred_region
      _
    $region5: #{temporal_gcn_forward.1} parent=1 // pred_fallthru
      _
    // Predicated region
    $region6: #{temporal_gcn_forward.1} parent=1 // pred_check
      _
    $region7: #{temporal_gcn_forward.1} parent=1 // pred_check_branch
      %16 = sbr.rel (0) target = $region9
    $region8: #{temporal_gcn_forward.1} parent=1 // pred_region
      _
    $region9: #{temporal_gcn_forward.1} parent=1 // pred_fallthru
      _
    // Predicated region
    $region10: #{temporal_gcn_forward.1} parent=1 // pred_check
      _
    $region11: #{temporal_gcn_forward.1} parent=1 // pred_check_branch
      %18 = sbr.rel (0) target = $region13
    $region12: #{temporal_gcn_forward.1} parent=1 // pred_region
      _
    $region13: #{temporal_gcn_forward.1} parent=1 // pred_fallthru
      _
    %v19 = vld [vmem:[%s2] sm:$0xff]
    %v20 = vld [vmem:[%s2 + $0x8] sm:$0xff]
    %v21 = vld [vmem:[%s2 + $0x10] sm:$0xff]
    %v22 = vld [vmem:[%s2 + $0x18] sm:$0xff]
    %v23 = vld [vmem:[%s2 + $0x20] sm:$0xff]
    %v24 = vld [vmem:[%s2 + $0x28] sm:$0xff]
    %v25 = vld [vmem:[%s2 + $0x30] sm:$0xff]
    %v26 = vld [vmem:[%s2 + $0x38] sm:$0xff]
    %v27 = vld [vmem:[%s2 + $0x40] sm:$0x1]
    %v28 = vld [vmem:[%s2 + $0x48] sm:$0xff]
    %v29 = vld [vmem:[%s2 + $0x50] sm:$0x1]
    %v30 = vld [vmem:[%s2 + $0x58] sm:$0xff]
    %v31 = vld [vmem:[%s2 + $0x60] sm:$0xff]
    %v32 = vld [vmem:[%s2 + $0x68] sm:$0xff]
    %v33 = vld [vmem:[%s2 + $0x70] sm:$0xff]
    %v34 = vld [vmem:[%s2 + $0x78] sm:$0x1]
    %v35 = vld [vmem:[%s2 + $0x80] sm:$0xff]
    %v36 = vld [vmem:[%s2 + $0x88] sm:$0xff]
    %v37 = vld [vmem:[%s2 + $0x90] sm:$0xff]
    %v38 = vld [vmem:[%s2 + $0x98] sm:$0xff]
    %v39 = vld [vmem:[%s2 + $0xa0] sm:$0x1]
    %v40 = vld [vmem:[%s0] sm:$0xff]
    %v41 = vld [vmem:[%s0 + $0x8] sm:$0xff]
    %v42 = vld [vmem:[%s1] sm:$0xff]
    %v43 = vld [vmem:[%s1 + $0x8] sm:$0xff]
    %vm44 = vcmask 130048
    %v46 = vsel %vm44, %v40, 0
    %v49 = vsel %vm44, %v41, 0
    %51 = vmatprep.subr.mxu0 0.0
    %52 = vmatpush1.msra.mxu0 0.0
    %53 = vmatprep.subr.mxu0 0.0
    %54 = vmatpush1.msra.mxu0 0.0
    %55 = vmatprep.subr.mxu0 0.0
    %56 = vmatpush1.msra.mxu0 0.0
    %57 = vmatprep.subr.mxu0 0.0
    %58 = vmatpush1.msra.mxu0 0.0
    %59 = vmatprep.subr.mxu0 0.0
    %60 = vmatpush1.msra.mxu0 0.0
    %61 = vmatprep.subr.mxu0 0.0
    %62 = vmatpush1.msra.mxu0 0.0
    %63 = vmatprep.subr.mxu0 0.0
    %64 = vmatpush1.msra.mxu0 0.0
    %65 = vmatprep.subr.mxu0 0.0
    %66 = vmatpush1.msra.mxu0 0.0
    %67 = vmatprep.subr.mxu0 0.0
    %68 = vmatpush1.msra.mxu0 0.0
    %69 = vmatprep.subr.mxu0 0.0
    %70 = vmatpush1.msra.mxu0 0.0
    %71 = vmatprep.subr.mxu0 0.0
    %72 = vmatpush1.msra.mxu0 0.0
    %73 = vmatprep.subr.mxu0 0.0
    %74 = vmatpush1.msra.mxu0 0.0
    %75 = vmatprep.subr.mxu0 0.0
    %76 = vmatpush1.msra.mxu0 0.0
    %77 = vmatprep.subr.mxu0 0.0
    %78 = vmatpush1.msra.mxu0 0.0
    %79 = vmatprep.subr.mxu0 0.0
    %80 = vmatpush1.msra.mxu0 %v43
    %81 = vmatprep.subr.mxu0 0.0
    %82 = vmatpush1.msra.mxu0 %v42
    %83 = vmatprep.subr.mxu0 0.0
    %84 = vmatpush2.msra.mxu0 0.0
    %85 = vmatprep.subr.mxu0 0.0
    %86 = vmatpush2.msra.mxu0 0.0
    %87 = vmatprep.subr.mxu0 0.0
    %88 = vmatpush2.msra.mxu0 0.0
    %89 = vmatprep.subr.mxu0 0.0
    %90 = vmatpush2.msra.mxu0 0.0
    %91 = vmatprep.subr.mxu0 0.0
    %92 = vmatpush2.msra.mxu0 0.0
    %93 = vmatprep.subr.mxu0 0.0
    %94 = vmatpush2.msra.mxu0 0.0
    %95 = vmatprep.subr.mxu0 0.0
    %96 = vmatpush2.msra.mxu0 0.0
    %97 = vmatprep.subr.mxu0 0.0
    %98 = vmatpush2.msra.mxu0 0.0
    %99 = vmatprep.subr.mxu0 0.0
    %100 = vmatpush2.msra.mxu0 0.0
    %101 = vmatprep.subr.mxu0 0.0
    %102 = vmatpush2.msra.mxu0 0.0
    %103 = vmatprep.subr.mxu0 0.0
    %104 = vmatpush2.msra.mxu0 0.0
    %105 = vmatprep.subr.mxu0 0.0
    %106 = vmatpush2.msra.mxu0 0.0
    %107 = vmatprep.subr.mxu0 0.0
    %108 = vmatpush2.msra.mxu0 0.0
    %109 = vmatprep.subr.mxu0 0.0
    %110 = vmatpush2.msra.mxu0 0.0
    %111 = vmatprep.subr.mxu0 0.0
    %112 = vmatpush2.msra.mxu0 0.0
    %113 = vmatprep.subr.mxu0 0.0
    %114 = vmatpush2.msra.mxu0 0.0
    %115 = vmatprep.mubr.f32.mxu0 0.0
    %116 = vmatmul.mubr.f32.gmra.mxu0 %v46
    %v117 = vpop.f32.mrf.mxu0
    %v118 = vadd.f32 0.0, %v117
    %v119 = vpop.f32.mrf.mxu0
    %120 = vmatprep.mubr.f32.mxu0 0.0
    %121 = vmatmul.mubr.f32.gmra.mxu0 %v49
    %v122 = vpop.f32.mrf.mxu0
    %v123 = vadd.f32 0.0, %v122
    %v124 = vpop.f32.mrf.mxu0
    %125 = vdwg.mxu0
    %s126 = scalar_lea.vmem %s0, 16
    %v127 = vld [vmem:[%s126] sm:$0xff]
    %v128 = vld [vmem:[%s126 + $0x8] sm:$0xff]
    %s129 = scalar_lea.vmem %s1, 16
    %v130 = vld [vmem:[%s129] sm:$0xff]
    %v131 = vld [vmem:[%s129 + $0x8] sm:$0xff]
    %v133 = vsel %vm44, %v127, 0
    %v136 = vsel %vm44, %v128, 0
    %138 = vmatprep.subr.mxu0 0.0
    %139 = vmatpush1.msra.mxu0 0.0
    %140 = vmatprep.subr.mxu0 0.0
    %141 = vmatpush1.msra.mxu0 0.0
    %142 = vmatprep.subr.mxu0 0.0
    %143 = vmatpush1.msra.mxu0 0.0
    %144 = vmatprep.subr.mxu0 0.0
    %145 = vmatpush1.msra.mxu0 0.0
    %146 = vmatprep.subr.mxu0 0.0
    %147 = vmatpush1.msra.mxu0 0.0
    %148 = vmatprep.subr.mxu0 0.0
    %149 = vmatpush1.msra.mxu0 0.0
    %150 = vmatprep.subr.mxu0 0.0
    %151 = vmatpush1.msra.mxu0 0.0
    %152 = vmatprep.subr.mxu0 0.0
    %153 = vmatpush1.msra.mxu0 0.0
    %154 = vmatprep.subr.mxu0 0.0
    %155 = vmatpush1.msra.mxu0 0.0
    %156 = vmatprep.subr.mxu0 0.0
    %157 = vmatpush1.msra.mxu0 0.0
    %158 = vmatprep.subr.mxu0 0.0
    %159 = vmatpush1.msra.mxu0 0.0
    %160 = vmatprep.subr.mxu0 0.0
    %161 = vmatpush1.msra.mxu0 0.0
    %162 = vmatprep.subr.mxu0 0.0
    %163 = vmatpush1.msra.mxu0 0.0
    %164 = vmatprep.subr.mxu0 0.0
    %165 = vmatpush1.msra.mxu0 0.0
    %166 = vmatprep.subr.mxu0 0.0
    %167 = vmatpush1.msra.mxu0 %v131
    %168 = vmatprep.subr.mxu0 0.0
    %169 = vmatpush1.msra.mxu0 %v130
    %170 = vmatprep.subr.mxu0 0.0
    %171 = vmatpush2.msra.mxu0 0.0
    %172 = vmatprep.subr.mxu0 0.0
    %173 = vmatpush2.msra.mxu0 0.0
    %174 = vmatprep.subr.mxu0 0.0
    %175 = vmatpush2.msra.mxu0 0.0
    %176 = vmatprep.subr.mxu0 0.0
    %177 = vmatpush2.msra.mxu0 0.0
    %178 = vmatprep.subr.mxu0 0.0
    %179 = vmatpush2.msra.mxu0 0.0
    %180 = vmatprep.subr.mxu0 0.0
    %181 = vmatpush2.msra.mxu0 0.0
    %182 = vmatprep.subr.mxu0 0.0
    %183 = vmatpush2.msra.mxu0 0.0
    %184 = vmatprep.subr.mxu0 0.0
    %185 = vmatpush2.msra.mxu0 0.0
    %186 = vmatprep.subr.mxu0 0.0
    %187 = vmatpush2.msra.mxu0 0.0
    %188 = vmatprep.subr.mxu0 0.0
    %189 = vmatpush2.msra.mxu0 0.0
    %190 = vmatprep.subr.mxu0 0.0
    %191 = vmatpush2.msra.mxu0 0.0
    %192 = vmatprep.subr.mxu0 0.0
    %193 = vmatpush2.msra.mxu0 0.0
    %194 = vmatprep.subr.mxu0 0.0
    %195 = vmatpush2.msra.mxu0 0.0
    %196 = vmatprep.subr.mxu0 0.0
    %197 = vmatpush2.msra.mxu0 0.0
    %198 = vmatprep.subr.mxu0 0.0
    %199 = vmatpush2.msra.mxu0 0.0
    %200 = vmatprep.subr.mxu0 0.0
    %201 = vmatpush2.msra.mxu0 0.0
    %202 = vmatprep.mubr.f32.mxu0 0.0
    %203 = vmatmul.mubr.f32.gmra.mxu0 %v133
    %v204 = vpop.f32.mrf.mxu0
    %v205 = vadd.f32 0.0, %v204
    %v206 = vpop.f32.mrf.mxu0
    %207 = vmatprep.mubr.f32.mxu0 0.0
    %208 = vmatmul.mubr.f32.gmra.mxu0 %v136
    %v209 = vpop.f32.mrf.mxu0
    %v210 = vadd.f32 0.0, %v209
    %v211 = vpop.f32.mrf.mxu0
    %212 = vdwg.mxu0
    %s213 = scalar_lea.vmem %s0, 32
    %v214 = vld [vmem:[%s213] sm:$0xff]
    %v215 = vld [vmem:[%s213 + $0x8] sm:$0xff]
    %s216 = scalar_lea.vmem %s1, 32
    %v217 = vld [vmem:[%s216] sm:$0xff]
    %v218 = vld [vmem:[%s216 + $0x8] sm:$0xff]
    %v220 = vsel %vm44, %v214, 0
    %v223 = vsel %vm44, %v215, 0
    %225 = vmatprep.subr.mxu0 0.0
    %226 = vmatpush1.msra.mxu0 0.0
    %227 = vmatprep.subr.mxu0 0.0
    %228 = vmatpush1.msra.mxu0 0.0
    %229 = vmatprep.subr.mxu0 0.0
    %230 = vmatpush1.msra.mxu0 0.0
    %231 = vmatprep.subr.mxu0 0.0
    %232 = vmatpush1.msra.mxu0 0.0
    %233 = vmatprep.subr.mxu0 0.0
    %234 = vmatpush1.msra.mxu0 0.0
    %235 = vmatprep.subr.mxu0 0.0
    %236 = vmatpush1.msra.mxu0 0.0
    %237 = vmatprep.subr.mxu0 0.0
    %238 = vmatpush1.msra.mxu0 0.0
    %239 = vmatprep.subr.mxu0 0.0
    %240 = vmatpush1.msra.mxu0 0.0
    %241 = vmatprep.subr.mxu0 0.0
    %242 = vmatpush1.msra.mxu0 0.0
    %243 = vmatprep.subr.mxu0 0.0
    %244 = vmatpush1.msra.mxu0 0.0
    %245 = vmatprep.subr.mxu0 0.0
    %246 = vmatpush1.msra.mxu0 0.0
    %247 = vmatprep.subr.mxu0 0.0
    %248 = vmatpush1.msra.mxu0 0.0
    %249 = vmatprep.subr.mxu0 0.0
    %250 = vmatpush1.msra.mxu0 0.0
    %251 = vmatprep.subr.mxu0 0.0
    %252 = vmatpush1.msra.mxu0 0.0
    %253 = vmatprep.subr.mxu0 0.0
    %254 = vmatpush1.msra.mxu0 %v218
    %255 = vmatprep.subr.mxu0 0.0
    %256 = vmatpush1.msra.mxu0 %v217
    %257 = vmatprep.subr.mxu0 0.0
    %258 = vmatpush2.msra.mxu0 0.0
    %259 = vmatprep.subr.mxu0 0.0
    %260 = vmatpush2.msra.mxu0 0.0
    %261 = vmatprep.subr.mxu0 0.0
    %262 = vmatpush2.msra.mxu0 0.0
    %263 = vmatprep.subr.mxu0 0.0
    %264 = vmatpush2.msra.mxu0 0.0
    %265 = vmatprep.subr.mxu0 0.0
    %266 = vmatpush2.msra.mxu0 0.0
    %267 = vmatprep.subr.mxu0 0.0
    %268 = vmatpush2.msra.mxu0 0.0
    %269 = vmatprep.subr.mxu0 0.0
    %270 = vmatpush2.msra.mxu0 0.0
    %271 = vmatprep.subr.mxu0 0.0
    %272 = vmatpush2.msra.mxu0 0.0
    %273 = vmatprep.subr.mxu0 0.0
    %274 = vmatpush2.msra.mxu0 0.0
    %275 = vmatprep.subr.mxu0 0.0
    %276 = vmatpush2.msra.mxu0 0.0
    %277 = vmatprep.subr.mxu0 0.0
    %278 = vmatpush2.msra.mxu0 0.0
    %279 = vmatprep.subr.mxu0 0.0
    %280 = vmatpush2.msra.mxu0 0.0
    %281 = vmatprep.subr.mxu0 0.0
    %282 = vmatpush2.msra.mxu0 0.0
    %283 = vmatprep.subr.mxu0 0.0
    %284 = vmatpush2.msra.mxu0 0.0
    %285 = vmatprep.subr.mxu0 0.0
    %286 = vmatpush2.msra.mxu0 0.0
    %287 = vmatprep.subr.mxu0 0.0
    %288 = vmatpush2.msra.mxu0 0.0
    %289 = vmatprep.mubr.f32.mxu0 0.0
    %290 = vmatmul.mubr.f32.gmra.mxu0 %v220
    %v291 = vpop.f32.mrf.mxu0
    %v292 = vadd.f32 0.0, %v291
    %v293 = vpop.f32.mrf.mxu0
    %294 = vmatprep.mubr.f32.mxu0 0.0
    %295 = vmatmul.mubr.f32.gmra.mxu0 %v223
    %v296 = vpop.f32.mrf.mxu0
    %v297 = vadd.f32 0.0, %v296
    %v298 = vpop.f32.mrf.mxu0
    %299 = vdwg.mxu0
    %s300 = scalar_lea.vmem %s0, 48
    %v301 = vld [vmem:[%s300] sm:$0xff]
    %v302 = vld [vmem:[%s300 + $0x8] sm:$0xff]
    %s303 = scalar_lea.vmem %s1, 48
    %v304 = vld [vmem:[%s303] sm:$0xff]
    %v305 = vld [vmem:[%s303 + $0x8] sm:$0xff]
    %v307 = vsel %vm44, %v301, 0
    %v310 = vsel %vm44, %v302, 0
    %312 = vmatprep.subr.mxu0 0.0
    %313 = vmatpush1.msra.mxu0 0.0
    %314 = vmatprep.subr.mxu0 0.0
    %315 = vmatpush1.msra.mxu0 0.0
    %316 = vmatprep.subr.mxu0 0.0
    %317 = vmatpush1.msra.mxu0 0.0
    %318 = vmatprep.subr.mxu0 0.0
    %319 = vmatpush1.msra.mxu0 0.0
    %320 = vmatprep.subr.mxu0 0.0
    %321 = vmatpush1.msra.mxu0 0.0
    %322 = vmatprep.subr.mxu0 0.0
    %323 = vmatpush1.msra.mxu0 0.0
    %324 = vmatprep.subr.mxu0 0.0
    %325 = vmatpush1.msra.mxu0 0.0
    %326 = vmatprep.subr.mxu0 0.0
    %327 = vmatpush1.msra.mxu0 0.0
    %328 = vmatprep.subr.mxu0 0.0
    %329 = vmatpush1.msra.mxu0 0.0
    %330 = vmatprep.subr.mxu0 0.0
    %331 = vmatpush1.msra.mxu0 0.0
    %332 = vmatprep.subr.mxu0 0.0
    %333 = vmatpush1.msra.mxu0 0.0
    %334 = vmatprep.subr.mxu0 0.0
    %335 = vmatpush1.msra.mxu0 0.0
    %336 = vmatprep.subr.mxu0 0.0
    %337 = vmatpush1.msra.mxu0 0.0
    %338 = vmatprep.subr.mxu0 0.0
    %339 = vmatpush1.msra.mxu0 0.0
    %340 = vmatprep.subr.mxu0 0.0
    %341 = vmatpush1.msra.mxu0 %v305
    %342 = vmatprep.subr.mxu0 0.0
    %343 = vmatpush1.msra.mxu0 %v304
    %344 = vmatprep.subr.mxu0 0.0
    %345 = vmatpush2.msra.mxu0 0.0
    %346 = vmatprep.subr.mxu0 0.0
    %347 = vmatpush2.msra.mxu0 0.0
    %348 = vmatprep.subr.mxu0 0.0
    %349 = vmatpush2.msra.mxu0 0.0
    %350 = vmatprep.subr.mxu0 0.0
    %351 = vmatpush2.msra.mxu0 0.0
    %352 = vmatprep.subr.mxu0 0.0
    %353 = vmatpush2.msra.mxu0 0.0
    %354 = vmatprep.subr.mxu0 0.0
    %355 = vmatpush2.msra.mxu0 0.0
    %356 = vmatprep.subr.mxu0 0.0
    %357 = vmatpush2.msra.mxu0 0.0
    %358 = vmatprep.subr.mxu0 0.0
    %359 = vmatpush2.msra.mxu0 0.0
    %360 = vmatprep.subr.mxu0 0.0
    %361 = vmatpush2.msra.mxu0 0.0
    %362 = vmatprep.subr.mxu0 0.0
    %363 = vmatpush2.msra.mxu0 0.0
    %364 = vmatprep.subr.mxu0 0.0
    %365 = vmatpush2.msra.mxu0 0.0
    %366 = vmatprep.subr.mxu0 0.0
    %367 = vmatpush2.msra.mxu0 0.0
    %368 = vmatprep.subr.mxu0 0.0
    %369 = vmatpush2.msra.mxu0 0.0
    %370 = vmatprep.subr.mxu0 0.0
    %371 = vmatpush2.msra.mxu0 0.0
    %372 = vmatprep.subr.mxu0 0.0
    %373 = vmatpush2.msra.mxu0 0.0
    %374 = vmatprep.subr.mxu0 0.0
    %375 = vmatpush2.msra.mxu0 0.0
    %376 = vmatprep.mubr.f32.mxu0 0.0
    %377 = vmatmul.mubr.f32.gmra.mxu0 %v307
    %v378 = vpop.f32.mrf.mxu0
    %v379 = vadd.f32 0.0, %v378
    %v380 = vpop.f32.mrf.mxu0
    %381 = vmatprep.mubr.f32.mxu0 0.0
    %382 = vmatmul.mubr.f32.gmra.mxu0 %v310
    %v383 = vpop.f32.mrf.mxu0
    %v384 = vadd.f32 0.0, %v383
    %v385 = vpop.f32.mrf.mxu0
    %386 = vdwg.mxu0
    %s387 = scalar_lea.vmem %s0, 64
    %v388 = vld [vmem:[%s387] sm:$0xff]
    %v389 = vld [vmem:[%s387 + $0x8] sm:$0xff]
    %s390 = scalar_lea.vmem %s1, 64
    %v391 = vld [vmem:[%s390] sm:$0xff]
    %v392 = vld [vmem:[%s390 + $0x8] sm:$0xff]
    %v394 = vsel %vm44, %v388, 0
    %v397 = vsel %vm44, %v389, 0
    %399 = vmatprep.subr.mxu0 0.0
    %400 = vmatpush1.msra.mxu0 0.0
    %401 = vmatprep.subr.mxu0 0.0
    %402 = vmatpush1.msra.mxu0 0.0
    %403 = vmatprep.subr.mxu0 0.0
    %404 = vmatpush1.msra.mxu0 0.0
    %405 = vmatprep.subr.mxu0 0.0
    %406 = vmatpush1.msra.mxu0 0.0
    %407 = vmatprep.subr.mxu0 0.0
    %408 = vmatpush1.msra.mxu0 0.0
    %409 = vmatprep.subr.mxu0 0.0
    %410 = vmatpush1.msra.mxu0 0.0
    %411 = vmatprep.subr.mxu0 0.0
    %412 = vmatpush1.msra.mxu0 0.0
    %413 = vmatprep.subr.mxu0 0.0
    %414 = vmatpush1.msra.mxu0 0.0
    %415 = vmatprep.subr.mxu0 0.0
    %416 = vmatpush1.msra.mxu0 0.0
    %417 = vmatprep.subr.mxu0 0.0
    %418 = vmatpush1.msra.mxu0 0.0
    %419 = vmatprep.subr.mxu0 0.0
    %420 = vmatpush1.msra.mxu0 0.0
    %421 = vmatprep.subr.mxu0 0.0
    %422 = vmatpush1.msra.mxu0 0.0
    %423 = vmatprep.subr.mxu0 0.0
    %424 = vmatpush1.msra.mxu0 0.0
    %425 = vmatprep.subr.mxu0 0.0
    %426 = vmatpush1.msra.mxu0 0.0
    %427 = vmatprep.subr.mxu0 0.0
    %428 = vmatpush1.msra.mxu0 %v392
    %429 = vmatprep.subr.mxu0 0.0
    %430 = vmatpush1.msra.mxu0 %v391
    %431 = vmatprep.subr.mxu0 0.0
    %432 = vmatpush2.msra.mxu0 0.0
    %433 = vmatprep.subr.mxu0 0.0
    %434 = vmatpush2.msra.mxu0 0.0
    %435 = vmatprep.subr.mxu0 0.0
    %436 = vmatpush2.msra.mxu0 0.0
    %437 = vmatprep.subr.mxu0 0.0
    %438 = vmatpush2.msra.mxu0 0.0
    %439 = vmatprep.subr.mxu0 0.0
    %440 = vmatpush2.msra.mxu0 0.0
    %441 = vmatprep.subr.mxu0 0.0
    %442 = vmatpush2.msra.mxu0 0.0
    %443 = vmatprep.subr.mxu0 0.0
    %444 = vmatpush2.msra.mxu0 0.0
    %445 = vmatprep.subr.mxu0 0.0
    %446 = vmatpush2.msra.mxu0 0.0
    %447 = vmatprep.subr.mxu0 0.0
    %448 = vmatpush2.msra.mxu0 0.0
    %449 = vmatprep.subr.mxu0 0.0
    %450 = vmatpush2.msra.mxu0 0.0
    %451 = vmatprep.subr.mxu0 0.0
    %452 = vmatpush2.msra.mxu0 0.0
    %453 = vmatprep.subr.mxu0 0.0
    %454 = vmatpush2.msra.mxu0 0.0
    %455 = vmatprep.subr.mxu0 0.0
    %456 = vmatpush2.msra.mxu0 0.0
    %457 = vmatprep.subr.mxu0 0.0
    %458 = vmatpush2.msra.mxu0 0.0
    %459 = vmatprep.subr.mxu0 0.0
    %460 = vmatpush2.msra.mxu0 0.0
    %461 = vmatprep.subr.mxu0 0.0
    %462 = vmatpush2.msra.mxu0 0.0
    %463 = vmatprep.mubr.f32.mxu0 0.0
    %464 = vmatmul.mubr.f32.gmra.mxu0 %v394
    %v465 = vpop.f32.mrf.mxu0
    %v466 = vadd.f32 0.0, %v465
    %v467 = vpop.f32.mrf.mxu0
    %468 = vmatprep.mubr.f32.mxu0 0.0
    %469 = vmatmul.mubr.f32.gmra.mxu0 %v397
    %v470 = vpop.f32.mrf.mxu0
    %v471 = vadd.f32 0.0, %v470
    %v472 = vpop.f32.mrf.mxu0
    %473 = vdwg.mxu0
    %s474 = scalar_lea.vmem %s0, 80
    %v475 = vld [vmem:[%s474] sm:$0xff]
    %v476 = vld [vmem:[%s474 + $0x8] sm:$0xff]
    %s477 = scalar_lea.vmem %s1, 80
    %v478 = vld [vmem:[%s477] sm:$0xff]
    %v479 = vld [vmem:[%s477 + $0x8] sm:$0xff]
    %v481 = vsel %vm44, %v475, 0
    %v484 = vsel %vm44, %v476, 0
    %486 = vmatprep.subr.mxu0 0.0
    %487 = vmatpush1.msra.mxu0 0.0
    %488 = vmatprep.subr.mxu0 0.0
    %489 = vmatpush1.msra.mxu0 0.0
    %490 = vmatprep.subr.mxu0 0.0
    %491 = vmatpush1.msra.mxu0 0.0
    %492 = vmatprep.subr.mxu0 0.0
    %493 = vmatpush1.msra.mxu0 0.0
    %494 = vmatprep.subr.mxu0 0.0
    %495 = vmatpush1.msra.mxu0 0.0
    %496 = vmatprep.subr.mxu0 0.0
    %497 = vmatpush1.msra.mxu0 0.0
    %498 = vmatprep.subr.mxu0 0.0
    %499 = vmatpush1.msra.mxu0 0.0
    %500 = vmatprep.subr.mxu0 0.0
    %501 = vmatpush1.msra.mxu0 0.0
    %502 = vmatprep.subr.mxu0 0.0
    %503 = vmatpush1.msra.mxu0 0.0
    %504 = vmatprep.subr.mxu0 0.0
    %505 = vmatpush1.msra.mxu0 0.0
    %506 = vmatprep.subr.mxu0 0.0
    %507 = vmatpush1.msra.mxu0 0.0
    %508 = vmatprep.subr.mxu0 0.0
    %509 = vmatpush1.msra.mxu0 0.0
    %510 = vmatprep.subr.mxu0 0.0
    %511 = vmatpush1.msra.mxu0 0.0
    %512 = vmatprep.subr.mxu0 0.0
    %513 = vmatpush1.msra.mxu0 0.0
    %514 = vmatprep.subr.mxu0 0.0
    %515 = vmatpush1.msra.mxu0 %v479
    %516 = vmatprep.subr.mxu0 0.0
    %517 = vmatpush1.msra.mxu0 %v478
    %518 = vmatprep.subr.mxu0 0.0
    %519 = vmatpush2.msra.mxu0 0.0
    %520 = vmatprep.subr.mxu0 0.0
    %521 = vmatpush2.msra.mxu0 0.0
    %522 = vmatprep.subr.mxu0 0.0
    %523 = vmatpush2.msra.mxu0 0.0
    %524 = vmatprep.subr.mxu0 0.0
    %525 = vmatpush2.msra.mxu0 0.0
    %526 = vmatprep.subr.mxu0 0.0
    %527 = vmatpush2.msra.mxu0 0.0
    %528 = vmatprep.subr.mxu0 0.0
    %529 = vmatpush2.msra.mxu0 0.0
    %530 = vmatprep.subr.mxu0 0.0
    %531 = vmatpush2.msra.mxu0 0.0
    %532 = vmatprep.subr.mxu0 0.0
    %533 = vmatpush2.msra.mxu0 0.0
    %534 = vmatprep.subr.mxu0 0.0
    %535 = vmatpush2.msra.mxu0 0.0
    %536 = vmatprep.subr.mxu0 0.0
    %537 = vmatpush2.msra.mxu0 0.0
    %538 = vmatprep.subr.mxu0 0.0
    %539 = vmatpush2.msra.mxu0 0.0
    %540 = vmatprep.subr.mxu0 0.0
    %541 = vmatpush2.msra.mxu0 0.0
    %542 = vmatprep.subr.mxu0 0.0
    %543 = vmatpush2.msra.mxu0 0.0
    %544 = vmatprep.subr.mxu0 0.0
    %545 = vmatpush2.msra.mxu0 0.0
    %546 = vmatprep.subr.mxu0 0.0
    %547 = vmatpush2.msra.mxu0 0.0
    %548 = vmatprep.subr.mxu0 0.0
    %549 = vmatpush2.msra.mxu0 0.0
    %550 = vmatprep.mubr.f32.mxu0 0.0
    %551 = vmatmul.mubr.f32.gmra.mxu0 %v481
    %v552 = vpop.f32.mrf.mxu0
    %v553 = vadd.f32 0.0, %v552
    %v554 = vpop.f32.mrf.mxu0
    %555 = vmatprep.mubr.f32.mxu0 0.0
    %556 = vmatmul.mubr.f32.gmra.mxu0 %v484
    %v557 = vpop.f32.mrf.mxu0
    %v558 = vadd.f32 0.0, %v557
    %v559 = vpop.f32.mrf.mxu0
    %560 = vdwg.mxu0
    %s561 = scalar_lea.vmem %s0, 96
    %v562 = vld [vmem:[%s561] sm:$0xff]
    %v563 = vld [vmem:[%s561 + $0x8] sm:$0xff]
    %s564 = scalar_lea.vmem %s1, 96
    %v565 = vld [vmem:[%s564] sm:$0xff]
    %v566 = vld [vmem:[%s564 + $0x8] sm:$0xff]
    %v568 = vsel %vm44, %v562, 0
    %v571 = vsel %vm44, %v563, 0
    %573 = vmatprep.subr.mxu0 0.0
    %574 = vmatpush1.msra.mxu0 0.0
    %575 = vmatprep.subr.mxu0 0.0
    %576 = vmatpush1.msra.mxu0 0.0
    %577 = vmatprep.subr.mxu0 0.0
    %578 = vmatpush1.msra.mxu0 0.0
    %579 = vmatprep.subr.mxu0 0.0
    %580 = vmatpush1.msra.mxu0 0.0
    %581 = vmatprep.subr.mxu0 0.0
    %582 = vmatpush1.msra.mxu0 0.0
    %583 = vmatprep.subr.mxu0 0.0
    %584 = vmatpush1.msra.mxu0 0.0
    %585 = vmatprep.subr.mxu0 0.0
    %586 = vmatpush1.msra.mxu0 0.0
    %587 = vmatprep.subr.mxu0 0.0
    %588 = vmatpush1.msra.mxu0 0.0
    %589 = vmatprep.subr.mxu0 0.0
    %590 = vmatpush1.msra.mxu0 0.0
    %591 = vmatprep.subr.mxu0 0.0
    %592 = vmatpush1.msra.mxu0 0.0
    %593 = vmatprep.subr.mxu0 0.0
    %594 = vmatpush1.msra.mxu0 0.0
    %595 = vmatprep.subr.mxu0 0.0
    %596 = vmatpush1.msra.mxu0 0.0
    %597 = vmatprep.subr.mxu0 0.0
    %598 = vmatpush1.msra.mxu0 0.0
    %599 = vmatprep.subr.mxu0 0.0
    %600 = vmatpush1.msra.mxu0 0.0
    %601 = vmatprep.subr.mxu0 0.0
    %602 = vmatpush1.msra.mxu0 %v566
    %603 = vmatprep.subr.mxu0 0.0
    %604 = vmatpush1.msra.mxu0 %v565
    %605 = vmatprep.subr.mxu0 0.0
    %606 = vmatpush2.msra.mxu0 0.0
    %607 = vmatprep.subr.mxu0 0.0
    %608 = vmatpush2.msra.mxu0 0.0
    %609 = vmatprep.subr.mxu0 0.0
    %610 = vmatpush2.msra.mxu0 0.0
    %611 = vmatprep.subr.mxu0 0.0
    %612 = vmatpush2.msra.mxu0 0.0
    %613 = vmatprep.subr.mxu0 0.0
    %614 = vmatpush2.msra.mxu0 0.0
    %615 = vmatprep.subr.mxu0 0.0
    %616 = vmatpush2.msra.mxu0 0.0
    %617 = vmatprep.subr.mxu0 0.0
    %618 = vmatpush2.msra.mxu0 0.0
    %619 = vmatprep.subr.mxu0 0.0
    %620 = vmatpush2.msra.mxu0 0.0
    %621 = vmatprep.subr.mxu0 0.0
    %622 = vmatpush2.msra.mxu0 0.0
    %623 = vmatprep.subr.mxu0 0.0
    %624 = vmatpush2.msra.mxu0 0.0
    %625 = vmatprep.subr.mxu0 0.0
    %626 = vmatpush2.msra.mxu0 0.0
    %627 = vmatprep.subr.mxu0 0.0
    %628 = vmatpush2.msra.mxu0 0.0
    %629 = vmatprep.subr.mxu0 0.0
    %630 = vmatpush2.msra.mxu0 0.0
    %631 = vmatprep.subr.mxu0 0.0
    %632 = vmatpush2.msra.mxu0 0.0
    %633 = vmatprep.subr.mxu0 0.0
    %634 = vmatpush2.msra.mxu0 0.0
    %635 = vmatprep.subr.mxu0 0.0
    %636 = vmatpush2.msra.mxu0 0.0
    %637 = vmatprep.mubr.f32.mxu0 0.0
    %638 = vmatmul.mubr.f32.gmra.mxu0 %v568
    %v639 = vpop.f32.mrf.mxu0
    %v640 = vadd.f32 0.0, %v639
    %v641 = vpop.f32.mrf.mxu0
    %642 = vmatprep.mubr.f32.mxu0 0.0
    %643 = vmatmul.mubr.f32.gmra.mxu0 %v571
    %v644 = vpop.f32.mrf.mxu0
    %v645 = vadd.f32 0.0, %v644
    %v646 = vpop.f32.mrf.mxu0
    %647 = vdwg.mxu0
    %s648 = scalar_lea.vmem %s0, 112
    %v649 = vld [vmem:[%s648] sm:$0xff]
    %v650 = vld [vmem:[%s648 + $0x8] sm:$0xff]
    %s651 = scalar_lea.vmem %s1, 112
    %v652 = vld [vmem:[%s651] sm:$0xff]
    %v653 = vld [vmem:[%s651 + $0x8] sm:$0xff]
    %v655 = vsel %vm44, %v649, 0
    %v658 = vsel %vm44, %v650, 0
    %660 = vmatprep.subr.mxu0 0.0
    %661 = vmatpush1.msra.mxu0 0.0
    %662 = vmatprep.subr.mxu0 0.0
    %663 = vmatpush1.msra.mxu0 0.0
    %664 = vmatprep.subr.mxu0 0.0
    %665 = vmatpush1.msra.mxu0 0.0
    %666 = vmatprep.subr.mxu0 0.0
    %667 = vmatpush1.msra.mxu0 0.0
    %668 = vmatprep.subr.mxu0 0.0
    %669 = vmatpush1.msra.mxu0 0.0
    %670 = vmatprep.subr.mxu0 0.0
    %671 = vmatpush1.msra.mxu0 0.0
    %672 = vmatprep.subr.mxu0 0.0
    %673 = vmatpush1.msra.mxu0 0.0
    %674 = vmatprep.subr.mxu0 0.0
    %675 = vmatpush1.msra.mxu0 0.0
    %676 = vmatprep.subr.mxu0 0.0
    %677 = vmatpush1.msra.mxu0 0.0
    %678 = vmatprep.subr.mxu0 0.0
    %679 = vmatpush1.msra.mxu0 0.0
    %680 = vmatprep.subr.mxu0 0.0
    %681 = vmatpush1.msra.mxu0 0.0
    %682 = vmatprep.subr.mxu0 0.0
    %683 = vmatpush1.msra.mxu0 0.0
    %684 = vmatprep.subr.mxu0 0.0
    %685 = vmatpush1.msra.mxu0 0.0
    %686 = vmatprep.subr.mxu0 0.0
    %687 = vmatpush1.msra.mxu0 0.0
    %688 = vmatprep.subr.mxu0 0.0
    %689 = vmatpush1.msra.mxu0 %v653
    %690 = vmatprep.subr.mxu0 0.0
    %691 = vmatpush1.msra.mxu0 %v652
    %692 = vmatprep.subr.mxu0 0.0
    %693 = vmatpush2.msra.mxu0 0.0
    %694 = vmatprep.subr.mxu0 0.0
    %695 = vmatpush2.msra.mxu0 0.0
    %696 = vmatprep.subr.mxu0 0.0
    %697 = vmatpush2.msra.mxu0 0.0
    %698 = vmatprep.subr.mxu0 0.0
    %699 = vmatpush2.msra.mxu0 0.0
    %700 = vmatprep.subr.mxu0 0.0
    %701 = vmatpush2.msra.mxu0 0.0
    %702 = vmatprep.subr.mxu0 0.0
    %703 = vmatpush2.msra.mxu0 0.0
    %704 = vmatprep.subr.mxu0 0.0
    %705 = vmatpush2.msra.mxu0 0.0
    %706 = vmatprep.subr.mxu0 0.0
    %707 = vmatpush2.msra.mxu0 0.0
    %708 = vmatprep.subr.mxu0 0.0
    %709 = vmatpush2.msra.mxu0 0.0
    %710 = vmatprep.subr.mxu0 0.0
    %711 = vmatpush2.msra.mxu0 0.0
    %712 = vmatprep.subr.mxu0 0.0
    %713 = vmatpush2.msra.mxu0 0.0
    %714 = vmatprep.subr.mxu0 0.0
    %715 = vmatpush2.msra.mxu0 0.0
    %716 = vmatprep.subr.mxu0 0.0
    %717 = vmatpush2.msra.mxu0 0.0
    %718 = vmatprep.subr.mxu0 0.0
    %719 = vmatpush2.msra.mxu0 0.0
    %720 = vmatprep.subr.mxu0 0.0
    %721 = vmatpush2.msra.mxu0 0.0
    %722 = vmatprep.subr.mxu0 0.0
    %723 = vmatpush2.msra.mxu0 0.0
    %724 = vmatprep.mubr.f32.mxu0 0.0
    %725 = vmatmul.mubr.f32.gmra.mxu0 %v655
    %v726 = vpop.f32.mrf.mxu0
    %v727 = vadd.f32 0.0, %v726
    %v728 = vpop.f32.mrf.mxu0
    %729 = vmatprep.mubr.f32.mxu0 0.0
    %730 = vmatmul.mubr.f32.gmra.mxu0 %v658
    %v731 = vpop.f32.mrf.mxu0
    %v732 = vadd.f32 0.0, %v731
    %v733 = vpop.f32.mrf.mxu0
    %734 = vdwg.mxu0
    %v735 = vlaneseq
    %v736 = vshrl.u32 %v735, 7
    %v737 = vsub.s32 0, %v736
    %v738 = vrot.slane %v29, %v737
    %vm739 = vcmask 64512
    %v741 = vsel %vm739, %v118, 0
    %v744 = vsel %vm739, %v123, 0
    %v747 = vsel %vm739, %v205, 0
    %v750 = vsel %vm739, %v210, 0
    %v753 = vsel %vm739, %v292, 0
    %v756 = vsel %vm739, %v297, 0
    %v759 = vsel %vm739, %v379, 0
    %v762 = vsel %vm739, %v384, 0
    %v765 = vsel %vm739, %v466, 0
    %v768 = vsel %vm739, %v471, 0
    %v771 = vsel %vm739, %v553, 0
    %v774 = vsel %vm739, %v558, 0
    %v777 = vsel %vm739, %v640, 0
    %v780 = vsel %vm739, %v645, 0
    %v783 = vsel %vm739, %v727, 0
    %v786 = vsel %vm739, %v732, 0
    %788 = vmatprep.subr.mxu0 0.0
    %789 = vmatpush1.msra.mxu0 0.0
    %790 = vmatprep.subr.mxu0 0.0
    %791 = vmatpush1.msra.mxu0 0.0
    %792 = vmatprep.subr.mxu0 0.0
    %793 = vmatpush1.msra.mxu0 0.0
    %794 = vmatprep.subr.mxu0 0.0
    %795 = vmatpush1.msra.mxu0 0.0
    %796 = vmatprep.subr.mxu0 0.0
    %797 = vmatpush1.msra.mxu0 0.0
    %798 = vmatprep.subr.mxu0 0.0
    %799 = vmatpush1.msra.mxu0 0.0
    %800 = vmatprep.subr.mxu0 0.0
    %801 = vmatpush1.msra.mxu0 0.0
    %802 = vmatprep.subr.mxu0 0.0
    %803 = vmatpush1.msra.mxu0 0.0
    %804 = vmatprep.subr.mxu0 0.0
    %805 = vmatpush1.msra.mxu0 0.0
    %806 = vmatprep.subr.mxu0 0.0
    %807 = vmatpush1.msra.mxu0 0.0
    %808 = vmatprep.subr.mxu0 0.0
    %809 = vmatpush1.msra.mxu0 0.0
    %810 = vmatprep.subr.mxu0 0.0
    %811 = vmatpush1.msra.mxu0 0.0
    %812 = vmatprep.subr.mxu0 0.0
    %813 = vmatpush1.msra.mxu0 0.0
    %814 = vmatprep.subr.mxu0 0.0
    %815 = vmatpush1.msra.mxu0 0.0
    %816 = vmatprep.subr.mxu0 0.0
    %817 = vmatpush1.msra.mxu0 0.0
    %818 = vmatprep.subr.mxu0 0.0
    %819 = vmatpush1.msra.mxu0 %v28
    %820 = vmatprep.subr.mxu0 0.0
    %821 = vmatpush2.msra.mxu0 0.0
    %822 = vmatprep.subr.mxu0 0.0
    %823 = vmatpush2.msra.mxu0 0.0
    %824 = vmatprep.subr.mxu0 0.0
    %825 = vmatpush2.msra.mxu0 0.0
    %826 = vmatprep.subr.mxu0 0.0
    %827 = vmatpush2.msra.mxu0 0.0
    %828 = vmatprep.subr.mxu0 0.0
    %829 = vmatpush2.msra.mxu0 0.0
    %830 = vmatprep.subr.mxu0 0.0
    %831 = vmatpush2.msra.mxu0 0.0
    %832 = vmatprep.subr.mxu0 0.0
    %833 = vmatpush2.msra.mxu0 0.0
    %834 = vmatprep.subr.mxu0 0.0
    %835 = vmatpush2.msra.mxu0 0.0
    %836 = vmatprep.subr.mxu0 0.0
    %837 = vmatpush2.msra.mxu0 0.0
    %838 = vmatprep.subr.mxu0 0.0
    %839 = vmatpush2.msra.mxu0 0.0
    %840 = vmatprep.subr.mxu0 0.0
    %841 = vmatpush2.msra.mxu0 0.0
    %842 = vmatprep.subr.mxu0 0.0
    %843 = vmatpush2.msra.mxu0 0.0
    %844 = vmatprep.subr.mxu0 0.0
    %845 = vmatpush2.msra.mxu0 0.0
    %846 = vmatprep.subr.mxu0 0.0
    %847 = vmatpush2.msra.mxu0 0.0
    %848 = vmatprep.subr.mxu0 0.0
    %849 = vmatpush2.msra.mxu0 0.0
    %850 = vmatprep.subr.mxu0 0.0
    %851 = vmatpush2.msra.mxu0 0.0
    %852 = vmatprep.mubr.f32.mxu0 0.0
    %853 = vmatmul.mubr.f32.gmra.mxu0 %v741
    %v854 = vpop.f32.mrf.mxu0
    %v855 = vadd.f32 %v738, %v854
    %v856 = vpop.f32.mrf.mxu0
    %857 = vmatprep.mubr.f32.mxu0 0.0
    %858 = vmatmul.mubr.f32.gmra.mxu0 %v744
    %v859 = vpop.f32.mrf.mxu0
    %v860 = vadd.f32 %v738, %v859
    %v861 = vpop.f32.mrf.mxu0
    %862 = vmatprep.mubr.f32.mxu0 0.0
    %863 = vmatmul.mubr.f32.gmra.mxu0 %v747
    %v864 = vpop.f32.mrf.mxu0
    %v865 = vadd.f32 %v738, %v864
    %v866 = vpop.f32.mrf.mxu0
    %867 = vmatprep.mubr.f32.mxu0 0.0
    %868 = vmatmul.mubr.f32.gmra.mxu0 %v750
    %v869 = vpop.f32.mrf.mxu0
    %v870 = vadd.f32 %v738, %v869
    %v871 = vpop.f32.mrf.mxu0
    %872 = vmatprep.mubr.f32.mxu0 0.0
    %873 = vmatmul.mubr.f32.gmra.mxu0 %v753
    %v874 = vpop.f32.mrf.mxu0
    %v875 = vadd.f32 %v738, %v874
    %v876 = vpop.f32.mrf.mxu0
    %877 = vmatprep.mubr.f32.mxu0 0.0
    %878 = vmatmul.mubr.f32.gmra.mxu0 %v756
    %v879 = vpop.f32.mrf.mxu0
    %v880 = vadd.f32 %v738, %v879
    %v881 = vpop.f32.mrf.mxu0
    %882 = vmatprep.mubr.f32.mxu0 0.0
    %883 = vmatmul.mubr.f32.gmra.mxu0 %v759
    %v884 = vpop.f32.mrf.mxu0
    %v885 = vadd.f32 %v738, %v884
    %v886 = vpop.f32.mrf.mxu0
    %887 = vmatprep.mubr.f32.mxu0 0.0
    %888 = vmatmul.mubr.f32.gmra.mxu0 %v762
    %v889 = vpop.f32.mrf.mxu0
    %v890 = vadd.f32 %v738, %v889
    %v891 = vpop.f32.mrf.mxu0
    %892 = vmatprep.mubr.f32.mxu0 0.0
    %893 = vmatmul.mubr.f32.gmra.mxu0 %v765
    %v894 = vpop.f32.mrf.mxu0
    %v895 = vadd.f32 %v738, %v894
    %v896 = vpop.f32.mrf.mxu0
    %897 = vmatprep.mubr.f32.mxu0 0.0
    %898 = vmatmul.mubr.f32.gmra.mxu0 %v768
    %v899 = vpop.f32.mrf.mxu0
    %v900 = vadd.f32 %v738, %v899
    %v901 = vpop.f32.mrf.mxu0
    %902 = vmatprep.mubr.f32.mxu0 0.0
    %903 = vmatmul.mubr.f32.gmra.mxu0 %v771
    %v904 = vpop.f32.mrf.mxu0
    %v905 = vadd.f32 %v738, %v904
    %v906 = vpop.f32.mrf.mxu0
    %907 = vmatprep.mubr.f32.mxu0 0.0
    %908 = vmatmul.mubr.f32.gmra.mxu0 %v774
    %v909 = vpop.f32.mrf.mxu0
    %v910 = vadd.f32 %v738, %v909
    %v911 = vpop.f32.mrf.mxu0
    %912 = vmatprep.mubr.f32.mxu0 0.0
    %913 = vmatmul.mubr.f32.gmra.mxu0 %v777
    %v914 = vpop.f32.mrf.mxu0
    %v915 = vadd.f32 %v738, %v914
    %v916 = vpop.f32.mrf.mxu0
    %917 = vmatprep.mubr.f32.mxu0 0.0
    %918 = vmatmul.mubr.f32.gmra.mxu0 %v780
    %v919 = vpop.f32.mrf.mxu0
    %v920 = vadd.f32 %v738, %v919
    %v921 = vpop.f32.mrf.mxu0
    %922 = vmatprep.mubr.f32.mxu0 0.0
    %923 = vmatmul.mubr.f32.gmra.mxu0 %v783
    %v924 = vpop.f32.mrf.mxu0
    %v925 = vadd.f32 %v738, %v924
    %v926 = vpop.f32.mrf.mxu0
    %927 = vmatprep.mubr.f32.mxu0 0.0
    %928 = vmatmul.mubr.f32.gmra.mxu0 %v786
    %v929 = vpop.f32.mrf.mxu0
    %v930 = vadd.f32 %v738, %v929
    %v931 = vpop.f32.mrf.mxu0
    %932 = vdwg.mxu0
    %v933 = vmax.f32 %v855, 0.0
    %v934 = vmax.f32 %v860, 0.0
    %v935 = vmax.f32 %v865, 0.0
    %v936 = vmax.f32 %v870, 0.0
    %v937 = vmax.f32 %v875, 0.0
    %v938 = vmax.f32 %v880, 0.0
    %v939 = vmax.f32 %v885, 0.0
    %v940 = vmax.f32 %v890, 0.0
    %v941 = vmax.f32 %v895, 0.0
    %v942 = vmax.f32 %v900, 0.0
    %v943 = vmax.f32 %v905, 0.0
    %v944 = vmax.f32 %v910, 0.0
    %v945 = vmax.f32 %v915, 0.0
    %v946 = vmax.f32 %v920, 0.0
    %v947 = vmax.f32 %v925, 0.0
    %v948 = vmax.f32 %v930, 0.0
    %949 = vmatprep.subr.mxu0 0.0
    %950 = vmatpush1.msra.mxu0 0.0
    %951 = vmatprep.subr.mxu0 0.0
    %952 = vmatpush1.msra.mxu0 0.0
    %953 = vmatprep.subr.mxu0 0.0
    %954 = vmatpush1.msra.mxu0 0.0
    %955 = vmatprep.subr.mxu0 0.0
    %956 = vmatpush1.msra.mxu0 0.0
    %957 = vmatprep.subr.mxu0 0.0
    %958 = vmatpush1.msra.mxu0 0.0
    %959 = vmatprep.subr.mxu0 0.0
    %960 = vmatpush1.msra.mxu0 0.0
    %961 = vmatprep.subr.mxu0 0.0
    %962 = vmatpush1.msra.mxu0 0.0
    %963 = vmatprep.subr.mxu0 0.0
    %964 = vmatpush1.msra.mxu0 0.0
    %965 = vmatprep.subr.mxu0 0.0
    %966 = vmatpush1.msra.mxu0 0.0
    %967 = vmatprep.subr.mxu0 0.0
    %968 = vmatpush1.msra.mxu0 0.0
    %969 = vmatprep.subr.mxu0 0.0
    %970 = vmatpush1.msra.mxu0 0.0
    %971 = vmatprep.subr.mxu0 0.0
    %972 = vmatpush1.msra.mxu0 0.0
    %973 = vmatprep.subr.mxu0 0.0
    %974 = vmatpush1.msra.mxu0 0.0
    %975 = vmatprep.subr.mxu0 0.0
    %976 = vmatpush1.msra.mxu0 0.0
    %977 = vmatprep.subr.mxu0 0.0
    %978 = vmatpush1.msra.mxu0 %v934
    %979 = vmatprep.subr.mxu0 0.0
    %980 = vmatpush1.msra.mxu0 %v933
    %981 = vmatprep.subr.mxu0 0.0
    %982 = vmatpush2.msra.mxu0 0.0
    %983 = vmatprep.subr.mxu0 0.0
    %984 = vmatpush2.msra.mxu0 0.0
    %985 = vmatprep.subr.mxu0 0.0
    %986 = vmatpush2.msra.mxu0 0.0
    %987 = vmatprep.subr.mxu0 0.0
    %988 = vmatpush2.msra.mxu0 0.0
    %989 = vmatprep.subr.mxu0 0.0
    %990 = vmatpush2.msra.mxu0 0.0
    %991 = vmatprep.subr.mxu0 0.0
    %992 = vmatpush2.msra.mxu0 0.0
    %993 = vmatprep.subr.mxu0 0.0
    %994 = vmatpush2.msra.mxu0 0.0
    %995 = vmatprep.subr.mxu0 0.0
    %996 = vmatpush2.msra.mxu0 0.0
    %997 = vmatprep.subr.mxu0 0.0
    %998 = vmatpush2.msra.mxu0 0.0
    %999 = vmatprep.subr.mxu0 0.0
    %1000 = vmatpush2.msra.mxu0 0.0
    %1001 = vmatprep.subr.mxu0 0.0
    %1002 = vmatpush2.msra.mxu0 0.0
    %1003 = vmatprep.subr.mxu0 0.0
    %1004 = vmatpush2.msra.mxu0 0.0
    %1005 = vmatprep.subr.mxu0 0.0
    %1006 = vmatpush2.msra.mxu0 0.0
    %1007 = vmatprep.subr.mxu0 0.0
    %1008 = vmatpush2.msra.mxu0 0.0
    %1009 = vmatprep.subr.mxu0 0.0
    %1010 = vmatpush2.msra.mxu0 0.0
    %1011 = vmatprep.subr.mxu0 0.0
    %1012 = vmatpush2.msra.mxu0 0.0
    %1013 = vmatprep.mubr.f32.mxu0 0.0
    %1014 = vmatmul.mubr.f32.gmra.mxu0 %v46
    %v1015 = vpop.f32.mrf.mxu0
    %v1016 = vadd.f32 0.0, %v1015
    %v1017 = vpop.f32.mrf.mxu0
    %1018 = vmatprep.mubr.f32.mxu0 0.0
    %1019 = vmatmul.mubr.f32.gmra.mxu0 %v49
    %v1020 = vpop.f32.mrf.mxu0
    %v1021 = vadd.f32 0.0, %v1020
    %v1022 = vpop.f32.mrf.mxu0
    %1023 = vdwg.mxu0
    %1024 = vmatprep.subr.mxu0 0.0
    %1025 = vmatpush1.msra.mxu0 0.0
    %1026 = vmatprep.subr.mxu0 0.0
    %1027 = vmatpush1.msra.mxu0 0.0
    %1028 = vmatprep.subr.mxu0 0.0
    %1029 = vmatpush1.msra.mxu0 0.0
    %1030 = vmatprep.subr.mxu0 0.0
    %1031 = vmatpush1.msra.mxu0 0.0
    %1032 = vmatprep.subr.mxu0 0.0
    %1033 = vmatpush1.msra.mxu0 0.0
    %1034 = vmatprep.subr.mxu0 0.0
    %1035 = vmatpush1.msra.mxu0 0.0
    %1036 = vmatprep.subr.mxu0 0.0
    %1037 = vmatpush1.msra.mxu0 0.0
    %1038 = vmatprep.subr.mxu0 0.0
    %1039 = vmatpush1.msra.mxu0 0.0
    %1040 = vmatprep.subr.mxu0 0.0
    %1041 = vmatpush1.msra.mxu0 0.0
    %1042 = vmatprep.subr.mxu0 0.0
    %1043 = vmatpush1.msra.mxu0 0.0
    %1044 = vmatprep.subr.mxu0 0.0
    %1045 = vmatpush1.msra.mxu0 0.0
    %1046 = vmatprep.subr.mxu0 0.0
    %1047 = vmatpush1.msra.mxu0 0.0
    %1048 = vmatprep.subr.mxu0 0.0
    %1049 = vmatpush1.msra.mxu0 0.0
    %1050 = vmatprep.subr.mxu0 0.0
    %1051 = vmatpush1.msra.mxu0 0.0
    %1052 = vmatprep.subr.mxu0 0.0
    %1053 = vmatpush1.msra.mxu0 %v936
    %1054 = vmatprep.subr.mxu0 0.0
    %1055 = vmatpush1.msra.mxu0 %v935
    %1056 = vmatprep.subr.mxu0 0.0
    %1057 = vmatpush2.msra.mxu0 0.0
    %1058 = vmatprep.subr.mxu0 0.0
    %1059 = vmatpush2.msra.mxu0 0.0
    %1060 = vmatprep.subr.mxu0 0.0
    %1061 = vmatpush2.msra.mxu0 0.0
    %1062 = vmatprep.subr.mxu0 0.0
    %1063 = vmatpush2.msra.mxu0 0.0
    %1064 = vmatprep.subr.mxu0 0.0
    %1065 = vmatpush2.msra.mxu0 0.0
    %1066 = vmatprep.subr.mxu0 0.0
    %1067 = vmatpush2.msra.mxu0 0.0
    %1068 = vmatprep.subr.mxu0 0.0
    %1069 = vmatpush2.msra.mxu0 0.0
    %1070 = vmatprep.subr.mxu0 0.0
    %1071 = vmatpush2.msra.mxu0 0.0
    %1072 = vmatprep.subr.mxu0 0.0
    %1073 = vmatpush2.msra.mxu0 0.0
    %1074 = vmatprep.subr.mxu0 0.0
    %1075 = vmatpush2.msra.mxu0 0.0
    %1076 = vmatprep.subr.mxu0 0.0
    %1077 = vmatpush2.msra.mxu0 0.0
    %1078 = vmatprep.subr.mxu0 0.0
    %1079 = vmatpush2.msra.mxu0 0.0
    %1080 = vmatprep.subr.mxu0 0.0
    %1081 = vmatpush2.msra.mxu0 0.0
    %1082 = vmatprep.subr.mxu0 0.0
    %1083 = vmatpush2.msra.mxu0 0.0
    %1084 = vmatprep.subr.mxu0 0.0
    %1085 = vmatpush2.msra.mxu0 0.0
    %1086 = vmatprep.subr.mxu0 0.0
    %1087 = vmatpush2.msra.mxu0 0.0
    %1088 = vmatprep.mubr.f32.mxu0 0.0
    %1089 = vmatmul.mubr.f32.gmra.mxu0 %v133
    %v1090 = vpop.f32.mrf.mxu0
    %v1091 = vadd.f32 0.0, %v1090
    %v1092 = vpop.f32.mrf.mxu0
    %1093 = vmatprep.mubr.f32.mxu0 0.0
    %1094 = vmatmul.mubr.f32.gmra.mxu0 %v136
    %v1095 = vpop.f32.mrf.mxu0
    %v1096 = vadd.f32 0.0, %v1095
    %v1097 = vpop.f32.mrf.mxu0
    %1098 = vdwg.mxu0
    %1099 = vmatprep.subr.mxu0 0.0
    %1100 = vmatpush1.msra.mxu0 0.0
    %1101 = vmatprep.subr.mxu0 0.0
    %1102 = vmatpush1.msra.mxu0 0.0
    %1103 = vmatprep.subr.mxu0 0.0
    %1104 = vmatpush1.msra.mxu0 0.0
    %1105 = vmatprep.subr.mxu0 0.0
    %1106 = vmatpush1.msra.mxu0 0.0
    %1107 = vmatprep.subr.mxu0 0.0
    %1108 = vmatpush1.msra.mxu0 0.0
    %1109 = vmatprep.subr.mxu0 0.0
    %1110 = vmatpush1.msra.mxu0 0.0
    %1111 = vmatprep.subr.mxu0 0.0
    %1112 = vmatpush1.msra.mxu0 0.0
    %1113 = vmatprep.subr.mxu0 0.0
    %1114 = vmatpush1.msra.mxu0 0.0
    %1115 = vmatprep.subr.mxu0 0.0
    %1116 = vmatpush1.msra.mxu0 0.0
    %1117 = vmatprep.subr.mxu0 0.0
    %1118 = vmatpush1.msra.mxu0 0.0
    %1119 = vmatprep.subr.mxu0 0.0
    %1120 = vmatpush1.msra.mxu0 0.0
    %1121 = vmatprep.subr.mxu0 0.0
    %1122 = vmatpush1.msra.mxu0 0.0
    %1123 = vmatprep.subr.mxu0 0.0
    %1124 = vmatpush1.msra.mxu0 0.0
    %1125 = vmatprep.subr.mxu0 0.0
    %1126 = vmatpush1.msra.mxu0 0.0
    %1127 = vmatprep.subr.mxu0 0.0
    %1128 = vmatpush1.msra.mxu0 %v938
    %1129 = vmatprep.subr.mxu0 0.0
    %1130 = vmatpush1.msra.mxu0 %v937
    %1131 = vmatprep.subr.mxu0 0.0
    %1132 = vmatpush2.msra.mxu0 0.0
    %1133 = vmatprep.subr.mxu0 0.0
    %1134 = vmatpush2.msra.mxu0 0.0
    %1135 = vmatprep.subr.mxu0 0.0
    %1136 = vmatpush2.msra.mxu0 0.0
    %1137 = vmatprep.subr.mxu0 0.0
    %1138 = vmatpush2.msra.mxu0 0.0
    %1139 = vmatprep.subr.mxu0 0.0
    %1140 = vmatpush2.msra.mxu0 0.0
    %1141 = vmatprep.subr.mxu0 0.0
    %1142 = vmatpush2.msra.mxu0 0.0
    %1143 = vmatprep.subr.mxu0 0.0
    %1144 = vmatpush2.msra.mxu0 0.0
    %1145 = vmatprep.subr.mxu0 0.0
    %1146 = vmatpush2.msra.mxu0 0.0
    %1147 = vmatprep.subr.mxu0 0.0
    %1148 = vmatpush2.msra.mxu0 0.0
    %1149 = vmatprep.subr.mxu0 0.0
    %1150 = vmatpush2.msra.mxu0 0.0
    %1151 = vmatprep.subr.mxu0 0.0
    %1152 = vmatpush2.msra.mxu0 0.0
    %1153 = vmatprep.subr.mxu0 0.0
    %1154 = vmatpush2.msra.mxu0 0.0
    %1155 = vmatprep.subr.mxu0 0.0
    %1156 = vmatpush2.msra.mxu0 0.0
    %1157 = vmatprep.subr.mxu0 0.0
    %1158 = vmatpush2.msra.mxu0 0.0
    %1159 = vmatprep.subr.mxu0 0.0
    %1160 = vmatpush2.msra.mxu0 0.0
    %1161 = vmatprep.subr.mxu0 0.0
    %1162 = vmatpush2.msra.mxu0 0.0
    %1163 = vmatprep.mubr.f32.mxu0 0.0
    %1164 = vmatmul.mubr.f32.gmra.mxu0 %v220
    %v1165 = vpop.f32.mrf.mxu0
    %v1166 = vadd.f32 0.0, %v1165
    %v1167 = vpop.f32.mrf.mxu0
    %1168 = vmatprep.mubr.f32.mxu0 0.0
    %1169 = vmatmul.mubr.f32.gmra.mxu0 %v223
    %v1170 = vpop.f32.mrf.mxu0
    %v1171 = vadd.f32 0.0, %v1170
    %v1172 = vpop.f32.mrf.mxu0
    %1173 = vdwg.mxu0
    %1174 = vmatprep.subr.mxu0 0.0
    %1175 = vmatpush1.msra.mxu0 0.0
    %1176 = vmatprep.subr.mxu0 0.0
    %1177 = vmatpush1.msra.mxu0 0.0
    %1178 = vmatprep.subr.mxu0 0.0
    %1179 = vmatpush1.msra.mxu0 0.0
    %1180 = vmatprep.subr.mxu0 0.0
    %1181 = vmatpush1.msra.mxu0 0.0
    %1182 = vmatprep.subr.mxu0 0.0
    %1183 = vmatpush1.msra.mxu0 0.0
    %1184 = vmatprep.subr.mxu0 0.0
    %1185 = vmatpush1.msra.mxu0 0.0
    %1186 = vmatprep.subr.mxu0 0.0
    %1187 = vmatpush1.msra.mxu0 0.0
    %1188 = vmatprep.subr.mxu0 0.0
    %1189 = vmatpush1.msra.mxu0 0.0
    %1190 = vmatprep.subr.mxu0 0.0
    %1191 = vmatpush1.msra.mxu0 0.0
    %1192 = vmatprep.subr.mxu0 0.0
    %1193 = vmatpush1.msra.mxu0 0.0
    %1194 = vmatprep.subr.mxu0 0.0
    %1195 = vmatpush1.msra.mxu0 0.0
    %1196 = vmatprep.subr.mxu0 0.0
    %1197 = vmatpush1.msra.mxu0 0.0
    %1198 = vmatprep.subr.mxu0 0.0
    %1199 = vmatpush1.msra.mxu0 0.0
    %1200 = vmatprep.subr.mxu0 0.0
    %1201 = vmatpush1.msra.mxu0 0.0
    %1202 = vmatprep.subr.mxu0 0.0
    %1203 = vmatpush1.msra.mxu0 %v940
    %1204 = vmatprep.subr.mxu0 0.0
    %1205 = vmatpush1.msra.mxu0 %v939
    %1206 = vmatprep.subr.mxu0 0.0
    %1207 = vmatpush2.msra.mxu0 0.0
    %1208 = vmatprep.subr.mxu0 0.0
    %1209 = vmatpush2.msra.mxu0 0.0
    %1210 = vmatprep.subr.mxu0 0.0
    %1211 = vmatpush2.msra.mxu0 0.0
    %1212 = vmatprep.subr.mxu0 0.0
    %1213 = vmatpush2.msra.mxu0 0.0
    %1214 = vmatprep.subr.mxu0 0.0
    %1215 = vmatpush2.msra.mxu0 0.0
    %1216 = vmatprep.subr.mxu0 0.0
    %1217 = vmatpush2.msra.mxu0 0.0
    %1218 = vmatprep.subr.mxu0 0.0
    %1219 = vmatpush2.msra.mxu0 0.0
    %1220 = vmatprep.subr.mxu0 0.0
    %1221 = vmatpush2.msra.mxu0 0.0
    %1222 = vmatprep.subr.mxu0 0.0
    %1223 = vmatpush2.msra.mxu0 0.0
    %1224 = vmatprep.subr.mxu0 0.0
    %1225 = vmatpush2.msra.mxu0 0.0
    %1226 = vmatprep.subr.mxu0 0.0
    %1227 = vmatpush2.msra.mxu0 0.0
    %1228 = vmatprep.subr.mxu0 0.0
    %1229 = vmatpush2.msra.mxu0 0.0
    %1230 = vmatprep.subr.mxu0 0.0
    %1231 = vmatpush2.msra.mxu0 0.0
    %1232 = vmatprep.subr.mxu0 0.0
    %1233 = vmatpush2.msra.mxu0 0.0
    %1234 = vmatprep.subr.mxu0 0.0
    %1235 = vmatpush2.msra.mxu0 0.0
    %1236 = vmatprep.subr.mxu0 0.0
    %1237 = vmatpush2.msra.mxu0 0.0
    %1238 = vmatprep.mubr.f32.mxu0 0.0
    %1239 = vmatmul.mubr.f32.gmra.mxu0 %v307
    %v1240 = vpop.f32.mrf.mxu0
    %v1241 = vadd.f32 0.0, %v1240
    %v1242 = vpop.f32.mrf.mxu0
    %1243 = vmatprep.mubr.f32.mxu0 0.0
    %1244 = vmatmul.mubr.f32.gmra.mxu0 %v310
    %v1245 = vpop.f32.mrf.mxu0
    %v1246 = vadd.f32 0.0, %v1245
    %v1247 = vpop.f32.mrf.mxu0
    %1248 = vdwg.mxu0
    %1249 = vmatprep.subr.mxu0 0.0
    %1250 = vmatpush1.msra.mxu0 0.0
    %1251 = vmatprep.subr.mxu0 0.0
    %1252 = vmatpush1.msra.mxu0 0.0
    %1253 = vmatprep.subr.mxu0 0.0
    %1254 = vmatpush1.msra.mxu0 0.0
    %1255 = vmatprep.subr.mxu0 0.0
    %1256 = vmatpush1.msra.mxu0 0.0
    %1257 = vmatprep.subr.mxu0 0.0
    %1258 = vmatpush1.msra.mxu0 0.0
    %1259 = vmatprep.subr.mxu0 0.0
    %1260 = vmatpush1.msra.mxu0 0.0
    %1261 = vmatprep.subr.mxu0 0.0
    %1262 = vmatpush1.msra.mxu0 0.0
    %1263 = vmatprep.subr.mxu0 0.0
    %1264 = vmatpush1.msra.mxu0 0.0
    %1265 = vmatprep.subr.mxu0 0.0
    %1266 = vmatpush1.msra.mxu0 0.0
    %1267 = vmatprep.subr.mxu0 0.0
    %1268 = vmatpush1.msra.mxu0 0.0
    %1269 = vmatprep.subr.mxu0 0.0
    %1270 = vmatpush1.msra.mxu0 0.0
    %1271 = vmatprep.subr.mxu0 0.0
    %1272 = vmatpush1.msra.mxu0 0.0
    %1273 = vmatprep.subr.mxu0 0.0
    %1274 = vmatpush1.msra.mxu0 0.0
    %1275 = vmatprep.subr.mxu0 0.0
    %1276 = vmatpush1.msra.mxu0 0.0
    %1277 = vmatprep.subr.mxu0 0.0
    %1278 = vmatpush1.msra.mxu0 %v942
    %1279 = vmatprep.subr.mxu0 0.0
    %1280 = vmatpush1.msra.mxu0 %v941
    %1281 = vmatprep.subr.mxu0 0.0
    %1282 = vmatpush2.msra.mxu0 0.0
    %1283 = vmatprep.subr.mxu0 0.0
    %1284 = vmatpush2.msra.mxu0 0.0
    %1285 = vmatprep.subr.mxu0 0.0
    %1286 = vmatpush2.msra.mxu0 0.0
    %1287 = vmatprep.subr.mxu0 0.0
    %1288 = vmatpush2.msra.mxu0 0.0
    %1289 = vmatprep.subr.mxu0 0.0
    %1290 = vmatpush2.msra.mxu0 0.0
    %1291 = vmatprep.subr.mxu0 0.0
    %1292 = vmatpush2.msra.mxu0 0.0
    %1293 = vmatprep.subr.mxu0 0.0
    %1294 = vmatpush2.msra.mxu0 0.0
    %1295 = vmatprep.subr.mxu0 0.0
    %1296 = vmatpush2.msra.mxu0 0.0
    %1297 = vmatprep.subr.mxu0 0.0
    %1298 = vmatpush2.msra.mxu0 0.0
    %1299 = vmatprep.subr.mxu0 0.0
    %1300 = vmatpush2.msra.mxu0 0.0
    %1301 = vmatprep.subr.mxu0 0.0
    %1302 = vmatpush2.msra.mxu0 0.0
    %1303 = vmatprep.subr.mxu0 0.0
    %1304 = vmatpush2.msra.mxu0 0.0
    %1305 = vmatprep.subr.mxu0 0.0
    %1306 = vmatpush2.msra.mxu0 0.0
    %1307 = vmatprep.subr.mxu0 0.0
    %1308 = vmatpush2.msra.mxu0 0.0
    %1309 = vmatprep.subr.mxu0 0.0
    %1310 = vmatpush2.msra.mxu0 0.0
    %1311 = vmatprep.subr.mxu0 0.0
    %1312 = vmatpush2.msra.mxu0 0.0
    %1313 = vmatprep.mubr.f32.mxu0 0.0
    %1314 = vmatmul.mubr.f32.gmra.mxu0 %v394
    %v1315 = vpop.f32.mrf.mxu0
    %v1316 = vadd.f32 0.0, %v1315
    %v1317 = vpop.f32.mrf.mxu0
    %1318 = vmatprep.mubr.f32.mxu0 0.0
    %1319 = vmatmul.mubr.f32.gmra.mxu0 %v397
    %v1320 = vpop.f32.mrf.mxu0
    %v1321 = vadd.f32 0.0, %v1320
    %v1322 = vpop.f32.mrf.mxu0
    %1323 = vdwg.mxu0
    %1324 = vmatprep.subr.mxu0 0.0
    %1325 = vmatpush1.msra.mxu0 0.0
    %1326 = vmatprep.subr.mxu0 0.0
    %1327 = vmatpush1.msra.mxu0 0.0
    %1328 = vmatprep.subr.mxu0 0.0
    %1329 = vmatpush1.msra.mxu0 0.0
    %1330 = vmatprep.subr.mxu0 0.0
    %1331 = vmatpush1.msra.mxu0 0.0
    %1332 = vmatprep.subr.mxu0 0.0
    %1333 = vmatpush1.msra.mxu0 0.0
    %1334 = vmatprep.subr.mxu0 0.0
    %1335 = vmatpush1.msra.mxu0 0.0
    %1336 = vmatprep.subr.mxu0 0.0
    %1337 = vmatpush1.msra.mxu0 0.0
    %1338 = vmatprep.subr.mxu0 0.0
    %1339 = vmatpush1.msra.mxu0 0.0
    %1340 = vmatprep.subr.mxu0 0.0
    %1341 = vmatpush1.msra.mxu0 0.0
    %1342 = vmatprep.subr.mxu0 0.0
    %1343 = vmatpush1.msra.mxu0 0.0
    %1344 = vmatprep.subr.mxu0 0.0
    %1345 = vmatpush1.msra.mxu0 0.0
    %1346 = vmatprep.subr.mxu0 0.0
    %1347 = vmatpush1.msra.mxu0 0.0
    %1348 = vmatprep.subr.mxu0 0.0
    %1349 = vmatpush1.msra.mxu0 0.0
    %1350 = vmatprep.subr.mxu0 0.0
    %1351 = vmatpush1.msra.mxu0 0.0
    %1352 = vmatprep.subr.mxu0 0.0
    %1353 = vmatpush1.msra.mxu0 %v944
    %1354 = vmatprep.subr.mxu0 0.0
    %1355 = vmatpush1.msra.mxu0 %v943
    %1356 = vmatprep.subr.mxu0 0.0
    %1357 = vmatpush2.msra.mxu0 0.0
    %1358 = vmatprep.subr.mxu0 0.0
    %1359 = vmatpush2.msra.mxu0 0.0
    %1360 = vmatprep.subr.mxu0 0.0
    %1361 = vmatpush2.msra.mxu0 0.0
    %1362 = vmatprep.subr.mxu0 0.0
    %1363 = vmatpush2.msra.mxu0 0.0
    %1364 = vmatprep.subr.mxu0 0.0
    %1365 = vmatpush2.msra.mxu0 0.0
    %1366 = vmatprep.subr.mxu0 0.0
    %1367 = vmatpush2.msra.mxu0 0.0
    %1368 = vmatprep.subr.mxu0 0.0
    %1369 = vmatpush2.msra.mxu0 0.0
    %1370 = vmatprep.subr.mxu0 0.0
    %1371 = vmatpush2.msra.mxu0 0.0
    %1372 = vmatprep.subr.mxu0 0.0
    %1373 = vmatpush2.msra.mxu0 0.0
    %1374 = vmatprep.subr.mxu0 0.0
    %1375 = vmatpush2.msra.mxu0 0.0
    %1376 = vmatprep.subr.mxu0 0.0
    %1377 = vmatpush2.msra.mxu0 0.0
    %1378 = vmatprep.subr.mxu0 0.0
    %1379 = vmatpush2.msra.mxu0 0.0
    %1380 = vmatprep.subr.mxu0 0.0
    %1381 = vmatpush2.msra.mxu0 0.0
    %1382 = vmatprep.subr.mxu0 0.0
    %1383 = vmatpush2.msra.mxu0 0.0
    %1384 = vmatprep.subr.mxu0 0.0
    %1385 = vmatpush2.msra.mxu0 0.0
    %1386 = vmatprep.subr.mxu0 0.0
    %1387 = vmatpush2.msra.mxu0 0.0
    %1388 = vmatprep.mubr.f32.mxu0 0.0
    %1389 = vmatmul.mubr.f32.gmra.mxu0 %v481
    %v1390 = vpop.f32.mrf.mxu0
    %v1391 = vadd.f32 0.0, %v1390
    %v1392 = vpop.f32.mrf.mxu0
    %1393 = vmatprep.mubr.f32.mxu0 0.0
    %1394 = vmatmul.mubr.f32.gmra.mxu0 %v484
    %v1395 = vpop.f32.mrf.mxu0
    %v1396 = vadd.f32 0.0, %v1395
    %v1397 = vpop.f32.mrf.mxu0
    %1398 = vdwg.mxu0
    %1399 = vmatprep.subr.mxu0 0.0
    %1400 = vmatpush1.msra.mxu0 0.0
    %1401 = vmatprep.subr.mxu0 0.0
    %1402 = vmatpush1.msra.mxu0 0.0
    %1403 = vmatprep.subr.mxu0 0.0
    %1404 = vmatpush1.msra.mxu0 0.0
    %1405 = vmatprep.subr.mxu0 0.0
    %1406 = vmatpush1.msra.mxu0 0.0
    %1407 = vmatprep.subr.mxu0 0.0
    %1408 = vmatpush1.msra.mxu0 0.0
    %1409 = vmatprep.subr.mxu0 0.0
    %1410 = vmatpush1.msra.mxu0 0.0
    %1411 = vmatprep.subr.mxu0 0.0
    %1412 = vmatpush1.msra.mxu0 0.0
    %1413 = vmatprep.subr.mxu0 0.0
    %1414 = vmatpush1.msra.mxu0 0.0
    %1415 = vmatprep.subr.mxu0 0.0
    %1416 = vmatpush1.msra.mxu0 0.0
    %1417 = vmatprep.subr.mxu0 0.0
    %1418 = vmatpush1.msra.mxu0 0.0
    %1419 = vmatprep.subr.mxu0 0.0
    %1420 = vmatpush1.msra.mxu0 0.0
    %1421 = vmatprep.subr.mxu0 0.0
    %1422 = vmatpush1.msra.mxu0 0.0
    %1423 = vmatprep.subr.mxu0 0.0
    %1424 = vmatpush1.msra.mxu0 0.0
    %1425 = vmatprep.subr.mxu0 0.0
    %1426 = vmatpush1.msra.mxu0 0.0
    %1427 = vmatprep.subr.mxu0 0.0
    %1428 = vmatpush1.msra.mxu0 %v946
    %1429 = vmatprep.subr.mxu0 0.0
    %1430 = vmatpush1.msra.mxu0 %v945
    %1431 = vmatprep.subr.mxu0 0.0
    %1432 = vmatpush2.msra.mxu0 0.0
    %1433 = vmatprep.subr.mxu0 0.0
    %1434 = vmatpush2.msra.mxu0 0.0
    %1435 = vmatprep.subr.mxu0 0.0
    %1436 = vmatpush2.msra.mxu0 0.0
    %1437 = vmatprep.subr.mxu0 0.0
    %1438 = vmatpush2.msra.mxu0 0.0
    %1439 = vmatprep.subr.mxu0 0.0
    %1440 = vmatpush2.msra.mxu0 0.0
    %1441 = vmatprep.subr.mxu0 0.0
    %1442 = vmatpush2.msra.mxu0 0.0
    %1443 = vmatprep.subr.mxu0 0.0
    %1444 = vmatpush2.msra.mxu0 0.0
    %1445 = vmatprep.subr.mxu0 0.0
    %1446 = vmatpush2.msra.mxu0 0.0
    %1447 = vmatprep.subr.mxu0 0.0
    %1448 = vmatpush2.msra.mxu0 0.0
    %1449 = vmatprep.subr.mxu0 0.0
    %1450 = vmatpush2.msra.mxu0 0.0
    %1451 = vmatprep.subr.mxu0 0.0
    %1452 = vmatpush2.msra.mxu0 0.0
    %1453 = vmatprep.subr.mxu0 0.0
    %1454 = vmatpush2.msra.mxu0 0.0
    %1455 = vmatprep.subr.mxu0 0.0
    %1456 = vmatpush2.msra.mxu0 0.0
    %1457 = vmatprep.subr.mxu0 0.0
    %1458 = vmatpush2.msra.mxu0 0.0
    %1459 = vmatprep.subr.mxu0 0.0
    %1460 = vmatpush2.msra.mxu0 0.0
    %1461 = vmatprep.subr.mxu0 0.0
    %1462 = vmatpush2.msra.mxu0 0.0
    %1463 = vmatprep.mubr.f32.mxu0 0.0
    %1464 = vmatmul.mubr.f32.gmra.mxu0 %v568
    %v1465 = vpop.f32.mrf.mxu0
    %v1466 = vadd.f32 0.0, %v1465
    %v1467 = vpop.f32.mrf.mxu0
    %1468 = vmatprep.mubr.f32.mxu0 0.0
    %1469 = vmatmul.mubr.f32.gmra.mxu0 %v571
    %v1470 = vpop.f32.mrf.mxu0
    %v1471 = vadd.f32 0.0, %v1470
    %v1472 = vpop.f32.mrf.mxu0
    %1473 = vdwg.mxu0
    %1474 = vmatprep.subr.mxu0 0.0
    %1475 = vmatpush1.msra.mxu0 0.0
    %1476 = vmatprep.subr.mxu0 0.0
    %1477 = vmatpush1.msra.mxu0 0.0
    %1478 = vmatprep.subr.mxu0 0.0
    %1479 = vmatpush1.msra.mxu0 0.0
    %1480 = vmatprep.subr.mxu0 0.0
    %1481 = vmatpush1.msra.mxu0 0.0
    %1482 = vmatprep.subr.mxu0 0.0
    %1483 = vmatpush1.msra.mxu0 0.0
    %1484 = vmatprep.subr.mxu0 0.0
    %1485 = vmatpush1.msra.mxu0 0.0
    %1486 = vmatprep.subr.mxu0 0.0
    %1487 = vmatpush1.msra.mxu0 0.0
    %1488 = vmatprep.subr.mxu0 0.0
    %1489 = vmatpush1.msra.mxu0 0.0
    %1490 = vmatprep.subr.mxu0 0.0
    %1491 = vmatpush1.msra.mxu0 0.0
    %1492 = vmatprep.subr.mxu0 0.0
    %1493 = vmatpush1.msra.mxu0 0.0
    %1494 = vmatprep.subr.mxu0 0.0
    %1495 = vmatpush1.msra.mxu0 0.0
    %1496 = vmatprep.subr.mxu0 0.0
    %1497 = vmatpush1.msra.mxu0 0.0
    %1498 = vmatprep.subr.mxu0 0.0
    %1499 = vmatpush1.msra.mxu0 0.0
    %1500 = vmatprep.subr.mxu0 0.0
    %1501 = vmatpush1.msra.mxu0 0.0
    %1502 = vmatprep.subr.mxu0 0.0
    %1503 = vmatpush1.msra.mxu0 %v948
    %1504 = vmatprep.subr.mxu0 0.0
    %1505 = vmatpush1.msra.mxu0 %v947
    %1506 = vmatprep.subr.mxu0 0.0
    %1507 = vmatpush2.msra.mxu0 0.0
    %1508 = vmatprep.subr.mxu0 0.0
    %1509 = vmatpush2.msra.mxu0 0.0
    %1510 = vmatprep.subr.mxu0 0.0
    %1511 = vmatpush2.msra.mxu0 0.0
    %1512 = vmatprep.subr.mxu0 0.0
    %1513 = vmatpush2.msra.mxu0 0.0
    %1514 = vmatprep.subr.mxu0 0.0
    %1515 = vmatpush2.msra.mxu0 0.0
    %1516 = vmatprep.subr.mxu0 0.0
    %1517 = vmatpush2.msra.mxu0 0.0
    %1518 = vmatprep.subr.mxu0 0.0
    %1519 = vmatpush2.msra.mxu0 0.0
    %1520 = vmatprep.subr.mxu0 0.0
    %1521 = vmatpush2.msra.mxu0 0.0
    %1522 = vmatprep.subr.mxu0 0.0
    %1523 = vmatpush2.msra.mxu0 0.0
    %1524 = vmatprep.subr.mxu0 0.0
    %1525 = vmatpush2.msra.mxu0 0.0
    %1526 = vmatprep.subr.mxu0 0.0
    %1527 = vmatpush2.msra.mxu0 0.0
    %1528 = vmatprep.subr.mxu0 0.0
    %1529 = vmatpush2.msra.mxu0 0.0
    %1530 = vmatprep.subr.mxu0 0.0
    %1531 = vmatpush2.msra.mxu0 0.0
    %1532 = vmatprep.subr.mxu0 0.0
    %1533 = vmatpush2.msra.mxu0 0.0
    %1534 = vmatprep.subr.mxu0 0.0
    %1535 = vmatpush2.msra.mxu0 0.0
    %1536 = vmatprep.subr.mxu0 0.0
    %1537 = vmatpush2.msra.mxu0 0.0
    %1538 = vmatprep.mubr.f32.mxu0 0.0
    %1539 = vmatmul.mubr.f32.gmra.mxu0 %v655
    %v1540 = vpop.f32.mrf.mxu0
    %v1541 = vadd.f32 0.0, %v1540
    %v1542 = vpop.f32.mrf.mxu0
    %1543 = vmatprep.mubr.f32.mxu0 0.0
    %1544 = vmatmul.mubr.f32.gmra.mxu0 %v658
    %v1545 = vpop.f32.mrf.mxu0
    %v1546 = vadd.f32 0.0, %v1545
    %v1547 = vpop.f32.mrf.mxu0
    %1548 = vdwg.mxu0
    %v1549 = vlaneseq
    %v1550 = vshrl.u32 %v1549, 7
    %v1551 = vsub.s32 0, %v1550
    %v1552 = vrot.slane %v34, %v1551
    %vm1553 = vcmask 261120
    %v1555 = vsel %vm1553, %v1016, 0
    %v1558 = vsel %vm1553, %v1021, 0
    %v1561 = vsel %vm1553, %v1091, 0
    %v1564 = vsel %vm1553, %v1096, 0
    %v1567 = vsel %vm1553, %v1166, 0
    %v1570 = vsel %vm1553, %v1171, 0
    %v1573 = vsel %vm1553, %v1241, 0
    %v1576 = vsel %vm1553, %v1246, 0
    %v1579 = vsel %vm1553, %v1316, 0
    %v1582 = vsel %vm1553, %v1321, 0
    %v1585 = vsel %vm1553, %v1391, 0
    %v1588 = vsel %vm1553, %v1396, 0
    %v1591 = vsel %vm1553, %v1466, 0
    %v1594 = vsel %vm1553, %v1471, 0
    %v1597 = vsel %vm1553, %v1541, 0
    %v1600 = vsel %vm1553, %v1546, 0
    %1602 = vmatprep.subr.mxu0 0.0
    %1603 = vmatpush1.msra.mxu0 0.0
    %1604 = vmatprep.subr.mxu0 0.0
    %1605 = vmatpush1.msra.mxu0 0.0
    %1606 = vmatprep.subr.mxu0 0.0
    %1607 = vmatpush1.msra.mxu0 0.0
    %1608 = vmatprep.subr.mxu0 0.0
    %1609 = vmatpush1.msra.mxu0 0.0
    %1610 = vmatprep.subr.mxu0 0.0
    %1611 = vmatpush1.msra.mxu0 0.0
    %1612 = vmatprep.subr.mxu0 0.0
    %1613 = vmatpush1.msra.mxu0 0.0
    %1614 = vmatprep.subr.mxu0 0.0
    %1615 = vmatpush1.msra.mxu0 0.0
    %1616 = vmatprep.subr.mxu0 0.0
    %1617 = vmatpush1.msra.mxu0 0.0
    %1618 = vmatprep.subr.mxu0 0.0
    %1619 = vmatpush1.msra.mxu0 0.0
    %1620 = vmatprep.subr.mxu0 0.0
    %1621 = vmatpush1.msra.mxu0 0.0
    %1622 = vmatprep.subr.mxu0 0.0
    %1623 = vmatpush1.msra.mxu0 0.0
    %1624 = vmatprep.subr.mxu0 0.0
    %1625 = vmatpush1.msra.mxu0 0.0
    %1626 = vmatprep.subr.mxu0 0.0
    %1627 = vmatpush1.msra.mxu0 %v33
    %1628 = vmatprep.subr.mxu0 0.0
    %1629 = vmatpush1.msra.mxu0 %v32
    %1630 = vmatprep.subr.mxu0 0.0
    %1631 = vmatpush1.msra.mxu0 %v31
    %1632 = vmatprep.subr.mxu0 0.0
    %1633 = vmatpush1.msra.mxu0 %v30
    %1634 = vmatprep.subr.mxu0 0.0
    %1635 = vmatpush2.msra.mxu0 0.0
    %1636 = vmatprep.subr.mxu0 0.0
    %1637 = vmatpush2.msra.mxu0 0.0
    %1638 = vmatprep.subr.mxu0 0.0
    %1639 = vmatpush2.msra.mxu0 0.0
    %1640 = vmatprep.subr.mxu0 0.0
    %1641 = vmatpush2.msra.mxu0 0.0
    %1642 = vmatprep.subr.mxu0 0.0
    %1643 = vmatpush2.msra.mxu0 0.0
    %1644 = vmatprep.subr.mxu0 0.0
    %1645 = vmatpush2.msra.mxu0 0.0
    %1646 = vmatprep.subr.mxu0 0.0
    %1647 = vmatpush2.msra.mxu0 0.0
    %1648 = vmatprep.subr.mxu0 0.0
    %1649 = vmatpush2.msra.mxu0 0.0
    %1650 = vmatprep.subr.mxu0 0.0
    %1651 = vmatpush2.msra.mxu0 0.0
    %1652 = vmatprep.subr.mxu0 0.0
    %1653 = vmatpush2.msra.mxu0 0.0
    %1654 = vmatprep.subr.mxu0 0.0
    %1655 = vmatpush2.msra.mxu0 0.0
    %1656 = vmatprep.subr.mxu0 0.0
    %1657 = vmatpush2.msra.mxu0 0.0
    %1658 = vmatprep.subr.mxu0 0.0
    %1659 = vmatpush2.msra.mxu0 0.0
    %1660 = vmatprep.subr.mxu0 0.0
    %1661 = vmatpush2.msra.mxu0 0.0
    %1662 = vmatprep.subr.mxu0 0.0
    %1663 = vmatpush2.msra.mxu0 0.0
    %1664 = vmatprep.subr.mxu0 0.0
    %1665 = vmatpush2.msra.mxu0 0.0
    %1666 = vmatprep.mubr.f32.mxu0 0.0
    %1667 = vmatmul.mubr.f32.gmra.mxu0 %v1555
    %v1668 = vpop.f32.mrf.mxu0
    %v1669 = vadd.f32 %v1552, %v1668
    %v1670 = vpop.f32.mrf.mxu0
    %1671 = vmatprep.mubr.f32.mxu0 0.0
    %1672 = vmatmul.mubr.f32.gmra.mxu0 %v1558
    %v1673 = vpop.f32.mrf.mxu0
    %v1674 = vadd.f32 %v1552, %v1673
    %v1675 = vpop.f32.mrf.mxu0
    %1676 = vmatprep.mubr.f32.mxu0 0.0
    %1677 = vmatmul.mubr.f32.gmra.mxu0 %v1561
    %v1678 = vpop.f32.mrf.mxu0
    %v1679 = vadd.f32 %v1552, %v1678
    %v1680 = vpop.f32.mrf.mxu0
    %1681 = vmatprep.mubr.f32.mxu0 0.0
    %1682 = vmatmul.mubr.f32.gmra.mxu0 %v1564
    %v1683 = vpop.f32.mrf.mxu0
    %v1684 = vadd.f32 %v1552, %v1683
    %v1685 = vpop.f32.mrf.mxu0
    %1686 = vmatprep.mubr.f32.mxu0 0.0
    %1687 = vmatmul.mubr.f32.gmra.mxu0 %v1567
    %v1688 = vpop.f32.mrf.mxu0
    %v1689 = vadd.f32 %v1552, %v1688
    %v1690 = vpop.f32.mrf.mxu0
    %1691 = vmatprep.mubr.f32.mxu0 0.0
    %1692 = vmatmul.mubr.f32.gmra.mxu0 %v1570
    %v1693 = vpop.f32.mrf.mxu0
    %v1694 = vadd.f32 %v1552, %v1693
    %v1695 = vpop.f32.mrf.mxu0
    %1696 = vmatprep.mubr.f32.mxu0 0.0
    %1697 = vmatmul.mubr.f32.gmra.mxu0 %v1573
    %v1698 = vpop.f32.mrf.mxu0
    %v1699 = vadd.f32 %v1552, %v1698
    %v1700 = vpop.f32.mrf.mxu0
    %1701 = vmatprep.mubr.f32.mxu0 0.0
    %1702 = vmatmul.mubr.f32.gmra.mxu0 %v1576
    %v1703 = vpop.f32.mrf.mxu0
    %v1704 = vadd.f32 %v1552, %v1703
    %v1705 = vpop.f32.mrf.mxu0
    %1706 = vmatprep.mubr.f32.mxu0 0.0
    %1707 = vmatmul.mubr.f32.gmra.mxu0 %v1579
    %v1708 = vpop.f32.mrf.mxu0
    %v1709 = vadd.f32 %v1552, %v1708
    %v1710 = vpop.f32.mrf.mxu0
    %1711 = vmatprep.mubr.f32.mxu0 0.0
    %1712 = vmatmul.mubr.f32.gmra.mxu0 %v1582
    %v1713 = vpop.f32.mrf.mxu0
    %v1714 = vadd.f32 %v1552, %v1713
    %v1715 = vpop.f32.mrf.mxu0
    %1716 = vmatprep.mubr.f32.mxu0 0.0
    %1717 = vmatmul.mubr.f32.gmra.mxu0 %v1585
    %v1718 = vpop.f32.mrf.mxu0
    %v1719 = vadd.f32 %v1552, %v1718
    %v1720 = vpop.f32.mrf.mxu0
    %1721 = vmatprep.mubr.f32.mxu0 0.0
    %1722 = vmatmul.mubr.f32.gmra.mxu0 %v1588
    %v1723 = vpop.f32.mrf.mxu0
    %v1724 = vadd.f32 %v1552, %v1723
    %v1725 = vpop.f32.mrf.mxu0
    %1726 = vmatprep.mubr.f32.mxu0 0.0
    %1727 = vmatmul.mubr.f32.gmra.mxu0 %v1591
    %v1728 = vpop.f32.mrf.mxu0
    %v1729 = vadd.f32 %v1552, %v1728
    %v1730 = vpop.f32.mrf.mxu0
    %1731 = vmatprep.mubr.f32.mxu0 0.0
    %1732 = vmatmul.mubr.f32.gmra.mxu0 %v1594
    %v1733 = vpop.f32.mrf.mxu0
    %v1734 = vadd.f32 %v1552, %v1733
    %v1735 = vpop.f32.mrf.mxu0
    %1736 = vmatprep.mubr.f32.mxu0 0.0
    %1737 = vmatmul.mubr.f32.gmra.mxu0 %v1597
    %v1738 = vpop.f32.mrf.mxu0
    %v1739 = vadd.f32 %v1552, %v1738
    %v1740 = vpop.f32.mrf.mxu0
    %1741 = vmatprep.mubr.f32.mxu0 0.0
    %1742 = vmatmul.mubr.f32.gmra.mxu0 %v1600
    %v1743 = vpop.f32.mrf.mxu0
    %v1744 = vadd.f32 %v1552, %v1743
    %v1745 = vpop.f32.mrf.mxu0
    %1746 = vdwg.mxu0
    %v1747 = vmax.f32 %v1669, 0.0
    %v1748 = vmax.f32 %v1674, 0.0
    %v1749 = vmax.f32 %v1679, 0.0
    %v1750 = vmax.f32 %v1684, 0.0
    %v1751 = vmax.f32 %v1689, 0.0
    %v1752 = vmax.f32 %v1694, 0.0
    %v1753 = vmax.f32 %v1699, 0.0
    %v1754 = vmax.f32 %v1704, 0.0
    %v1755 = vmax.f32 %v1709, 0.0
    %v1756 = vmax.f32 %v1714, 0.0
    %v1757 = vmax.f32 %v1719, 0.0
    %v1758 = vmax.f32 %v1724, 0.0
    %v1759 = vmax.f32 %v1729, 0.0
    %v1760 = vmax.f32 %v1734, 0.0
    %v1761 = vmax.f32 %v1739, 0.0
    %v1762 = vmax.f32 %v1744, 0.0
    %v1763 = vlaneseq
    %v1764 = vshrl.u32 %v1763, 7
    %v1765 = vsub.s32 0, %v1764
    %v1766 = vrot.slane %v27, %v1765
    %v1768 = vsel %vm1553, %v1747, 0
    %v1771 = vsel %vm1553, %v1748, 0
    %v1774 = vsel %vm1553, %v1749, 0
    %v1777 = vsel %vm1553, %v1750, 0
    %v1780 = vsel %vm1553, %v1751, 0
    %v1783 = vsel %vm1553, %v1752, 0
    %v1786 = vsel %vm1553, %v1753, 0
    %v1789 = vsel %vm1553, %v1754, 0
    %v1792 = vsel %vm1553, %v1755, 0
    %v1795 = vsel %vm1553, %v1756, 0
    %v1798 = vsel %vm1553, %v1757, 0
    %v1801 = vsel %vm1553, %v1758, 0
    %v1804 = vsel %vm1553, %v1759, 0
    %v1807 = vsel %vm1553, %v1760, 0
    %v1810 = vsel %vm1553, %v1761, 0
    %v1813 = vsel %vm1553, %v1762, 0
    %1815 = vmatprep.subr.mxu0 0.0
    %1816 = vmatpush1.msra.mxu0 0.0
    %1817 = vmatprep.subr.mxu0 0.0
    %1818 = vmatpush1.msra.mxu0 0.0
    %1819 = vmatprep.subr.mxu0 0.0
    %1820 = vmatpush1.msra.mxu0 0.0
    %1821 = vmatprep.subr.mxu0 0.0
    %1822 = vmatpush1.msra.mxu0 0.0
    %1823 = vmatprep.subr.mxu0 0.0
    %1824 = vmatpush1.msra.mxu0 0.0
    %1825 = vmatprep.subr.mxu0 0.0
    %1826 = vmatpush1.msra.mxu0 0.0
    %1827 = vmatprep.subr.mxu0 0.0
    %1828 = vmatpush1.msra.mxu0 0.0
    %1829 = vmatprep.subr.mxu0 0.0
    %1830 = vmatpush1.msra.mxu0 0.0
    %1831 = vmatprep.subr.mxu0 0.0
    %1832 = vmatpush1.msra.mxu0 0.0
    %1833 = vmatprep.subr.mxu0 0.0
    %1834 = vmatpush1.msra.mxu0 0.0
    %1835 = vmatprep.subr.mxu0 0.0
    %1836 = vmatpush1.msra.mxu0 0.0
    %1837 = vmatprep.subr.mxu0 0.0
    %1838 = vmatpush1.msra.mxu0 0.0
    %1839 = vmatprep.subr.mxu0 0.0
    %1840 = vmatpush1.msra.mxu0 %v22
    %1841 = vmatprep.subr.mxu0 0.0
    %1842 = vmatpush1.msra.mxu0 %v21
    %1843 = vmatprep.subr.mxu0 0.0
    %1844 = vmatpush1.msra.mxu0 %v20
    %1845 = vmatprep.subr.mxu0 0.0
    %1846 = vmatpush1.msra.mxu0 %v19
    %1847 = vmatprep.subr.mxu0 0.0
    %1848 = vmatpush2.msra.mxu0 0.0
    %1849 = vmatprep.subr.mxu0 0.0
    %1850 = vmatpush2.msra.mxu0 0.0
    %1851 = vmatprep.subr.mxu0 0.0
    %1852 = vmatpush2.msra.mxu0 0.0
    %1853 = vmatprep.subr.mxu0 0.0
    %1854 = vmatpush2.msra.mxu0 0.0
    %1855 = vmatprep.subr.mxu0 0.0
    %1856 = vmatpush2.msra.mxu0 0.0
    %1857 = vmatprep.subr.mxu0 0.0
    %1858 = vmatpush2.msra.mxu0 0.0
    %1859 = vmatprep.subr.mxu0 0.0
    %1860 = vmatpush2.msra.mxu0 0.0
    %1861 = vmatprep.subr.mxu0 0.0
    %1862 = vmatpush2.msra.mxu0 0.0
    %1863 = vmatprep.subr.mxu0 0.0
    %1864 = vmatpush2.msra.mxu0 0.0
    %1865 = vmatprep.subr.mxu0 0.0
    %1866 = vmatpush2.msra.mxu0 0.0
    %1867 = vmatprep.subr.mxu0 0.0
    %1868 = vmatpush2.msra.mxu0 0.0
    %1869 = vmatprep.subr.mxu0 0.0
    %1870 = vmatpush2.msra.mxu0 0.0
    %1871 = vmatprep.subr.mxu0 0.0
    %1872 = vmatpush2.msra.mxu0 0.0
    %1873 = vmatprep.subr.mxu0 0.0
    %1874 = vmatpush2.msra.mxu0 0.0
    %1875 = vmatprep.subr.mxu0 0.0
    %1876 = vmatpush2.msra.mxu0 0.0
    %1877 = vmatprep.subr.mxu0 0.0
    %1878 = vmatpush2.msra.mxu0 0.0
    %1879 = vmatprep.mubr.f32.mxu0 0.0
    %1880 = vmatmul.mubr.f32.gmra.mxu0 %v1768
    %v1881 = vpop.f32.mrf.mxu0
    %v1882 = vadd.f32 %v1766, %v1881
    %v1883 = vpop.f32.mrf.mxu0
    %1884 = vmatprep.mubr.f32.mxu0 0.0
    %1885 = vmatmul.mubr.f32.gmra.mxu0 %v1771
    %v1886 = vpop.f32.mrf.mxu0
    %v1887 = vadd.f32 %v1766, %v1886
    %v1888 = vpop.f32.mrf.mxu0
    %1889 = vmatprep.mubr.f32.mxu0 0.0
    %1890 = vmatmul.mubr.f32.gmra.mxu0 %v1774
    %v1891 = vpop.f32.mrf.mxu0
    %v1892 = vadd.f32 %v1766, %v1891
    %v1893 = vpop.f32.mrf.mxu0
    %1894 = vmatprep.mubr.f32.mxu0 0.0
    %1895 = vmatmul.mubr.f32.gmra.mxu0 %v1777
    %v1896 = vpop.f32.mrf.mxu0
    %v1897 = vadd.f32 %v1766, %v1896
    %v1898 = vpop.f32.mrf.mxu0
    %1899 = vmatprep.mubr.f32.mxu0 0.0
    %1900 = vmatmul.mubr.f32.gmra.mxu0 %v1780
    %v1901 = vpop.f32.mrf.mxu0
    %v1902 = vadd.f32 %v1766, %v1901
    %v1903 = vpop.f32.mrf.mxu0
    %1904 = vmatprep.mubr.f32.mxu0 0.0
    %1905 = vmatmul.mubr.f32.gmra.mxu0 %v1783
    %v1906 = vpop.f32.mrf.mxu0
    %v1907 = vadd.f32 %v1766, %v1906
    %v1908 = vpop.f32.mrf.mxu0
    %1909 = vmatprep.mubr.f32.mxu0 0.0
    %1910 = vmatmul.mubr.f32.gmra.mxu0 %v1786
    %v1911 = vpop.f32.mrf.mxu0
    %v1912 = vadd.f32 %v1766, %v1911
    %v1913 = vpop.f32.mrf.mxu0
    %1914 = vmatprep.mubr.f32.mxu0 0.0
    %1915 = vmatmul.mubr.f32.gmra.mxu0 %v1789
    %v1916 = vpop.f32.mrf.mxu0
    %v1917 = vadd.f32 %v1766, %v1916
    %v1918 = vpop.f32.mrf.mxu0
    %1919 = vmatprep.mubr.f32.mxu0 0.0
    %1920 = vmatmul.mubr.f32.gmra.mxu0 %v1792
    %v1921 = vpop.f32.mrf.mxu0
    %v1922 = vadd.f32 %v1766, %v1921
    %v1923 = vpop.f32.mrf.mxu0
    %1924 = vmatprep.mubr.f32.mxu0 0.0
    %1925 = vmatmul.mubr.f32.gmra.mxu0 %v1795
    %v1926 = vpop.f32.mrf.mxu0
    %v1927 = vadd.f32 %v1766, %v1926
    %v1928 = vpop.f32.mrf.mxu0
    %1929 = vmatprep.mubr.f32.mxu0 0.0
    %1930 = vmatmul.mubr.f32.gmra.mxu0 %v1798
    %v1931 = vpop.f32.mrf.mxu0
    %v1932 = vadd.f32 %v1766, %v1931
    %v1933 = vpop.f32.mrf.mxu0
    %1934 = vmatprep.mubr.f32.mxu0 0.0
    %1935 = vmatmul.mubr.f32.gmra.mxu0 %v1801
    %v1936 = vpop.f32.mrf.mxu0
    %v1937 = vadd.f32 %v1766, %v1936
    %v1938 = vpop.f32.mrf.mxu0
    %1939 = vmatprep.mubr.f32.mxu0 0.0
    %1940 = vmatmul.mubr.f32.gmra.mxu0 %v1804
    %v1941 = vpop.f32.mrf.mxu0
    %v1942 = vadd.f32 %v1766, %v1941
    %v1943 = vpop.f32.mrf.mxu0
    %1944 = vmatprep.mubr.f32.mxu0 0.0
    %1945 = vmatmul.mubr.f32.gmra.mxu0 %v1807
    %v1946 = vpop.f32.mrf.mxu0
    %v1947 = vadd.f32 %v1766, %v1946
    %v1948 = vpop.f32.mrf.mxu0
    %1949 = vmatprep.mubr.f32.mxu0 0.0
    %1950 = vmatmul.mubr.f32.gmra.mxu0 %v1810
    %v1951 = vpop.f32.mrf.mxu0
    %v1952 = vadd.f32 %v1766, %v1951
    %v1953 = vpop.f32.mrf.mxu0
    %1954 = vmatprep.mubr.f32.mxu0 0.0
    %1955 = vmatmul.mubr.f32.gmra.mxu0 %v1813
    %v1956 = vpop.f32.mrf.mxu0
    %v1957 = vadd.f32 %v1766, %v1956
    %v1958 = vpop.f32.mrf.mxu0
    %1959 = vdwg.mxu0
    %v1961 = vsel %vm1553, 0.0, 0
    %1963 = vmatprep.subr.mxu0 0.0
    %1964 = vmatpush1.msra.mxu0 0.0
    %1965 = vmatprep.subr.mxu0 0.0
    %1966 = vmatpush1.msra.mxu0 0.0
    %1967 = vmatprep.subr.mxu0 0.0
    %1968 = vmatpush1.msra.mxu0 0.0
    %1969 = vmatprep.subr.mxu0 0.0
    %1970 = vmatpush1.msra.mxu0 0.0
    %1971 = vmatprep.subr.mxu0 0.0
    %1972 = vmatpush1.msra.mxu0 0.0
    %1973 = vmatprep.subr.mxu0 0.0
    %1974 = vmatpush1.msra.mxu0 0.0
    %1975 = vmatprep.subr.mxu0 0.0
    %1976 = vmatpush1.msra.mxu0 0.0
    %1977 = vmatprep.subr.mxu0 0.0
    %1978 = vmatpush1.msra.mxu0 0.0
    %1979 = vmatprep.subr.mxu0 0.0
    %1980 = vmatpush1.msra.mxu0 0.0
    %1981 = vmatprep.subr.mxu0 0.0
    %1982 = vmatpush1.msra.mxu0 0.0
    %1983 = vmatprep.subr.mxu0 0.0
    %1984 = vmatpush1.msra.mxu0 0.0
    %1985 = vmatprep.subr.mxu0 0.0
    %1986 = vmatpush1.msra.mxu0 0.0
    %1987 = vmatprep.subr.mxu0 0.0
    %1988 = vmatpush1.msra.mxu0 %v26
    %1989 = vmatprep.subr.mxu0 0.0
    %1990 = vmatpush1.msra.mxu0 %v25
    %1991 = vmatprep.subr.mxu0 0.0
    %1992 = vmatpush1.msra.mxu0 %v24
    %1993 = vmatprep.subr.mxu0 0.0
    %1994 = vmatpush1.msra.mxu0 %v23
    %1995 = vmatprep.subr.mxu0 0.0
    %1996 = vmatpush2.msra.mxu0 0.0
    %1997 = vmatprep.subr.mxu0 0.0
    %1998 = vmatpush2.msra.mxu0 0.0
    %1999 = vmatprep.subr.mxu0 0.0
    %2000 = vmatpush2.msra.mxu0 0.0
    %2001 = vmatprep.subr.mxu0 0.0
    %2002 = vmatpush2.msra.mxu0 0.0
    %2003 = vmatprep.subr.mxu0 0.0
    %2004 = vmatpush2.msra.mxu0 0.0
    %2005 = vmatprep.subr.mxu0 0.0
    %2006 = vmatpush2.msra.mxu0 0.0
    %2007 = vmatprep.subr.mxu0 0.0
    %2008 = vmatpush2.msra.mxu0 0.0
    %2009 = vmatprep.subr.mxu0 0.0
    %2010 = vmatpush2.msra.mxu0 0.0
    %2011 = vmatprep.subr.mxu0 0.0
    %2012 = vmatpush2.msra.mxu0 0.0
    %2013 = vmatprep.subr.mxu0 0.0
    %2014 = vmatpush2.msra.mxu0 0.0
    %2015 = vmatprep.subr.mxu0 0.0
    %2016 = vmatpush2.msra.mxu0 0.0
    %2017 = vmatprep.subr.mxu0 0.0
    %2018 = vmatpush2.msra.mxu0 0.0
    %2019 = vmatprep.subr.mxu0 0.0
    %2020 = vmatpush2.msra.mxu0 0.0
    %2021 = vmatprep.subr.mxu0 0.0
    %2022 = vmatpush2.msra.mxu0 0.0
    %2023 = vmatprep.subr.mxu0 0.0
    %2024 = vmatpush2.msra.mxu0 0.0
    %2025 = vmatprep.subr.mxu0 0.0
    %2026 = vmatpush2.msra.mxu0 0.0
    %2027 = vmatprep.mubr.f32.mxu0 0.0
    %2028 = vmatmul.mubr.f32.gmra.mxu0 %v1961
    %v2029 = vpop.f32.mrf.mxu0
    %v2030 = vadd.f32 0.0, %v2029
    %v2031 = vpop.f32.mrf.mxu0
    %2032 = vmatprep.mubr.f32.mxu0 0.0
    %2033 = vmatmul.mubr.f32.gmra.mxu0 %v1961
    %v2034 = vpop.f32.mrf.mxu0
    %v2035 = vadd.f32 0.0, %v2034
    %v2036 = vpop.f32.mrf.mxu0
    %2037 = vdwg.mxu0
    %v2038 = vadd.f32 %v1882, %v2030
    %v2039 = vadd.f32 %v1887, %v2035
    %v2040 = vxor.u32 %v2038, 2147483648
    %v2041 = vxor.u32 %v2039, 2147483648
    %v2042 = vmul.f32 %v2040, 1.442695
    %v2043 = vpow.pop %v2042
    %v2044 = vmul.f32 %v2041, 1.442695
    %v2045 = vpow.pop %v2044
    %v2046 = vadd.f32 %v2043, 1.0
    %v2047 = vadd.f32 %v2045, 1.0
    %v2048 = vrcp.pop %v2046
    %v2049 = vmul.f32 1.0, %v2048
    %v2050 = vrcp.pop %v2047
    %v2051 = vmul.f32 1.0, %v2050
    %v2052 = vtanh.pop %v2038
    %v2053 = vtanh.pop %v2039
    %v2054 = vmul.f32 %v2049, 0.0
    %v2055 = vmul.f32 %v2051, 0.0
    %2058 = vrot.lane.b32.xlu0 %v2052, 64
    %v2059 = vpop.permute.xlu0 %2058
    %2060 = vrot.lane.b32.xlu0 %v2053, 64
    %v2061 = vpop.permute.xlu0 %2060
    %v2064 = vmul.f32 %v2049, %v2059
    %v2065 = vmul.f32 %v2051, %v2061
    %2068 = vrot.lane.b32.xlu0 %v2064, 32
    %v2069 = vpop.permute.xlu0 %2068
    %2070 = vrot.lane.b32.xlu0 %v2065, 32
    %v2071 = vpop.permute.xlu0 %2070
    %v2074 = vadd.f32 %v2054, %v2069
    %v2075 = vadd.f32 %v2055, %v2071
    %v2076 = vtanh.pop %v2074
    %v2077 = vtanh.pop %v2075
    %2080 = vrot.lane.b32.xlu0 %v2076, 64
    %v2081 = vpop.permute.xlu0 %2080
    %2082 = vrot.lane.b32.xlu0 %v2077, 64
    %v2083 = vpop.permute.xlu0 %2082
    %v2086 = vmul.f32 %v2049, %v2081
    %v2087 = vmul.f32 %v2051, %v2083
    %2090 = vrot.lane.b32.xlu0 %v2086, 32
    %v2091 = vpop.permute.xlu0 %2090
    %2092 = vrot.lane.b32.xlu0 %v2087, 32
    %v2093 = vpop.permute.xlu0 %2092
    %v2094 = vsel %vm1553, %v2091, 0
    %v2096 = vsel %vm1553, %v2093, 0
    %2098 = vmatprep.subr.mxu0 0.0
    %2099 = vmatpush1.msra.mxu0 0.0
    %2100 = vmatprep.subr.mxu0 0.0
    %2101 = vmatpush1.msra.mxu0 0.0
    %2102 = vmatprep.subr.mxu0 0.0
    %2103 = vmatpush1.msra.mxu0 0.0
    %2104 = vmatprep.subr.mxu0 0.0
    %2105 = vmatpush1.msra.mxu0 0.0
    %2106 = vmatprep.subr.mxu0 0.0
    %2107 = vmatpush1.msra.mxu0 0.0
    %2108 = vmatprep.subr.mxu0 0.0
    %2109 = vmatpush1.msra.mxu0 0.0
    %2110 = vmatprep.subr.mxu0 0.0
    %2111 = vmatpush1.msra.mxu0 0.0
    %2112 = vmatprep.subr.mxu0 0.0
    %2113 = vmatpush1.msra.mxu0 0.0
    %2114 = vmatprep.subr.mxu0 0.0
    %2115 = vmatpush1.msra.mxu0 0.0
    %2116 = vmatprep.subr.mxu0 0.0
    %2117 = vmatpush1.msra.mxu0 0.0
    %2118 = vmatprep.subr.mxu0 0.0
    %2119 = vmatpush1.msra.mxu0 0.0
    %2120 = vmatprep.subr.mxu0 0.0
    %2121 = vmatpush1.msra.mxu0 0.0
    %2122 = vmatprep.subr.mxu0 0.0
    %2123 = vmatpush1.msra.mxu0 %v26
    %2124 = vmatprep.subr.mxu0 0.0
    %2125 = vmatpush1.msra.mxu0 %v25
    %2126 = vmatprep.subr.mxu0 0.0
    %2127 = vmatpush1.msra.mxu0 %v24
    %2128 = vmatprep.subr.mxu0 0.0
    %2129 = vmatpush1.msra.mxu0 %v23
    %2130 = vmatprep.subr.mxu0 0.0
    %2131 = vmatpush2.msra.mxu0 0.0
    %2132 = vmatprep.subr.mxu0 0.0
    %2133 = vmatpush2.msra.mxu0 0.0
    %2134 = vmatprep.subr.mxu0 0.0
    %2135 = vmatpush2.msra.mxu0 0.0
    %2136 = vmatprep.subr.mxu0 0.0
    %2137 = vmatpush2.msra.mxu0 0.0
    %2138 = vmatprep.subr.mxu0 0.0
    %2139 = vmatpush2.msra.mxu0 0.0
    %2140 = vmatprep.subr.mxu0 0.0
    %2141 = vmatpush2.msra.mxu0 0.0
    %2142 = vmatprep.subr.mxu0 0.0
    %2143 = vmatpush2.msra.mxu0 0.0
    %2144 = vmatprep.subr.mxu0 0.0
    %2145 = vmatpush2.msra.mxu0 0.0
    %2146 = vmatprep.subr.mxu0 0.0
    %2147 = vmatpush2.msra.mxu0 0.0
    %2148 = vmatprep.subr.mxu0 0.0
    %2149 = vmatpush2.msra.mxu0 0.0
    %2150 = vmatprep.subr.mxu0 0.0
    %2151 = vmatpush2.msra.mxu0 0.0
    %2152 = vmatprep.subr.mxu0 0.0
    %2153 = vmatpush2.msra.mxu0 0.0
    %2154 = vmatprep.subr.mxu0 0.0
    %2155 = vmatpush2.msra.mxu0 0.0
    %2156 = vmatprep.subr.mxu0 0.0
    %2157 = vmatpush2.msra.mxu0 0.0
    %2158 = vmatprep.subr.mxu0 0.0
    %2159 = vmatpush2.msra.mxu0 0.0
    %2160 = vmatprep.subr.mxu0 0.0
    %2161 = vmatpush2.msra.mxu0 0.0
    %2162 = vmatprep.mubr.f32.mxu0 0.0
    %2163 = vmatmul.mubr.f32.gmra.mxu0 %v2094
    %v2164 = vpop.f32.mrf.mxu0
    %v2165 = vadd.f32 0.0, %v2164
    %v2166 = vpop.f32.mrf.mxu0
    %2167 = vmatprep.mubr.f32.mxu0 0.0
    %2168 = vmatmul.mubr.f32.gmra.mxu0 %v2096
    %v2169 = vpop.f32.mrf.mxu0
    %v2170 = vadd.f32 0.0, %v2169
    %v2171 = vpop.f32.mrf.mxu0
    %2172 = vdwg.mxu0
    %v2173 = vadd.f32 %v1892, %v2165
    %v2174 = vadd.f32 %v1897, %v2170
    %v2175 = vxor.u32 %v2173, 2147483648
    %v2176 = vxor.u32 %v2174, 2147483648
    %v2177 = vmul.f32 %v2175, 1.442695
    %v2178 = vpow.pop %v2177
    %v2179 = vmul.f32 %v2176, 1.442695
    %v2180 = vpow.pop %v2179
    %v2181 = vadd.f32 %v2178, 1.0
    %v2182 = vadd.f32 %v2180, 1.0
    %v2183 = vrcp.pop %v2181
    %v2184 = vmul.f32 1.0, %v2183
    %v2185 = vrcp.pop %v2182
    %v2186 = vmul.f32 1.0, %v2185
    %v2187 = vtanh.pop %v2173
    %v2188 = vtanh.pop %v2174
    %v2189 = vmul.f32 %v2184, %v2074
    %v2190 = vmul.f32 %v2186, %v2075
    %2193 = vrot.lane.b32.xlu0 %v2187, 64
    %v2194 = vpop.permute.xlu0 %2193
    %2195 = vrot.lane.b32.xlu0 %v2188, 64
    %v2196 = vpop.permute.xlu0 %2195
    %v2199 = vmul.f32 %v2184, %v2194
    %v2200 = vmul.f32 %v2186, %v2196
    %2203 = vrot.lane.b32.xlu0 %v2199, 32
    %v2204 = vpop.permute.xlu0 %2203
    %2205 = vrot.lane.b32.xlu0 %v2200, 32
    %v2206 = vpop.permute.xlu0 %2205
    %v2209 = vadd.f32 %v2189, %v2204
    %v2210 = vadd.f32 %v2190, %v2206
    %v2211 = vtanh.pop %v2209
    %v2212 = vtanh.pop %v2210
    %2215 = vrot.lane.b32.xlu0 %v2211, 64
    %v2216 = vpop.permute.xlu0 %2215
    %2217 = vrot.lane.b32.xlu0 %v2212, 64
    %v2218 = vpop.permute.xlu0 %2217
    %v2221 = vmul.f32 %v2184, %v2216
    %v2222 = vmul.f32 %v2186, %v2218
    %2225 = vrot.lane.b32.xlu0 %v2221, 32
    %v2226 = vpop.permute.xlu0 %2225
    %2227 = vrot.lane.b32.xlu0 %v2222, 32
    %v2228 = vpop.permute.xlu0 %2227
    %v2229 = vsel %vm1553, %v2226, 0
    %v2231 = vsel %vm1553, %v2228, 0
    %2233 = vmatprep.subr.mxu0 0.0
    %2234 = vmatpush1.msra.mxu0 0.0
    %2235 = vmatprep.subr.mxu0 0.0
    %2236 = vmatpush1.msra.mxu0 0.0
    %2237 = vmatprep.subr.mxu0 0.0
    %2238 = vmatpush1.msra.mxu0 0.0
    %2239 = vmatprep.subr.mxu0 0.0
    %2240 = vmatpush1.msra.mxu0 0.0
    %2241 = vmatprep.subr.mxu0 0.0
    %2242 = vmatpush1.msra.mxu0 0.0
    %2243 = vmatprep.subr.mxu0 0.0
    %2244 = vmatpush1.msra.mxu0 0.0
    %2245 = vmatprep.subr.mxu0 0.0
    %2246 = vmatpush1.msra.mxu0 0.0
    %2247 = vmatprep.subr.mxu0 0.0
    %2248 = vmatpush1.msra.mxu0 0.0
    %2249 = vmatprep.subr.mxu0 0.0
    %2250 = vmatpush1.msra.mxu0 0.0
    %2251 = vmatprep.subr.mxu0 0.0
    %2252 = vmatpush1.msra.mxu0 0.0
    %2253 = vmatprep.subr.mxu0 0.0
    %2254 = vmatpush1.msra.mxu0 0.0
    %2255 = vmatprep.subr.mxu0 0.0
    %2256 = vmatpush1.msra.mxu0 0.0
    %2257 = vmatprep.subr.mxu0 0.0
    %2258 = vmatpush1.msra.mxu0 %v26
    %2259 = vmatprep.subr.mxu0 0.0
    %2260 = vmatpush1.msra.mxu0 %v25
    %2261 = vmatprep.subr.mxu0 0.0
    %2262 = vmatpush1.msra.mxu0 %v24
    %2263 = vmatprep.subr.mxu0 0.0
    %2264 = vmatpush1.msra.mxu0 %v23
    %2265 = vmatprep.subr.mxu0 0.0
    %2266 = vmatpush2.msra.mxu0 0.0
    %2267 = vmatprep.subr.mxu0 0.0
    %2268 = vmatpush2.msra.mxu0 0.0
    %2269 = vmatprep.subr.mxu0 0.0
    %2270 = vmatpush2.msra.mxu0 0.0
    %2271 = vmatprep.subr.mxu0 0.0
    %2272 = vmatpush2.msra.mxu0 0.0
    %2273 = vmatprep.subr.mxu0 0.0
    %2274 = vmatpush2.msra.mxu0 0.0
    %2275 = vmatprep.subr.mxu0 0.0
    %2276 = vmatpush2.msra.mxu0 0.0
    %2277 = vmatprep.subr.mxu0 0.0
    %2278 = vmatpush2.msra.mxu0 0.0
    %2279 = vmatprep.subr.mxu0 0.0
    %2280 = vmatpush2.msra.mxu0 0.0
    %2281 = vmatprep.subr.mxu0 0.0
    %2282 = vmatpush2.msra.mxu0 0.0
    %2283 = vmatprep.subr.mxu0 0.0
    %2284 = vmatpush2.msra.mxu0 0.0
    %2285 = vmatprep.subr.mxu0 0.0
    %2286 = vmatpush2.msra.mxu0 0.0
    %2287 = vmatprep.subr.mxu0 0.0
    %2288 = vmatpush2.msra.mxu0 0.0
    %2289 = vmatprep.subr.mxu0 0.0
    %2290 = vmatpush2.msra.mxu0 0.0
    %2291 = vmatprep.subr.mxu0 0.0
    %2292 = vmatpush2.msra.mxu0 0.0
    %2293 = vmatprep.subr.mxu0 0.0
    %2294 = vmatpush2.msra.mxu0 0.0
    %2295 = vmatprep.subr.mxu0 0.0
    %2296 = vmatpush2.msra.mxu0 0.0
    %2297 = vmatprep.mubr.f32.mxu0 0.0
    %2298 = vmatmul.mubr.f32.gmra.mxu0 %v2229
    %v2299 = vpop.f32.mrf.mxu0
    %v2300 = vadd.f32 0.0, %v2299
    %v2301 = vpop.f32.mrf.mxu0
    %2302 = vmatprep.mubr.f32.mxu0 0.0
    %2303 = vmatmul.mubr.f32.gmra.mxu0 %v2231
    %v2304 = vpop.f32.mrf.mxu0
    %v2305 = vadd.f32 0.0, %v2304
    %v2306 = vpop.f32.mrf.mxu0
    %2307 = vdwg.mxu0
    %v2308 = vadd.f32 %v1902, %v2300
    %v2309 = vadd.f32 %v1907, %v2305
    %v2310 = vxor.u32 %v2308, 2147483648
    %v2311 = vxor.u32 %v2309, 2147483648
    %v2312 = vmul.f32 %v2310, 1.442695
    %v2313 = vpow.pop %v2312
    %v2314 = vmul.f32 %v2311, 1.442695
    %v2315 = vpow.pop %v2314
    %v2316 = vadd.f32 %v2313, 1.0
    %v2317 = vadd.f32 %v2315, 1.0
    %v2318 = vrcp.pop %v2316
    %v2319 = vmul.f32 1.0, %v2318
    %v2320 = vrcp.pop %v2317
    %v2321 = vmul.f32 1.0, %v2320
    %v2322 = vtanh.pop %v2308
    %v2323 = vtanh.pop %v2309
    %v2324 = vmul.f32 %v2319, %v2209
    %v2325 = vmul.f32 %v2321, %v2210
    %2328 = vrot.lane.b32.xlu0 %v2322, 64
    %v2329 = vpop.permute.xlu0 %2328
    %2330 = vrot.lane.b32.xlu0 %v2323, 64
    %v2331 = vpop.permute.xlu0 %2330
    %v2334 = vmul.f32 %v2319, %v2329
    %v2335 = vmul.f32 %v2321, %v2331
    %2338 = vrot.lane.b32.xlu0 %v2334, 32
    %v2339 = vpop.permute.xlu0 %2338
    %2340 = vrot.lane.b32.xlu0 %v2335, 32
    %v2341 = vpop.permute.xlu0 %2340
    %v2344 = vadd.f32 %v2324, %v2339
    %v2345 = vadd.f32 %v2325, %v2341
    %v2346 = vtanh.pop %v2344
    %v2347 = vtanh.pop %v2345
    %2350 = vrot.lane.b32.xlu0 %v2346, 64
    %v2351 = vpop.permute.xlu0 %2350
    %2352 = vrot.lane.b32.xlu0 %v2347, 64
    %v2353 = vpop.permute.xlu0 %2352
    %v2356 = vmul.f32 %v2319, %v2351
    %v2357 = vmul.f32 %v2321, %v2353
    %2360 = vrot.lane.b32.xlu0 %v2356, 32
    %v2361 = vpop.permute.xlu0 %2360
    %2362 = vrot.lane.b32.xlu0 %v2357, 32
    %v2363 = vpop.permute.xlu0 %2362
    %v2364 = vsel %vm1553, %v2361, 0
    %v2366 = vsel %vm1553, %v2363, 0
    %2368 = vmatprep.subr.mxu0 0.0
    %2369 = vmatpush1.msra.mxu0 0.0
    %2370 = vmatprep.subr.mxu0 0.0
    %2371 = vmatpush1.msra.mxu0 0.0
    %2372 = vmatprep.subr.mxu0 0.0
    %2373 = vmatpush1.msra.mxu0 0.0
    %2374 = vmatprep.subr.mxu0 0.0
    %2375 = vmatpush1.msra.mxu0 0.0
    %2376 = vmatprep.subr.mxu0 0.0
    %2377 = vmatpush1.msra.mxu0 0.0
    %2378 = vmatprep.subr.mxu0 0.0
    %2379 = vmatpush1.msra.mxu0 0.0
    %2380 = vmatprep.subr.mxu0 0.0
    %2381 = vmatpush1.msra.mxu0 0.0
    %2382 = vmatprep.subr.mxu0 0.0
    %2383 = vmatpush1.msra.mxu0 0.0
    %2384 = vmatprep.subr.mxu0 0.0
    %2385 = vmatpush1.msra.mxu0 0.0
    %2386 = vmatprep.subr.mxu0 0.0
    %2387 = vmatpush1.msra.mxu0 0.0
    %2388 = vmatprep.subr.mxu0 0.0
    %2389 = vmatpush1.msra.mxu0 0.0
    %2390 = vmatprep.subr.mxu0 0.0
    %2391 = vmatpush1.msra.mxu0 0.0
    %2392 = vmatprep.subr.mxu0 0.0
    %2393 = vmatpush1.msra.mxu0 %v26
    %2394 = vmatprep.subr.mxu0 0.0
    %2395 = vmatpush1.msra.mxu0 %v25
    %2396 = vmatprep.subr.mxu0 0.0
    %2397 = vmatpush1.msra.mxu0 %v24
    %2398 = vmatprep.subr.mxu0 0.0
    %2399 = vmatpush1.msra.mxu0 %v23
    %2400 = vmatprep.subr.mxu0 0.0
    %2401 = vmatpush2.msra.mxu0 0.0
    %2402 = vmatprep.subr.mxu0 0.0
    %2403 = vmatpush2.msra.mxu0 0.0
    %2404 = vmatprep.subr.mxu0 0.0
    %2405 = vmatpush2.msra.mxu0 0.0
    %2406 = vmatprep.subr.mxu0 0.0
    %2407 = vmatpush2.msra.mxu0 0.0
    %2408 = vmatprep.subr.mxu0 0.0
    %2409 = vmatpush2.msra.mxu0 0.0
    %2410 = vmatprep.subr.mxu0 0.0
    %2411 = vmatpush2.msra.mxu0 0.0
    %2412 = vmatprep.subr.mxu0 0.0
    %2413 = vmatpush2.msra.mxu0 0.0
    %2414 = vmatprep.subr.mxu0 0.0
    %2415 = vmatpush2.msra.mxu0 0.0
    %2416 = vmatprep.subr.mxu0 0.0
    %2417 = vmatpush2.msra.mxu0 0.0
    %2418 = vmatprep.subr.mxu0 0.0
    %2419 = vmatpush2.msra.mxu0 0.0
    %2420 = vmatprep.subr.mxu0 0.0
    %2421 = vmatpush2.msra.mxu0 0.0
    %2422 = vmatprep.subr.mxu0 0.0
    %2423 = vmatpush2.msra.mxu0 0.0
    %2424 = vmatprep.subr.mxu0 0.0
    %2425 = vmatpush2.msra.mxu0 0.0
    %2426 = vmatprep.subr.mxu0 0.0
    %2427 = vmatpush2.msra.mxu0 0.0
    %2428 = vmatprep.subr.mxu0 0.0
    %2429 = vmatpush2.msra.mxu0 0.0
    %2430 = vmatprep.subr.mxu0 0.0
    %2431 = vmatpush2.msra.mxu0 0.0
    %2432 = vmatprep.mubr.f32.mxu0 0.0
    %2433 = vmatmul.mubr.f32.gmra.mxu0 %v2364
    %v2434 = vpop.f32.mrf.mxu0
    %v2435 = vadd.f32 0.0, %v2434
    %v2436 = vpop.f32.mrf.mxu0
    %2437 = vmatprep.mubr.f32.mxu0 0.0
    %2438 = vmatmul.mubr.f32.gmra.mxu0 %v2366
    %v2439 = vpop.f32.mrf.mxu0
    %v2440 = vadd.f32 0.0, %v2439
    %v2441 = vpop.f32.mrf.mxu0
    %2442 = vdwg.mxu0
    %v2443 = vadd.f32 %v1912, %v2435
    %v2444 = vadd.f32 %v1917, %v2440
    %v2445 = vxor.u32 %v2443, 2147483648
    %v2446 = vxor.u32 %v2444, 2147483648
    %v2447 = vmul.f32 %v2445, 1.442695
    %v2448 = vpow.pop %v2447
    %v2449 = vmul.f32 %v2446, 1.442695
    %v2450 = vpow.pop %v2449
    %v2451 = vadd.f32 %v2448, 1.0
    %v2452 = vadd.f32 %v2450, 1.0
    %v2453 = vrcp.pop %v2451
    %v2454 = vmul.f32 1.0, %v2453
    %v2455 = vrcp.pop %v2452
    %v2456 = vmul.f32 1.0, %v2455
    %v2457 = vtanh.pop %v2443
    %v2458 = vtanh.pop %v2444
    %v2459 = vmul.f32 %v2454, %v2344
    %v2460 = vmul.f32 %v2456, %v2345
    %2463 = vrot.lane.b32.xlu0 %v2457, 64
    %v2464 = vpop.permute.xlu0 %2463
    %2465 = vrot.lane.b32.xlu0 %v2458, 64
    %v2466 = vpop.permute.xlu0 %2465
    %v2469 = vmul.f32 %v2454, %v2464
    %v2470 = vmul.f32 %v2456, %v2466
    %2473 = vrot.lane.b32.xlu0 %v2469, 32
    %v2474 = vpop.permute.xlu0 %2473
    %2475 = vrot.lane.b32.xlu0 %v2470, 32
    %v2476 = vpop.permute.xlu0 %2475
    %v2479 = vadd.f32 %v2459, %v2474
    %v2480 = vadd.f32 %v2460, %v2476
    %v2481 = vtanh.pop %v2479
    %v2482 = vtanh.pop %v2480
    %2485 = vrot.lane.b32.xlu0 %v2481, 64
    %v2486 = vpop.permute.xlu0 %2485
    %2487 = vrot.lane.b32.xlu0 %v2482, 64
    %v2488 = vpop.permute.xlu0 %2487
    %v2491 = vmul.f32 %v2454, %v2486
    %v2492 = vmul.f32 %v2456, %v2488
    %2495 = vrot.lane.b32.xlu0 %v2491, 32
    %v2496 = vpop.permute.xlu0 %2495
    %2497 = vrot.lane.b32.xlu0 %v2492, 32
    %v2498 = vpop.permute.xlu0 %2497
    %v2499 = vsel %vm1553, %v2496, 0
    %v2501 = vsel %vm1553, %v2498, 0
    %2503 = vmatprep.subr.mxu0 0.0
    %2504 = vmatpush1.msra.mxu0 0.0
    %2505 = vmatprep.subr.mxu0 0.0
    %2506 = vmatpush1.msra.mxu0 0.0
    %2507 = vmatprep.subr.mxu0 0.0
    %2508 = vmatpush1.msra.mxu0 0.0
    %2509 = vmatprep.subr.mxu0 0.0
    %2510 = vmatpush1.msra.mxu0 0.0
    %2511 = vmatprep.subr.mxu0 0.0
    %2512 = vmatpush1.msra.mxu0 0.0
    %2513 = vmatprep.subr.mxu0 0.0
    %2514 = vmatpush1.msra.mxu0 0.0
    %2515 = vmatprep.subr.mxu0 0.0
    %2516 = vmatpush1.msra.mxu0 0.0
    %2517 = vmatprep.subr.mxu0 0.0
    %2518 = vmatpush1.msra.mxu0 0.0
    %2519 = vmatprep.subr.mxu0 0.0
    %2520 = vmatpush1.msra.mxu0 0.0
    %2521 = vmatprep.subr.mxu0 0.0
    %2522 = vmatpush1.msra.mxu0 0.0
    %2523 = vmatprep.subr.mxu0 0.0
    %2524 = vmatpush1.msra.mxu0 0.0
    %2525 = vmatprep.subr.mxu0 0.0
    %2526 = vmatpush1.msra.mxu0 0.0
    %2527 = vmatprep.subr.mxu0 0.0
    %2528 = vmatpush1.msra.mxu0 %v26
    %2529 = vmatprep.subr.mxu0 0.0
    %2530 = vmatpush1.msra.mxu0 %v25
    %2531 = vmatprep.subr.mxu0 0.0
    %2532 = vmatpush1.msra.mxu0 %v24
    %2533 = vmatprep.subr.mxu0 0.0
    %2534 = vmatpush1.msra.mxu0 %v23
    %2535 = vmatprep.subr.mxu0 0.0
    %2536 = vmatpush2.msra.mxu0 0.0
    %2537 = vmatprep.subr.mxu0 0.0
    %2538 = vmatpush2.msra.mxu0 0.0
    %2539 = vmatprep.subr.mxu0 0.0
    %2540 = vmatpush2.msra.mxu0 0.0
    %2541 = vmatprep.subr.mxu0 0.0
    %2542 = vmatpush2.msra.mxu0 0.0
    %2543 = vmatprep.subr.mxu0 0.0
    %2544 = vmatpush2.msra.mxu0 0.0
    %2545 = vmatprep.subr.mxu0 0.0
    %2546 = vmatpush2.msra.mxu0 0.0
    %2547 = vmatprep.subr.mxu0 0.0
    %2548 = vmatpush2.msra.mxu0 0.0
    %2549 = vmatprep.subr.mxu0 0.0
    %2550 = vmatpush2.msra.mxu0 0.0
    %2551 = vmatprep.subr.mxu0 0.0
    %2552 = vmatpush2.msra.mxu0 0.0
    %2553 = vmatprep.subr.mxu0 0.0
    %2554 = vmatpush2.msra.mxu0 0.0
    %2555 = vmatprep.subr.mxu0 0.0
    %2556 = vmatpush2.msra.mxu0 0.0
    %2557 = vmatprep.subr.mxu0 0.0
    %2558 = vmatpush2.msra.mxu0 0.0
    %2559 = vmatprep.subr.mxu0 0.0
    %2560 = vmatpush2.msra.mxu0 0.0
    %2561 = vmatprep.subr.mxu0 0.0
    %2562 = vmatpush2.msra.mxu0 0.0
    %2563 = vmatprep.subr.mxu0 0.0
    %2564 = vmatpush2.msra.mxu0 0.0
    %2565 = vmatprep.subr.mxu0 0.0
    %2566 = vmatpush2.msra.mxu0 0.0
    %2567 = vmatprep.mubr.f32.mxu0 0.0
    %2568 = vmatmul.mubr.f32.gmra.mxu0 %v2499
    %v2569 = vpop.f32.mrf.mxu0
    %v2570 = vadd.f32 0.0, %v2569
    %v2571 = vpop.f32.mrf.mxu0
    %2572 = vmatprep.mubr.f32.mxu0 0.0
    %2573 = vmatmul.mubr.f32.gmra.mxu0 %v2501
    %v2574 = vpop.f32.mrf.mxu0
    %v2575 = vadd.f32 0.0, %v2574
    %v2576 = vpop.f32.mrf.mxu0
    %2577 = vdwg.mxu0
    %v2578 = vadd.f32 %v1922, %v2570
    %v2579 = vadd.f32 %v1927, %v2575
    %v2580 = vxor.u32 %v2578, 2147483648
    %v2581 = vxor.u32 %v2579, 2147483648
    %v2582 = vmul.f32 %v2580, 1.442695
    %v2583 = vpow.pop %v2582
    %v2584 = vmul.f32 %v2581, 1.442695
    %v2585 = vpow.pop %v2584
    %v2586 = vadd.f32 %v2583, 1.0
    %v2587 = vadd.f32 %v2585, 1.0
    %v2588 = vrcp.pop %v2586
    %v2589 = vmul.f32 1.0, %v2588
    %v2590 = vrcp.pop %v2587
    %v2591 = vmul.f32 1.0, %v2590
    %v2592 = vtanh.pop %v2578
    %v2593 = vtanh.pop %v2579
    %v2594 = vmul.f32 %v2589, %v2479
    %v2595 = vmul.f32 %v2591, %v2480
    %2598 = vrot.lane.b32.xlu0 %v2592, 64
    %v2599 = vpop.permute.xlu0 %2598
    %2600 = vrot.lane.b32.xlu0 %v2593, 64
    %v2601 = vpop.permute.xlu0 %2600
    %v2604 = vmul.f32 %v2589, %v2599
    %v2605 = vmul.f32 %v2591, %v2601
    %2608 = vrot.lane.b32.xlu0 %v2604, 32
    %v2609 = vpop.permute.xlu0 %2608
    %2610 = vrot.lane.b32.xlu0 %v2605, 32
    %v2611 = vpop.permute.xlu0 %2610
    %v2614 = vadd.f32 %v2594, %v2609
    %v2615 = vadd.f32 %v2595, %v2611
    %v2616 = vtanh.pop %v2614
    %v2617 = vtanh.pop %v2615
    %2620 = vrot.lane.b32.xlu0 %v2616, 64
    %v2621 = vpop.permute.xlu0 %2620
    %2622 = vrot.lane.b32.xlu0 %v2617, 64
    %v2623 = vpop.permute.xlu0 %2622
    %v2626 = vmul.f32 %v2589, %v2621
    %v2627 = vmul.f32 %v2591, %v2623
    %2630 = vrot.lane.b32.xlu0 %v2626, 32
    %v2631 = vpop.permute.xlu0 %2630
    %2632 = vrot.lane.b32.xlu0 %v2627, 32
    %v2633 = vpop.permute.xlu0 %2632
    %v2634 = vsel %vm1553, %v2631, 0
    %v2636 = vsel %vm1553, %v2633, 0
    %2638 = vmatprep.subr.mxu0 0.0
    %2639 = vmatpush1.msra.mxu0 0.0
    %2640 = vmatprep.subr.mxu0 0.0
    %2641 = vmatpush1.msra.mxu0 0.0
    %2642 = vmatprep.subr.mxu0 0.0
    %2643 = vmatpush1.msra.mxu0 0.0
    %2644 = vmatprep.subr.mxu0 0.0
    %2645 = vmatpush1.msra.mxu0 0.0
    %2646 = vmatprep.subr.mxu0 0.0
    %2647 = vmatpush1.msra.mxu0 0.0
    %2648 = vmatprep.subr.mxu0 0.0
    %2649 = vmatpush1.msra.mxu0 0.0
    %2650 = vmatprep.subr.mxu0 0.0
    %2651 = vmatpush1.msra.mxu0 0.0
    %2652 = vmatprep.subr.mxu0 0.0
    %2653 = vmatpush1.msra.mxu0 0.0
    %2654 = vmatprep.subr.mxu0 0.0
    %2655 = vmatpush1.msra.mxu0 0.0
    %2656 = vmatprep.subr.mxu0 0.0
    %2657 = vmatpush1.msra.mxu0 0.0
    %2658 = vmatprep.subr.mxu0 0.0
    %2659 = vmatpush1.msra.mxu0 0.0
    %2660 = vmatprep.subr.mxu0 0.0
    %2661 = vmatpush1.msra.mxu0 0.0
    %2662 = vmatprep.subr.mxu0 0.0
    %2663 = vmatpush1.msra.mxu0 %v26
    %2664 = vmatprep.subr.mxu0 0.0
    %2665 = vmatpush1.msra.mxu0 %v25
    %2666 = vmatprep.subr.mxu0 0.0
    %2667 = vmatpush1.msra.mxu0 %v24
    %2668 = vmatprep.subr.mxu0 0.0
    %2669 = vmatpush1.msra.mxu0 %v23
    %2670 = vmatprep.subr.mxu0 0.0
    %2671 = vmatpush2.msra.mxu0 0.0
    %2672 = vmatprep.subr.mxu0 0.0
    %2673 = vmatpush2.msra.mxu0 0.0
    %2674 = vmatprep.subr.mxu0 0.0
    %2675 = vmatpush2.msra.mxu0 0.0
    %2676 = vmatprep.subr.mxu0 0.0
    %2677 = vmatpush2.msra.mxu0 0.0
    %2678 = vmatprep.subr.mxu0 0.0
    %2679 = vmatpush2.msra.mxu0 0.0
    %2680 = vmatprep.subr.mxu0 0.0
    %2681 = vmatpush2.msra.mxu0 0.0
    %2682 = vmatprep.subr.mxu0 0.0
    %2683 = vmatpush2.msra.mxu0 0.0
    %2684 = vmatprep.subr.mxu0 0.0
    %2685 = vmatpush2.msra.mxu0 0.0
    %2686 = vmatprep.subr.mxu0 0.0
    %2687 = vmatpush2.msra.mxu0 0.0
    %2688 = vmatprep.subr.mxu0 0.0
    %2689 = vmatpush2.msra.mxu0 0.0
    %2690 = vmatprep.subr.mxu0 0.0
    %2691 = vmatpush2.msra.mxu0 0.0
    %2692 = vmatprep.subr.mxu0 0.0
    %2693 = vmatpush2.msra.mxu0 0.0
    %2694 = vmatprep.subr.mxu0 0.0
    %2695 = vmatpush2.msra.mxu0 0.0
    %2696 = vmatprep.subr.mxu0 0.0
    %2697 = vmatpush2.msra.mxu0 0.0
    %2698 = vmatprep.subr.mxu0 0.0
    %2699 = vmatpush2.msra.mxu0 0.0
    %2700 = vmatprep.subr.mxu0 0.0
    %2701 = vmatpush2.msra.mxu0 0.0
    %2702 = vmatprep.mubr.f32.mxu0 0.0
    %2703 = vmatmul.mubr.f32.gmra.mxu0 %v2634
    %v2704 = vpop.f32.mrf.mxu0
    %v2705 = vadd.f32 0.0, %v2704
    %v2706 = vpop.f32.mrf.mxu0
    %2707 = vmatprep.mubr.f32.mxu0 0.0
    %2708 = vmatmul.mubr.f32.gmra.mxu0 %v2636
    %v2709 = vpop.f32.mrf.mxu0
    %v2710 = vadd.f32 0.0, %v2709
    %v2711 = vpop.f32.mrf.mxu0
    %2712 = vdwg.mxu0
    %v2713 = vadd.f32 %v1932, %v2705
    %v2714 = vadd.f32 %v1937, %v2710
    %v2715 = vxor.u32 %v2713, 2147483648
    %v2716 = vxor.u32 %v2714, 2147483648
    %v2717 = vmul.f32 %v2715, 1.442695
    %v2718 = vpow.pop %v2717
    %v2719 = vmul.f32 %v2716, 1.442695
    %v2720 = vpow.pop %v2719
    %v2721 = vadd.f32 %v2718, 1.0
    %v2722 = vadd.f32 %v2720, 1.0
    %v2723 = vrcp.pop %v2721
    %v2724 = vmul.f32 1.0, %v2723
    %v2725 = vrcp.pop %v2722
    %v2726 = vmul.f32 1.0, %v2725
    %v2727 = vtanh.pop %v2713
    %v2728 = vtanh.pop %v2714
    %v2729 = vmul.f32 %v2724, %v2614
    %v2730 = vmul.f32 %v2726, %v2615
    %2733 = vrot.lane.b32.xlu0 %v2727, 64
    %v2734 = vpop.permute.xlu0 %2733
    %2735 = vrot.lane.b32.xlu0 %v2728, 64
    %v2736 = vpop.permute.xlu0 %2735
    %v2739 = vmul.f32 %v2724, %v2734
    %v2740 = vmul.f32 %v2726, %v2736
    %2743 = vrot.lane.b32.xlu0 %v2739, 32
    %v2744 = vpop.permute.xlu0 %2743
    %2745 = vrot.lane.b32.xlu0 %v2740, 32
    %v2746 = vpop.permute.xlu0 %2745
    %v2749 = vadd.f32 %v2729, %v2744
    %v2750 = vadd.f32 %v2730, %v2746
    %v2751 = vtanh.pop %v2749
    %v2752 = vtanh.pop %v2750
    %2755 = vrot.lane.b32.xlu0 %v2751, 64
    %v2756 = vpop.permute.xlu0 %2755
    %2757 = vrot.lane.b32.xlu0 %v2752, 64
    %v2758 = vpop.permute.xlu0 %2757
    %v2761 = vmul.f32 %v2724, %v2756
    %v2762 = vmul.f32 %v2726, %v2758
    %2765 = vrot.lane.b32.xlu0 %v2761, 32
    %v2766 = vpop.permute.xlu0 %2765
    %2767 = vrot.lane.b32.xlu0 %v2762, 32
    %v2768 = vpop.permute.xlu0 %2767
    %v2769 = vsel %vm1553, %v2766, 0
    %v2771 = vsel %vm1553, %v2768, 0
    %2773 = vmatprep.subr.mxu0 0.0
    %2774 = vmatpush1.msra.mxu0 0.0
    %2775 = vmatprep.subr.mxu0 0.0
    %2776 = vmatpush1.msra.mxu0 0.0
    %2777 = vmatprep.subr.mxu0 0.0
    %2778 = vmatpush1.msra.mxu0 0.0
    %2779 = vmatprep.subr.mxu0 0.0
    %2780 = vmatpush1.msra.mxu0 0.0
    %2781 = vmatprep.subr.mxu0 0.0
    %2782 = vmatpush1.msra.mxu0 0.0
    %2783 = vmatprep.subr.mxu0 0.0
    %2784 = vmatpush1.msra.mxu0 0.0
    %2785 = vmatprep.subr.mxu0 0.0
    %2786 = vmatpush1.msra.mxu0 0.0
    %2787 = vmatprep.subr.mxu0 0.0
    %2788 = vmatpush1.msra.mxu0 0.0
    %2789 = vmatprep.subr.mxu0 0.0
    %2790 = vmatpush1.msra.mxu0 0.0
    %2791 = vmatprep.subr.mxu0 0.0
    %2792 = vmatpush1.msra.mxu0 0.0
    %2793 = vmatprep.subr.mxu0 0.0
    %2794 = vmatpush1.msra.mxu0 0.0
    %2795 = vmatprep.subr.mxu0 0.0
    %2796 = vmatpush1.msra.mxu0 0.0
    %2797 = vmatprep.subr.mxu0 0.0
    %2798 = vmatpush1.msra.mxu0 %v26
    %2799 = vmatprep.subr.mxu0 0.0
    %2800 = vmatpush1.msra.mxu0 %v25
    %2801 = vmatprep.subr.mxu0 0.0
    %2802 = vmatpush1.msra.mxu0 %v24
    %2803 = vmatprep.subr.mxu0 0.0
    %2804 = vmatpush1.msra.mxu0 %v23
    %2805 = vmatprep.subr.mxu0 0.0
    %2806 = vmatpush2.msra.mxu0 0.0
    %2807 = vmatprep.subr.mxu0 0.0
    %2808 = vmatpush2.msra.mxu0 0.0
    %2809 = vmatprep.subr.mxu0 0.0
    %2810 = vmatpush2.msra.mxu0 0.0
    %2811 = vmatprep.subr.mxu0 0.0
    %2812 = vmatpush2.msra.mxu0 0.0
    %2813 = vmatprep.subr.mxu0 0.0
    %2814 = vmatpush2.msra.mxu0 0.0
    %2815 = vmatprep.subr.mxu0 0.0
    %2816 = vmatpush2.msra.mxu0 0.0
    %2817 = vmatprep.subr.mxu0 0.0
    %2818 = vmatpush2.msra.mxu0 0.0
    %2819 = vmatprep.subr.mxu0 0.0
    %2820 = vmatpush2.msra.mxu0 0.0
    %2821 = vmatprep.subr.mxu0 0.0
    %2822 = vmatpush2.msra.mxu0 0.0
    %2823 = vmatprep.subr.mxu0 0.0
    %2824 = vmatpush2.msra.mxu0 0.0
    %2825 = vmatprep.subr.mxu0 0.0
    %2826 = vmatpush2.msra.mxu0 0.0
    %2827 = vmatprep.subr.mxu0 0.0
    %2828 = vmatpush2.msra.mxu0 0.0
    %2829 = vmatprep.subr.mxu0 0.0
    %2830 = vmatpush2.msra.mxu0 0.0
    %2831 = vmatprep.subr.mxu0 0.0
    %2832 = vmatpush2.msra.mxu0 0.0
    %2833 = vmatprep.subr.mxu0 0.0
    %2834 = vmatpush2.msra.mxu0 0.0
    %2835 = vmatprep.subr.mxu0 0.0
    %2836 = vmatpush2.msra.mxu0 0.0
    %2837 = vmatprep.mubr.f32.mxu0 0.0
    %2838 = vmatmul.mubr.f32.gmra.mxu0 %v2769
    %v2839 = vpop.f32.mrf.mxu0
    %v2840 = vadd.f32 0.0, %v2839
    %v2841 = vpop.f32.mrf.mxu0
    %2842 = vmatprep.mubr.f32.mxu0 0.0
    %2843 = vmatmul.mubr.f32.gmra.mxu0 %v2771
    %v2844 = vpop.f32.mrf.mxu0
    %v2845 = vadd.f32 0.0, %v2844
    %v2846 = vpop.f32.mrf.mxu0
    %2847 = vdwg.mxu0
    %v2848 = vadd.f32 %v1942, %v2840
    %v2849 = vadd.f32 %v1947, %v2845
    %v2850 = vxor.u32 %v2848, 2147483648
    %v2851 = vxor.u32 %v2849, 2147483648
    %v2852 = vmul.f32 %v2850, 1.442695
    %v2853 = vpow.pop %v2852
    %v2854 = vmul.f32 %v2851, 1.442695
    %v2855 = vpow.pop %v2854
    %v2856 = vadd.f32 %v2853, 1.0
    %v2857 = vadd.f32 %v2855, 1.0
    %v2858 = vrcp.pop %v2856
    %v2859 = vmul.f32 1.0, %v2858
    %v2860 = vrcp.pop %v2857
    %v2861 = vmul.f32 1.0, %v2860
    %v2862 = vtanh.pop %v2848
    %v2863 = vtanh.pop %v2849
    %v2864 = vmul.f32 %v2859, %v2749
    %v2865 = vmul.f32 %v2861, %v2750
    %2868 = vrot.lane.b32.xlu0 %v2862, 64
    %v2869 = vpop.permute.xlu0 %2868
    %2870 = vrot.lane.b32.xlu0 %v2863, 64
    %v2871 = vpop.permute.xlu0 %2870
    %v2874 = vmul.f32 %v2859, %v2869
    %v2875 = vmul.f32 %v2861, %v2871
    %2878 = vrot.lane.b32.xlu0 %v2874, 32
    %v2879 = vpop.permute.xlu0 %2878
    %2880 = vrot.lane.b32.xlu0 %v2875, 32
    %v2881 = vpop.permute.xlu0 %2880
    %v2884 = vadd.f32 %v2864, %v2879
    %v2885 = vadd.f32 %v2865, %v2881
    %v2886 = vtanh.pop %v2884
    %v2887 = vtanh.pop %v2885
    %2890 = vrot.lane.b32.xlu0 %v2886, 64
    %v2891 = vpop.permute.xlu0 %2890
    %2892 = vrot.lane.b32.xlu0 %v2887, 64
    %v2893 = vpop.permute.xlu0 %2892
    %v2896 = vmul.f32 %v2859, %v2891
    %v2897 = vmul.f32 %v2861, %v2893
    %2900 = vrot.lane.b32.xlu0 %v2896, 32
    %v2901 = vpop.permute.xlu0 %2900
    %2902 = vrot.lane.b32.xlu0 %v2897, 32
    %v2903 = vpop.permute.xlu0 %2902
    %v2904 = vsel %vm1553, %v2901, 0
    %v2906 = vsel %vm1553, %v2903, 0
    %2908 = vmatprep.subr.mxu0 0.0
    %2909 = vmatpush1.msra.mxu0 0.0
    %2910 = vmatprep.subr.mxu0 0.0
    %2911 = vmatpush1.msra.mxu0 0.0
    %2912 = vmatprep.subr.mxu0 0.0
    %2913 = vmatpush1.msra.mxu0 0.0
    %2914 = vmatprep.subr.mxu0 0.0
    %2915 = vmatpush1.msra.mxu0 0.0
    %2916 = vmatprep.subr.mxu0 0.0
    %2917 = vmatpush1.msra.mxu0 0.0
    %2918 = vmatprep.subr.mxu0 0.0
    %2919 = vmatpush1.msra.mxu0 0.0
    %2920 = vmatprep.subr.mxu0 0.0
    %2921 = vmatpush1.msra.mxu0 0.0
    %2922 = vmatprep.subr.mxu0 0.0
    %2923 = vmatpush1.msra.mxu0 0.0
    %2924 = vmatprep.subr.mxu0 0.0
    %2925 = vmatpush1.msra.mxu0 0.0
    %2926 = vmatprep.subr.mxu0 0.0
    %2927 = vmatpush1.msra.mxu0 0.0
    %2928 = vmatprep.subr.mxu0 0.0
    %2929 = vmatpush1.msra.mxu0 0.0
    %2930 = vmatprep.subr.mxu0 0.0
    %2931 = vmatpush1.msra.mxu0 0.0
    %2932 = vmatprep.subr.mxu0 0.0
    %2933 = vmatpush1.msra.mxu0 %v26
    %2934 = vmatprep.subr.mxu0 0.0
    %2935 = vmatpush1.msra.mxu0 %v25
    %2936 = vmatprep.subr.mxu0 0.0
    %2937 = vmatpush1.msra.mxu0 %v24
    %2938 = vmatprep.subr.mxu0 0.0
    %2939 = vmatpush1.msra.mxu0 %v23
    %2940 = vmatprep.subr.mxu0 0.0
    %2941 = vmatpush2.msra.mxu0 0.0
    %2942 = vmatprep.subr.mxu0 0.0
    %2943 = vmatpush2.msra.mxu0 0.0
    %2944 = vmatprep.subr.mxu0 0.0
    %2945 = vmatpush2.msra.mxu0 0.0
    %2946 = vmatprep.subr.mxu0 0.0
    %2947 = vmatpush2.msra.mxu0 0.0
    %2948 = vmatprep.subr.mxu0 0.0
    %2949 = vmatpush2.msra.mxu0 0.0
    %2950 = vmatprep.subr.mxu0 0.0
    %2951 = vmatpush2.msra.mxu0 0.0
    %2952 = vmatprep.subr.mxu0 0.0
    %2953 = vmatpush2.msra.mxu0 0.0
    %2954 = vmatprep.subr.mxu0 0.0
    %2955 = vmatpush2.msra.mxu0 0.0
    %2956 = vmatprep.subr.mxu0 0.0
    %2957 = vmatpush2.msra.mxu0 0.0
    %2958 = vmatprep.subr.mxu0 0.0
    %2959 = vmatpush2.msra.mxu0 0.0
    %2960 = vmatprep.subr.mxu0 0.0
    %2961 = vmatpush2.msra.mxu0 0.0
    %2962 = vmatprep.subr.mxu0 0.0
    %2963 = vmatpush2.msra.mxu0 0.0
    %2964 = vmatprep.subr.mxu0 0.0
    %2965 = vmatpush2.msra.mxu0 0.0
    %2966 = vmatprep.subr.mxu0 0.0
    %2967 = vmatpush2.msra.mxu0 0.0
    %2968 = vmatprep.subr.mxu0 0.0
    %2969 = vmatpush2.msra.mxu0 0.0
    %2970 = vmatprep.subr.mxu0 0.0
    %2971 = vmatpush2.msra.mxu0 0.0
    %2972 = vmatprep.mubr.f32.mxu0 0.0
    %2973 = vmatmul.mubr.f32.gmra.mxu0 %v2904
    %v2974 = vpop.f32.mrf.mxu0
    %v2975 = vadd.f32 0.0, %v2974
    %v2976 = vpop.f32.mrf.mxu0
    %2977 = vmatprep.mubr.f32.mxu0 0.0
    %2978 = vmatmul.mubr.f32.gmra.mxu0 %v2906
    %v2979 = vpop.f32.mrf.mxu0
    %v2980 = vadd.f32 0.0, %v2979
    %v2981 = vpop.f32.mrf.mxu0
    %2982 = vdwg.mxu0
    %v2983 = vadd.f32 %v1952, %v2975
    %v2984 = vadd.f32 %v1957, %v2980
    %v2985 = vxor.u32 %v2983, 2147483648
    %v2986 = vxor.u32 %v2984, 2147483648
    %v2987 = vmul.f32 %v2985, 1.442695
    %v2988 = vpow.pop %v2987
    %v2989 = vmul.f32 %v2986, 1.442695
    %v2990 = vpow.pop %v2989
    %v2991 = vadd.f32 %v2988, 1.0
    %v2992 = vadd.f32 %v2990, 1.0
    %v2993 = vrcp.pop %v2991
    %v2994 = vmul.f32 1.0, %v2993
    %v2995 = vrcp.pop %v2992
    %v2996 = vmul.f32 1.0, %v2995
    %v2997 = vtanh.pop %v2983
    %v2998 = vtanh.pop %v2984
    %v2999 = vmul.f32 %v2994, %v2884
    %v3000 = vmul.f32 %v2996, %v2885
    %3003 = vrot.lane.b32.xlu0 %v2997, 64
    %v3004 = vpop.permute.xlu0 %3003
    %3005 = vrot.lane.b32.xlu0 %v2998, 64
    %v3006 = vpop.permute.xlu0 %3005
    %v3009 = vmul.f32 %v2994, %v3004
    %v3010 = vmul.f32 %v2996, %v3006
    %3013 = vrot.lane.b32.xlu0 %v3009, 32
    %v3014 = vpop.permute.xlu0 %3013
    %3015 = vrot.lane.b32.xlu0 %v3010, 32
    %v3016 = vpop.permute.xlu0 %3015
    %v3019 = vadd.f32 %v2999, %v3014
    %v3020 = vadd.f32 %v3000, %v3016
    %v3021 = vtanh.pop %v3019
    %v3022 = vtanh.pop %v3020
    %3025 = vrot.lane.b32.xlu0 %v3021, 64
    %v3026 = vpop.permute.xlu0 %3025
    %3027 = vrot.lane.b32.xlu0 %v3022, 64
    %v3028 = vpop.permute.xlu0 %3027
    %v3031 = vmul.f32 %v2994, %v3026
    %v3032 = vmul.f32 %v2996, %v3028
    %3035 = vrot.lane.b32.xlu0 %v3031, 32
    %v3036 = vpop.permute.xlu0 %3035
    %3037 = vrot.lane.b32.xlu0 %v3032, 32
    %v3038 = vpop.permute.xlu0 %3037
    %3041 = vst.msk [vmem:[#allocation2] sm:$0xff] %vm1553, %v3036
    %3042 = vst.msk [vmem:[#allocation2 + $0x8] sm:$0xff] %vm1553, %v3038
    %3045 = vrot.lane.b32.xlu0 %v3019, 96
    %v3046 = vpop.permute.xlu0 %3045
    %3047 = vrot.lane.b32.xlu0 %v3020, 96
    %v3048 = vpop.permute.xlu0 %3047
    %3051 = vst.msk [vmem:[#allocation4] sm:$0xff] %vm1553, %v3046
    %3052 = vst.msk [vmem:[#allocation4 + $0x8] sm:$0xff] %vm1553, %v3048
    %v3053 = vlaneseq
    %v3054 = vshrl.u32 %v3053, 7
    %v3055 = vsub.s32 0, %v3054
    %v3056 = vrot.slane %v39, %v3055
    %v3057 = vsel %vm1553, %v3036, 0
    %v3059 = vsel %vm1553, %v3038, 0
    %3061 = vmatprep.subr.mxu0 0.0
    %3062 = vmatpush1.msra.mxu0 0.0
    %3063 = vmatprep.subr.mxu0 0.0
    %3064 = vmatpush1.msra.mxu0 0.0
    %3065 = vmatprep.subr.mxu0 0.0
    %3066 = vmatpush1.msra.mxu0 0.0
    %3067 = vmatprep.subr.mxu0 0.0
    %3068 = vmatpush1.msra.mxu0 0.0
    %3069 = vmatprep.subr.mxu0 0.0
    %3070 = vmatpush1.msra.mxu0 0.0
    %3071 = vmatprep.subr.mxu0 0.0
    %3072 = vmatpush1.msra.mxu0 0.0
    %3073 = vmatprep.subr.mxu0 0.0
    %3074 = vmatpush1.msra.mxu0 0.0
    %3075 = vmatprep.subr.mxu0 0.0
    %3076 = vmatpush1.msra.mxu0 0.0
    %3077 = vmatprep.subr.mxu0 0.0
    %3078 = vmatpush1.msra.mxu0 0.0
    %3079 = vmatprep.subr.mxu0 0.0
    %3080 = vmatpush1.msra.mxu0 0.0
    %3081 = vmatprep.subr.mxu0 0.0
    %3082 = vmatpush1.msra.mxu0 0.0
    %3083 = vmatprep.subr.mxu0 0.0
    %3084 = vmatpush1.msra.mxu0 0.0
    %3085 = vmatprep.subr.mxu0 0.0
    %3086 = vmatpush1.msra.mxu0 %v38
    %3087 = vmatprep.subr.mxu0 0.0
    %3088 = vmatpush1.msra.mxu0 %v37
    %3089 = vmatprep.subr.mxu0 0.0
    %3090 = vmatpush1.msra.mxu0 %v36
    %3091 = vmatprep.subr.mxu0 0.0
    %3092 = vmatpush1.msra.mxu0 %v35
    %3093 = vmatprep.subr.mxu0 0.0
    %3094 = vmatpush2.msra.mxu0 0.0
    %3095 = vmatprep.subr.mxu0 0.0
    %3096 = vmatpush2.msra.mxu0 0.0
    %3097 = vmatprep.subr.mxu0 0.0
    %3098 = vmatpush2.msra.mxu0 0.0
    %3099 = vmatprep.subr.mxu0 0.0
    %3100 = vmatpush2.msra.mxu0 0.0
    %3101 = vmatprep.subr.mxu0 0.0
    %3102 = vmatpush2.msra.mxu0 0.0
    %3103 = vmatprep.subr.mxu0 0.0
    %3104 = vmatpush2.msra.mxu0 0.0
    %3105 = vmatprep.subr.mxu0 0.0
    %3106 = vmatpush2.msra.mxu0 0.0
    %3107 = vmatprep.subr.mxu0 0.0
    %3108 = vmatpush2.msra.mxu0 0.0
    %3109 = vmatprep.subr.mxu0 0.0
    %3110 = vmatpush2.msra.mxu0 0.0
    %3111 = vmatprep.subr.mxu0 0.0
    %3112 = vmatpush2.msra.mxu0 0.0
    %3113 = vmatprep.subr.mxu0 0.0
    %3114 = vmatpush2.msra.mxu0 0.0
    %3115 = vmatprep.subr.mxu0 0.0
    %3116 = vmatpush2.msra.mxu0 0.0
    %3117 = vmatprep.subr.mxu0 0.0
    %3118 = vmatpush2.msra.mxu0 0.0
    %3119 = vmatprep.subr.mxu0 0.0
    %3120 = vmatpush2.msra.mxu0 0.0
    %3121 = vmatprep.subr.mxu0 0.0
    %3122 = vmatpush2.msra.mxu0 0.0
    %3123 = vmatprep.subr.mxu0 0.0
    %3124 = vmatpush2.msra.mxu0 0.0
    %3125 = vmatprep.mubr.f32.mxu0 0.0
    %3126 = vmatmul.mubr.f32.gmra.mxu0 %v3057
    %v3127 = vpop.f32.mrf.mxu0
    %v3128 = vadd.f32 %v3056, %v3127
    %v3129 = vpop.f32.mrf.mxu0
    %3130 = vmatprep.mubr.f32.mxu0 0.0
    %3131 = vmatmul.mubr.f32.gmra.mxu0 %v3059
    %v3132 = vpop.f32.mrf.mxu0
    %v3133 = vadd.f32 %v3056, %v3132
    %v3134 = vpop.f32.mrf.mxu0
    %3135 = vdwg.mxu0
    %3136 = vst.msk [vmem:[%s3] sm:$0xff] %vm739, %v3128
    %3137 = vst.msk [vmem:[%s3 + $0x8] sm:$0xff] %vm739, %v3133
    // Predicated region
    $region14: #{temporal_gcn_forward.1} parent=1 // pred_check
      _
    $region15: #{temporal_gcn_forward.1} parent=1 // pred_check_branch
      %3139 = sbr.rel (0) target = $region17
    $region16: #{temporal_gcn_forward.1} parent=1 // pred_region
      _
    $region17: #{temporal_gcn_forward.1} parent=1 // pred_fallthru
      _
    // Predicated region
    $region18: #{temporal_gcn_forward.1} parent=1 // pred_check
      _
    $region19: #{temporal_gcn_forward.1} parent=1 // pred_check_branch
      %3141 = sbr.rel (0) target = $region21
    $region20: #{temporal_gcn_forward.1} parent=1 // pred_region
      %s3143 = ssub.s32 256, 256
      %3144 = vsyncadd [#allocation3], %s3143
      %s3145 = sshll.u32 [#allocation2], 4
      %s3146 = int_to_ptr.vmem [resolvable:$true] %s3145
      %3151 = dma.vmem_to_hbm [thread:$0]  %s3146, 256, %s4, [#allocation3], 128, 128, 8
    $region21: #{temporal_gcn_forward.1} parent=1 // pred_fallthru
      _
    // Predicated region
    $region22: #{temporal_gcn_forward.1} parent=1 // pred_check
      _
    $region23: #{temporal_gcn_forward.1} parent=1 // pred_check_branch
      %3153 = sbr.rel (0) target = $region25
    $region24: #{temporal_gcn_forward.1} parent=1 // pred_region
      %s3155 = ssub.s32 256, 256
      %3156 = vsyncadd [#allocation5], %s3155
      %s3157 = sshll.u32 [#allocation4], 4
      %s3158 = int_to_ptr.vmem [resolvable:$true] %s3157
      %3163 = dma.vmem_to_hbm [thread:$0]  %s3158, 256, %s5, [#allocation5], 128, 128, 8
    $region25: #{temporal_gcn_forward.1} parent=1 // pred_fallthru
      _
    // Predicated region
    $region26: #{temporal_gcn_forward.1} parent=1 // pred_check
      _
    $region27: #{temporal_gcn_forward.1} parent=1 // pred_check_branch
      %3165 = sbr.rel (0) target = $region29
    $region28: #{temporal_gcn_forward.1} parent=1 // pred_region
      _
    $region29: #{temporal_gcn_forward.1} parent=1 // pred_fallthru
      _
    // Predicated region
    $region30: #{temporal_gcn_forward.1} parent=1 // pred_check
      _
    $region31: #{temporal_gcn_forward.1} parent=1 // pred_check_branch
      %3167 = sbr.rel (0) target = $region33
    $region32: #{temporal_gcn_forward.1} parent=1 // pred_region
      %3168 = dma.done [#allocation3], 256
    $region33: #{temporal_gcn_forward.1} parent=1 // pred_fallthru
      _
    // Predicated region
    $region34: #{temporal_gcn_forward.1} parent=1 // pred_check
      _
    $region35: #{temporal_gcn_forward.1} parent=1 // pred_check_branch
      %3170 = sbr.rel (0) target = $region37
    $region36: #{temporal_gcn_forward.1} parent=1 // pred_region
      %3171 = dma.done [#allocation5], 256
    $region37: #{temporal_gcn_forward.1} parent=1 // pred_fallthru
      _
    %3172 = vsyncpa [#allocation3], 1
    %3173 = vsyncpa [#allocation5], 1

</llo_original>
